<compile_context>
chip_gen: v5e
topology: v5e:2x2
jax: 0.10.0
libtpu: 0.0.40
codegen_flags: <defaults>
</compile_context>

<pallas_src>
from functools import partial

import jax
import jax.numpy as jnp
from jax.experimental import pallas as pl
from jax.experimental.pallas import tpu as pltpu


def mixvpr_kernel(x_ref, lnw_ref, lnb_ref, w1_ref, b1_ref, w2_ref, b2_ref,
                  cw_ref, rw_ref, bias_ref, o_ref, *, mix_depth):
    tb, c, hw = x_ref.shape

    # One batch tile, flattened so the mixer matmuls see M = TB*C rows.
    x = x_ref[...].astype(jnp.float32).reshape(tb * c, hw)
    inv_hw = jnp.float32(1.0 / hw)

    # FeatureMixerLayer stack: x = x + W2 @ relu(W1 @ LN(x) + b1) + b2
    for d in range(mix_depth):                                   # static unroll
        # Fused LayerNorm statistics (single pass: sum and sum of squares).
        s1 = jnp.sum(x, axis=-1, keepdims=True)
        s2 = jnp.sum(x * x, axis=-1, keepdims=True)
        mean = s1 * inv_hw
        var = s2 * inv_hw - mean * mean
        # gamma/beta/biases are each used exactly once per layer, so the
        # implicit (1, HW) broadcast is materialized only once.
        xn = (x - mean) * jax.lax.rsqrt(var + 1e-5) * lnw_ref[d] + lnb_ref[d]
        h = jnp.dot(xn.astype(jnp.bfloat16), w1_ref[d],
                    preferred_element_type=jnp.float32)
        h = jnp.maximum(h + b1_ref[d], 0.0)                      # ReLU
        x = (x + jnp.dot(h.astype(jnp.bfloat16), w2_ref[d],
                         preferred_element_type=jnp.float32) + b2_ref[d])

    # Projection head, re-associated so no large tile is transposed and the
    # final matmul / store is lane-dense along OUT_C:
    #     z[b]^T = (x[b] @ rw)^T @ cw + bias
    # with  bias[r, oc] = cb[oc] * sum_d rw[d, r] + rb[r]  (folded in wrapper).
    m_all = jnp.dot(x.astype(jnp.bfloat16), rw_ref[...],
                    preferred_element_type=jnp.float32)          # (TB*C, OUT_R)
    bias = bias_ref[...]                                         # (OUT_R, OUT_C)
    for t in range(tb):                                          # TB is static
        m_t = m_all[t * c:(t + 1) * c, :].T                      # (OUT_R, C) tiny transpose
        z = jnp.dot(m_t.astype(jnp.bfloat16), cw_ref[...],
                    preferred_element_type=jnp.float32) + bias   # (OUT_R, OUT_C)
        # L2 normalize over the whole (un-flattened) descriptor (F.normalize, eps=1e-12)
        inv_norm = 1.0 / jnp.maximum(jnp.sqrt(jnp.sum(z * z)), 1e-12)
        o_ref[t] = (z * inv_norm).astype(o_ref.dtype)


def _pick_batch_tile(b, c, hw, hw_mid):
    # Rough per-batch-element VMEM need: f32 input block (double-buffered) plus
    # live f32 intermediates (x, xn, h).  Budget kept conservative so the tile
    # also fits v7x's 64 MiB VMEM per TensorCore.
    per_elem = 4 * c * (4 * hw + 2 * hw_mid)
    budget = 20 * 1024 * 1024
    tb = max(1, min(b, budget // max(per_elem, 1)))
    while b % tb:
        tb -= 1
    return tb


def mixvpr_forward(x_nchw, params, *, mix_depth):
    b, c, h, w = x_nchw.shape
    hw = h * w
    x3 = x_nchw.reshape(b, c, hw).astype(jnp.float32)     # 'b c h w -> b c (h w)'
    ln_w, ln_b, w1, b1, w2, b2, cw, cb, rw, rb = params
    hw_mid = w1.shape[-1]
    out_c = cw.shape[1]
    out_r = rw.shape[1]

    # bf16 copies of the matmul weights (halves HBM/VMEM, bf16 MXU path).
    w1_h = w1.astype(jnp.bfloat16)
    w2_h = w2.astype(jnp.bfloat16)
    cw_h = cw.astype(jnp.bfloat16)
    rw_h = rw.astype(jnp.bfloat16)
    # Fold channel_proj / row_proj biases into one (OUT_R, OUT_C) tile (exact
    # algebraic re-association of the two Linear layers).
    bias_ro = (jnp.sum(rw, axis=0)[:, None] * cb.reshape(1, out_c)
               + rb.reshape(out_r, 1)).astype(jnp.float32)

    tb = _pick_batch_tile(b, c, hw, hw_mid)
    grid = (b // tb,)

    def const_spec(shape, single_buffered):
        nd = len(shape)
        kwargs = {}
        if single_buffered:
            # Grid-invariant weights: single-buffer to halve their VMEM footprint.
            kwargs["pipeline_mode"] = pl.Buffered(1)
        return pl.BlockSpec(shape, lambda i, _n=nd: (0,) * _n, **kwargs)

    flops = (mix_depth * 2 * (2 * b * c * hw * hw_mid)
             + 2 * b * c * hw * out_r + 2 * b * out_r * c * out_c)
    bytes_accessed = (x3.size * 4 + b * out_r * out_c * 4
                      + (w1_h.size + w2_h.size + cw_h.size + rw_h.size) * 2
                      + (ln_w.size + ln_b.size + b1.size + b2.size + bias_ro.size) * 4)
    cost = pl.CostEstimate(flops=int(flops),
                           transcendentals=int(mix_depth * b * c + b),
                           bytes_accessed=int(bytes_accessed))

    kernel = partial(mixvpr_kernel, mix_depth=mix_depth)

    def run(single_buffer_weights):
        sb = single_buffer_weights
        return pl.pallas_call(
            kernel,
            out_shape=jax.ShapeDtypeStruct((b, out_r, out_c), jnp.float32),
            grid=grid,
            in_specs=[
                pl.BlockSpec((tb, c, hw), lambda i: (i, 0, 0)),   # batch tile of x
                const_spec(ln_w.shape, sb), const_spec(ln_b.shape, sb),
                const_spec(w1_h.shape, sb), const_spec(b1.shape, sb),
                const_spec(w2_h.shape, sb), const_spec(b2.shape, sb),
                const_spec(cw_h.shape, sb), const_spec(rw_h.shape, sb),
                const_spec(bias_ro.shape, sb),
            ],
            out_specs=pl.BlockSpec((tb, out_r, out_c), lambda i: (i, 0, 0)),
            compiler_params=pltpu.CompilerParams(
                dimension_semantics=("parallel",),
                vmem_limit_bytes=48 * 1024 * 1024),
            cost_estimate=cost,
        )(x3, ln_w, ln_b, w1_h, b1, w2_h, b2, cw_h, rw_h, bias_ro)

    try:
        out3 = run(single_buffer_weights=True)
    except Exception:
        # Fallback if this Pallas build rejects single-buffered (Buffered(1)) specs.
        out3 = run(single_buffer_weights=False)

    # Kernel emits (b, OUT_R, OUT_C) lane-dense; restore 'b (c d)' element order
    # (c = OUT_C outer, d = OUT_R inner) in the wrapper.
    return jnp.transpose(out3, (0, 2, 1)).reshape(b, out_c * out_r)


def mixvpr_reference(x_nchw, params, *, mix_depth):
    """Pure-JAX f32 reference mirroring the PyTorch forward semantics."""
    ln_w, ln_b, w1, b1, w2, b2, cw, cb, rw, rb = params
    b, c, h, w = x_nchw.shape
    x = x_nchw.reshape(b, c, h * w)
    for d in range(mix_depth):
        mean = jnp.mean(x, axis=-1, keepdims=True)
        var = jnp.mean(jnp.square(x - mean), axis=-1, keepdims=True)
        xn = (x - mean) / jnp.sqrt(var + 1e-5) * ln_w[d] + ln_b[d]
        hmid = jnp.maximum(xn @ w1[d] + b1[d], 0.0)
        x = x + hmid @ w2[d] + b2[d]
    x = jnp.swapaxes(x, 1, 2)                     # b d c
    x = x @ cw + cb                               # channel_proj
    x = jnp.swapaxes(x, 1, 2)                     # b c d
    x = x @ rw + rb                               # row_proj
    x = x.reshape(b, -1)
    n = jnp.sqrt(jnp.sum(x * x, axis=1, keepdims=True))
    return x / jnp.maximum(n, 1e-12)


if __name__ == "__main__":
    # Small but semantically consistent shapes:
    # in_channels=64, in_h=in_w=8 (hw=64), out_channels=32, out_rows=4,
    # mix_depth=2, mlp_ratio=1  -> output descriptor dim = 128
    B, C, H, W = 2, 64, 8, 8
    OUT_C, OUT_R = 32, 4
    MIX_DEPTH, MLP_RATIO = 2, 1
    HW = H * W
    HW_MID = HW * MLP_RATIO

    key = jax.random.PRNGKey(0)
    keys = jax.random.split(key, 8)
    x = jax.random.normal(keys[0], (B, C, H, W), jnp.float32)

    def trunc_normal(k, shape):
        # matches nn.init.trunc_normal_(std=0.02), truncation at +/-2 std
        return 0.02 * jax.random.truncated_normal(k, -2.0, 2.0, shape, jnp.float32)

    # Mixer params (stacked over mix_depth). Weights stored as (in, out) so the
    # kernel computes x @ W (equivalent to PyTorch's x @ weight.T).
    ln_w = jnp.ones((MIX_DEPTH, HW), jnp.float32)          # LayerNorm gamma
    ln_b = jnp.zeros((MIX_DEPTH, HW), jnp.float32)         # LayerNorm beta
    w1 = trunc_normal(keys[1], (MIX_DEPTH, HW, HW_MID))
    b1 = jnp.zeros((MIX_DEPTH, HW_MID), jnp.float32)
    w2 = trunc_normal(keys[2], (MIX_DEPTH, HW_MID, HW))
    b2 = jnp.zeros((MIX_DEPTH, HW), jnp.float32)
    # channel_proj / row_proj (deterministic synthetic init)
    cw = trunc_normal(keys[3], (C, OUT_C))
    cb = 0.01 * jax.random.normal(keys[4], (1, OUT_C), jnp.float32)
    rw = trunc_normal(keys[5], (HW, OUT_R))
    rb = 0.01 * jax.random.normal(keys[6], (1, OUT_R), jnp.float32)

    params = (ln_w, ln_b, w1, b1, w2, b2, cw, cb, rw, rb)

    out = mixvpr_forward(x, params, mix_depth=MIX_DEPTH)
    out = jax.block_until_ready(out)

    ref = mixvpr_reference(x, params, mix_depth=MIX_DEPTH)
    assert out.shape == (B, OUT_C * OUT_R), out.shape
    assert bool(jnp.all(jnp.isfinite(out))), "non-finite values in kernel output"
    # Tolerance loosened vs. the pure-f32 version: matmul operands are bf16 in
    # the kernel (f32 accumulation), which introduces ~0.1-1% relative error.
    assert jnp.allclose(out, ref, atol=1.5e-2, rtol=1e-2), \
        "kernel does not match reference"

    print("KERNEL_OK")
</pallas_src>

<mosaic_0001>
module attributes {stable_mosaic.version = 11 : i64} {
  func.func @mixvpr_kernel(%arg0: i32, %arg1: memref<2x64x64xf32, #tpu.memory_space<vmem>>, %arg2: memref<2x64xf32, #tpu.memory_space<vmem>>, %arg3: memref<2x64xf32, #tpu.memory_space<vmem>>, %arg4: memref<2x64x64xbf16, #tpu.memory_space<vmem>>, %arg5: memref<2x64xf32, #tpu.memory_space<vmem>>, %arg6: memref<2x64x64xbf16, #tpu.memory_space<vmem>>, %arg7: memref<2x64xf32, #tpu.memory_space<vmem>>, %arg8: memref<64x32xbf16, #tpu.memory_space<vmem>>, %arg9: memref<64x4xbf16, #tpu.memory_space<vmem>>, %arg10: memref<4x32xf32, #tpu.memory_space<vmem>>, %arg11: memref<2x4x32xf32, #tpu.memory_space<vmem>>) attributes {dimension_semantics = [#tpu.dimension_semantics<parallel>], iteration_bounds = array<i64: 1>, scalar_prefetch = 0 : i64, scratch_operands = 0 : i64, tpu.core_type = #tpu.core_type<tc>, window_params = [{transform_indices = @transform_0, window_bounds = array<i64: 2, 64, 64>}, {pipeline_mode = #tpu.pipeline_mode<synchronous>, transform_indices = @transform_1, window_bounds = array<i64: 2, 64>}, {pipeline_mode = #tpu.pipeline_mode<synchronous>, transform_indices = @transform_2, window_bounds = array<i64: 2, 64>}, {pipeline_mode = #tpu.pipeline_mode<synchronous>, transform_indices = @transform_3, window_bounds = array<i64: 2, 64, 64>}, {pipeline_mode = #tpu.pipeline_mode<synchronous>, transform_indices = @transform_4, window_bounds = array<i64: 2, 64>}, {pipeline_mode = #tpu.pipeline_mode<synchronous>, transform_indices = @transform_5, window_bounds = array<i64: 2, 64, 64>}, {pipeline_mode = #tpu.pipeline_mode<synchronous>, transform_indices = @transform_6, window_bounds = array<i64: 2, 64>}, {pipeline_mode = #tpu.pipeline_mode<synchronous>, transform_indices = @transform_7, window_bounds = array<i64: 64, 32>}, {pipeline_mode = #tpu.pipeline_mode<synchronous>, transform_indices = @transform_8, window_bounds = array<i64: 64, 4>}, {pipeline_mode = #tpu.pipeline_mode<synchronous>, transform_indices = @transform_9, window_bounds = array<i64: 4, 32>}, {transform_indices = @transform_10, window_bounds = array<i64: 2, 4, 32>}]} {
    %c0 = arith.constant 0 : index
    %c0_0 = arith.constant 0 : index
    %c0_1 = arith.constant 0 : index
    %0 = vector.load %arg1[%c0, %c0_0, %c0_1] : memref<2x64x64xf32, #tpu.memory_space<vmem>>, vector<2x64x64xf32>
    %1 = vector.shape_cast %0 : vector<2x64x64xf32> to vector<128x64xf32>
    %cst = arith.constant dense<0.000000e+00> : vector<128xf32>
    %2 = vector.multi_reduction <add>, %1, %cst [1] : vector<128x64xf32> to vector<128xf32>
    %3 = vector.shape_cast %2 : vector<128xf32> to vector<128x1xf32>
    %4 = arith.mulf %1, %1 : vector<128x64xf32>
    %cst_2 = arith.constant dense<0.000000e+00> : vector<128xf32>
    %5 = vector.multi_reduction <add>, %4, %cst_2 [1] : vector<128x64xf32> to vector<128xf32>
    %6 = vector.shape_cast %5 : vector<128xf32> to vector<128x1xf32>
    %cst_3 = arith.constant 1.562500e-02 : f32
    %7 = vector.broadcast %cst_3 : f32 to vector<128x1xf32>
    %8 = arith.mulf %3, %7 : vector<128x1xf32>
    %cst_4 = arith.constant 1.562500e-02 : f32
    %9 = vector.broadcast %cst_4 : f32 to vector<128x1xf32>
    %10 = arith.mulf %6, %9 : vector<128x1xf32>
    %11 = arith.mulf %8, %8 : vector<128x1xf32>
    %12 = arith.subf %10, %11 : vector<128x1xf32>
    %13 = vector.broadcast %8 : vector<128x1xf32> to vector<128x64xf32>
    %14 = arith.subf %1, %13 : vector<128x64xf32>
    %cst_5 = arith.constant 9.99999974E-6 : f32
    %15 = vector.broadcast %cst_5 : f32 to vector<128x1xf32>
    %16 = arith.addf %12, %15 : vector<128x1xf32>
    %17 = math.rsqrt %16 : vector<128x1xf32>
    %18 = vector.broadcast %17 : vector<128x1xf32> to vector<128x64xf32>
    %19 = arith.mulf %14, %18 : vector<128x64xf32>
    %c0_6 = arith.constant 0 : index
    %c0_7 = arith.constant 0 : index
    %20 = vector.load %arg2[%c0_6, %c0_7] : memref<2x64xf32, #tpu.memory_space<vmem>>, vector<1x64xf32>
    %21 = vector.shape_cast %20 : vector<1x64xf32> to vector<64xf32>
    %22 = vector.shape_cast %21 : vector<64xf32> to vector<1x64xf32>
    %23 = vector.broadcast %22 : vector<1x64xf32> to vector<128x64xf32>
    %24 = arith.mulf %19, %23 : vector<128x64xf32>
    %c0_8 = arith.constant 0 : index
    %c0_9 = arith.constant 0 : index
    %25 = vector.load %arg3[%c0_8, %c0_9] : memref<2x64xf32, #tpu.memory_space<vmem>>, vector<1x64xf32>
    %26 = vector.shape_cast %25 : vector<1x64xf32> to vector<64xf32>
    %27 = vector.shape_cast %26 : vector<64xf32> to vector<1x64xf32>
    %28 = vector.broadcast %27 : vector<1x64xf32> to vector<128x64xf32>
    %29 = arith.addf %24, %28 : vector<128x64xf32>
    %30 = arith.truncf %29 : vector<128x64xf32> to vector<128x64xbf16>
    %c0_10 = arith.constant 0 : index
    %c0_11 = arith.constant 0 : index
    %c0_12 = arith.constant 0 : index
    %31 = vector.load %arg4[%c0_10, %c0_11, %c0_12] : memref<2x64x64xbf16, #tpu.memory_space<vmem>>, vector<1x64x64xbf16>
    %32 = vector.shape_cast %31 : vector<1x64x64xbf16> to vector<64x64xbf16>
    %cst_13 = arith.constant dense<0.000000e+00> : vector<128x64xf32>
    %33 = tpu.matmul %30, %32, %cst_13 {dimension_numbers = #tpu.dot_dimension_numbers<[1], [0], [0], [1], [0, 0, 1, 1], [], []>} : vector<128x64xbf16>, vector<64x64xbf16>, vector<128x64xf32> -> vector<128x64xf32>
    %c0_14 = arith.constant 0 : index
    %c0_15 = arith.constant 0 : index
    %34 = vector.load %arg5[%c0_14, %c0_15] : memref<2x64xf32, #tpu.memory_space<vmem>>, vector<1x64xf32>
    %35 = vector.shape_cast %34 : vector<1x64xf32> to vector<64xf32>
    %36 = vector.shape_cast %35 : vector<64xf32> to vector<1x64xf32>
    %37 = vector.broadcast %36 : vector<1x64xf32> to vector<128x64xf32>
    %38 = arith.addf %33, %37 : vector<128x64xf32>
    %cst_16 = arith.constant 0.000000e+00 : f32
    %39 = vector.broadcast %cst_16 : f32 to vector<128x64xf32>
    %40 = arith.maximumf %38, %39 : vector<128x64xf32>
    %41 = arith.truncf %40 : vector<128x64xf32> to vector<128x64xbf16>
    %c0_17 = arith.constant 0 : index
    %c0_18 = arith.constant 0 : index
    %c0_19 = arith.constant 0 : index
    %42 = vector.load %arg6[%c0_17, %c0_18, %c0_19] : memref<2x64x64xbf16, #tpu.memory_space<vmem>>, vector<1x64x64xbf16>
    %43 = vector.shape_cast %42 : vector<1x64x64xbf16> to vector<64x64xbf16>
    %cst_20 = arith.constant dense<0.000000e+00> : vector<128x64xf32>
    %44 = tpu.matmul %41, %43, %cst_20 {dimension_numbers = #tpu.dot_dimension_numbers<[1], [0], [0], [1], [0, 0, 1, 1], [], []>} : vector<128x64xbf16>, vector<64x64xbf16>, vector<128x64xf32> -> vector<128x64xf32>
    %45 = arith.addf %1, %44 : vector<128x64xf32>
    %c0_21 = arith.constant 0 : index
    %c0_22 = arith.constant 0 : index
    %46 = vector.load %arg7[%c0_21, %c0_22] : memref<2x64xf32, #tpu.memory_space<vmem>>, vector<1x64xf32>
    %47 = vector.shape_cast %46 : vector<1x64xf32> to vector<64xf32>
    %48 = vector.shape_cast %47 : vector<64xf32> to vector<1x64xf32>
    %49 = vector.broadcast %48 : vector<1x64xf32> to vector<128x64xf32>
    %50 = arith.addf %45, %49 : vector<128x64xf32>
    %cst_23 = arith.constant dense<0.000000e+00> : vector<128xf32>
    %51 = vector.multi_reduction <add>, %50, %cst_23 [1] : vector<128x64xf32> to vector<128xf32>
    %52 = vector.shape_cast %51 : vector<128xf32> to vector<128x1xf32>
    %53 = arith.mulf %50, %50 : vector<128x64xf32>
    %cst_24 = arith.constant dense<0.000000e+00> : vector<128xf32>
    %54 = vector.multi_reduction <add>, %53, %cst_24 [1] : vector<128x64xf32> to vector<128xf32>
    %55 = vector.shape_cast %54 : vector<128xf32> to vector<128x1xf32>
    %cst_25 = arith.constant 1.562500e-02 : f32
    %56 = vector.broadcast %cst_25 : f32 to vector<128x1xf32>
    %57 = arith.mulf %52, %56 : vector<128x1xf32>
    %cst_26 = arith.constant 1.562500e-02 : f32
    %58 = vector.broadcast %cst_26 : f32 to vector<128x1xf32>
    %59 = arith.mulf %55, %58 : vector<128x1xf32>
    %60 = arith.mulf %57, %57 : vector<128x1xf32>
    %61 = arith.subf %59, %60 : vector<128x1xf32>
    %62 = vector.broadcast %57 : vector<128x1xf32> to vector<128x64xf32>
    %63 = arith.subf %50, %62 : vector<128x64xf32>
    %cst_27 = arith.constant 9.99999974E-6 : f32
    %64 = vector.broadcast %cst_27 : f32 to vector<128x1xf32>
    %65 = arith.addf %61, %64 : vector<128x1xf32>
    %66 = math.rsqrt %65 : vector<128x1xf32>
    %67 = vector.broadcast %66 : vector<128x1xf32> to vector<128x64xf32>
    %68 = arith.mulf %63, %67 : vector<128x64xf32>
    %c1 = arith.constant 1 : index
    %c0_28 = arith.constant 0 : index
    %69 = vector.load %arg2[%c1, %c0_28] : memref<2x64xf32, #tpu.memory_space<vmem>>, vector<1x64xf32>
    %70 = vector.shape_cast %69 : vector<1x64xf32> to vector<64xf32>
    %71 = vector.shape_cast %70 : vector<64xf32> to vector<1x64xf32>
    %72 = vector.broadcast %71 : vector<1x64xf32> to vector<128x64xf32>
    %73 = arith.mulf %68, %72 : vector<128x64xf32>
    %c1_29 = arith.constant 1 : index
    %c0_30 = arith.constant 0 : index
    %74 = vector.load %arg3[%c1_29, %c0_30] : memref<2x64xf32, #tpu.memory_space<vmem>>, vector<1x64xf32>
    %75 = vector.shape_cast %74 : vector<1x64xf32> to vector<64xf32>
    %76 = vector.shape_cast %75 : vector<64xf32> to vector<1x64xf32>
    %77 = vector.broadcast %76 : vector<1x64xf32> to vector<128x64xf32>
    %78 = arith.addf %73, %77 : vector<128x64xf32>
    %79 = arith.truncf %78 : vector<128x64xf32> to vector<128x64xbf16>
    %c1_31 = arith.constant 1 : index
    %c0_32 = arith.constant 0 : index
    %c0_33 = arith.constant 0 : index
    %80 = vector.load %arg4[%c1_31, %c0_32, %c0_33] : memref<2x64x64xbf16, #tpu.memory_space<vmem>>, vector<1x64x64xbf16>
    %81 = vector.shape_cast %80 : vector<1x64x64xbf16> to vector<64x64xbf16>
    %cst_34 = arith.constant dense<0.000000e+00> : vector<128x64xf32>
    %82 = tpu.matmul %79, %81, %cst_34 {dimension_numbers = #tpu.dot_dimension_numbers<[1], [0], [0], [1], [0, 0, 1, 1], [], []>} : vector<128x64xbf16>, vector<64x64xbf16>, vector<128x64xf32> -> vector<128x64xf32>
    %c1_35 = arith.constant 1 : index
    %c0_36 = arith.constant 0 : index
    %83 = vector.load %arg5[%c1_35, %c0_36] : memref<2x64xf32, #tpu.memory_space<vmem>>, vector<1x64xf32>
    %84 = vector.shape_cast %83 : vector<1x64xf32> to vector<64xf32>
    %85 = vector.shape_cast %84 : vector<64xf32> to vector<1x64xf32>
    %86 = vector.broadcast %85 : vector<1x64xf32> to vector<128x64xf32>
    %87 = arith.addf %82, %86 : vector<128x64xf32>
    %cst_37 = arith.constant 0.000000e+00 : f32
    %88 = vector.broadcast %cst_37 : f32 to vector<128x64xf32>
    %89 = arith.maximumf %87, %88 : vector<128x64xf32>
    %90 = arith.truncf %89 : vector<128x64xf32> to vector<128x64xbf16>
    %c1_38 = arith.constant 1 : index
    %c0_39 = arith.constant 0 : index
    %c0_40 = arith.constant 0 : index
    %91 = vector.load %arg6[%c1_38, %c0_39, %c0_40] : memref<2x64x64xbf16, #tpu.memory_space<vmem>>, vector<1x64x64xbf16>
    %92 = vector.shape_cast %91 : vector<1x64x64xbf16> to vector<64x64xbf16>
    %cst_41 = arith.constant dense<0.000000e+00> : vector<128x64xf32>
    %93 = tpu.matmul %90, %92, %cst_41 {dimension_numbers = #tpu.dot_dimension_numbers<[1], [0], [0], [1], [0, 0, 1, 1], [], []>} : vector<128x64xbf16>, vector<64x64xbf16>, vector<128x64xf32> -> vector<128x64xf32>
    %94 = arith.addf %50, %93 : vector<128x64xf32>
    %c1_42 = arith.constant 1 : index
    %c0_43 = arith.constant 0 : index
    %95 = vector.load %arg7[%c1_42, %c0_43] : memref<2x64xf32, #tpu.memory_space<vmem>>, vector<1x64xf32>
    %96 = vector.shape_cast %95 : vector<1x64xf32> to vector<64xf32>
    %97 = vector.shape_cast %96 : vector<64xf32> to vector<1x64xf32>
    %98 = vector.broadcast %97 : vector<1x64xf32> to vector<128x64xf32>
    %99 = arith.addf %94, %98 : vector<128x64xf32>
    %100 = arith.truncf %99 : vector<128x64xf32> to vector<128x64xbf16>
    %c0_44 = arith.constant 0 : index
    %c0_45 = arith.constant 0 : index
    %101 = vector.load %arg9[%c0_44, %c0_45] : memref<64x4xbf16, #tpu.memory_space<vmem>>, vector<64x4xbf16>
    %cst_46 = arith.constant dense<0.000000e+00> : vector<128x4xf32>
    %102 = tpu.matmul %100, %101, %cst_46 {dimension_numbers = #tpu.dot_dimension_numbers<[1], [0], [0], [1], [0, 0, 1, 1], [], []>} : vector<128x64xbf16>, vector<64x4xbf16>, vector<128x4xf32> -> vector<128x4xf32>
    %c0_47 = arith.constant 0 : index
    %c0_48 = arith.constant 0 : index
    %103 = vector.load %arg10[%c0_47, %c0_48] : memref<4x32xf32, #tpu.memory_space<vmem>>, vector<4x32xf32>
    %104 = vector.extract_strided_slice %102 {offsets = [0, 0], sizes = [64, 4], strides = [1, 1]} : vector<128x4xf32> to vector<64x4xf32>
    %105 = tpu.transpose %104, [1, 0] : vector<64x4xf32> -> vector<4x64xf32>
    %106 = arith.truncf %105 : vector<4x64xf32> to vector<4x64xbf16>
    %c0_49 = arith.constant 0 : index
    %c0_50 = arith.constant 0 : index
    %107 = vector.load %arg8[%c0_49, %c0_50] : memref<64x32xbf16, #tpu.memory_space<vmem>>, vector<64x32xbf16>
    %cst_51 = arith.constant dense<0.000000e+00> : vector<4x32xf32>
    %108 = tpu.matmul %106, %107, %cst_51 {dimension_numbers = #tpu.dot_dimension_numbers<[1], [0], [0], [1], [0, 0, 1, 1], [], []>} : vector<4x64xbf16>, vector<64x32xbf16>, vector<4x32xf32> -> vector<4x32xf32>
    %109 = arith.addf %108, %103 : vector<4x32xf32>
    %110 = arith.mulf %109, %109 : vector<4x32xf32>
    %111 = vector.shape_cast %110 : vector<4x32xf32> to vector<1x4x32xf32>
    %cst_52 = arith.constant dense<0.000000e+00> : vector<1xf32>
    %112 = vector.multi_reduction <add>, %111, %cst_52 [1, 2] : vector<1x4x32xf32> to vector<1xf32>
    %113 = vector.shape_cast %112 : vector<1xf32> to vector<1x1x1xf32>
    %114 = vector.extract %113[0, 0, 0] : f32 from vector<1x1x1xf32>
    %115 = math.sqrt %114 : f32
    %cst_53 = arith.constant 9.99999996E-13 : f32
    %116 = arith.maximumf %115, %cst_53 : f32
    %cst_54 = arith.constant 1.000000e+00 : f32
    %117 = arith.divf %cst_54, %116 : f32
    %118 = vector.broadcast %117 : f32 to vector<4x32xf32>
    %119 = arith.mulf %109, %118 : vector<4x32xf32>
    %c0_55 = arith.constant 0 : index
    %c0_56 = arith.constant 0 : index
    %c0_57 = arith.constant 0 : index
    %120 = vector.load %arg11[%c0_55, %c0_56, %c0_57] : memref<2x4x32xf32, #tpu.memory_space<vmem>>, vector<1x4x32xf32>
    %121 = vector.shape_cast %120 : vector<1x4x32xf32> to vector<4x32xf32>
    %122 = vector.shape_cast %119 : vector<4x32xf32> to vector<1x4x32xf32>
    tpu.vector_store %arg11[%c0_55, %c0_56, %c0_57], %122 {strides = array<i32>} : memref<2x4x32xf32, #tpu.memory_space<vmem>>, vector<1x4x32xf32>,
    %123 = vector.extract_strided_slice %102 {offsets = [64, 0], sizes = [64, 4], strides = [1, 1]} : vector<128x4xf32> to vector<64x4xf32>
    %124 = tpu.transpose %123, [1, 0] : vector<64x4xf32> -> vector<4x64xf32>
    %125 = arith.truncf %124 : vector<4x64xf32> to vector<4x64xbf16>
    %c0_58 = arith.constant 0 : index
    %c0_59 = arith.constant 0 : index
    %126 = vector.load %arg8[%c0_58, %c0_59] : memref<64x32xbf16, #tpu.memory_space<vmem>>, vector<64x32xbf16>
    %cst_60 = arith.constant dense<0.000000e+00> : vector<4x32xf32>
    %127 = tpu.matmul %125, %126, %cst_60 {dimension_numbers = #tpu.dot_dimension_numbers<[1], [0], [0], [1], [0, 0, 1, 1], [], []>} : vector<4x64xbf16>, vector<64x32xbf16>, vector<4x32xf32> -> vector<4x32xf32>
    %128 = arith.addf %127, %103 : vector<4x32xf32>
    %129 = arith.mulf %128, %128 : vector<4x32xf32>
    %130 = vector.shape_cast %129 : vector<4x32xf32> to vector<1x4x32xf32>
    %cst_61 = arith.constant dense<0.000000e+00> : vector<1xf32>
    %131 = vector.multi_reduction <add>, %130, %cst_61 [1, 2] : vector<1x4x32xf32> to vector<1xf32>
    %132 = vector.shape_cast %131 : vector<1xf32> to vector<1x1x1xf32>
    %133 = vector.extract %132[0, 0, 0] : f32 from vector<1x1x1xf32>
    %134 = math.sqrt %133 : f32
    %cst_62 = arith.constant 9.99999996E-13 : f32
    %135 = arith.maximumf %134, %cst_62 : f32
    %cst_63 = arith.constant 1.000000e+00 : f32
    %136 = arith.divf %cst_63, %135 : f32
    %137 = vector.broadcast %136 : f32 to vector<4x32xf32>
    %138 = arith.mulf %128, %137 : vector<4x32xf32>
    %c1_64 = arith.constant 1 : index
    %c0_65 = arith.constant 0 : index
    %c0_66 = arith.constant 0 : index
    %139 = vector.load %arg11[%c1_64, %c0_65, %c0_66] : memref<2x4x32xf32, #tpu.memory_space<vmem>>, vector<1x4x32xf32>
    %140 = vector.shape_cast %139 : vector<1x4x32xf32> to vector<4x32xf32>
    %141 = vector.shape_cast %138 : vector<4x32xf32> to vector<1x4x32xf32>
    tpu.vector_store %arg11[%c1_64, %c0_65, %c0_66], %141 {strides = array<i32>} : memref<2x4x32xf32, #tpu.memory_space<vmem>>, vector<1x4x32xf32>,
    return
  }
  func.func @transform_0(%arg0: i32) -> (i32, i32, i32) {
    %c0_i32 = arith.constant 0 : i32
    %c0_i32_0 = arith.constant 0 : i32
    %c0_i32_1 = arith.constant 0 : i32
    return %arg0, %c0_i32, %c0_i32_0 : i32, i32, i32
  }
  func.func @transform_1(%arg0: i32) -> (i32, i32) {
    %c0_i32 = arith.constant 0 : i32
    %c0_i32_0 = arith.constant 0 : i32
    %c0_i32_1 = arith.constant 0 : i32
    return %c0_i32, %c0_i32_0 : i32, i32
  }
  func.func @transform_2(%arg0: i32) -> (i32, i32) {
    %c0_i32 = arith.constant 0 : i32
    %c0_i32_0 = arith.constant 0 : i32
    %c0_i32_1 = arith.constant 0 : i32
    return %c0_i32, %c0_i32_0 : i32, i32
  }
  func.func @transform_3(%arg0: i32) -> (i32, i32, i32) {
    %c0_i32 = arith.constant 0 : i32
    %c0_i32_0 = arith.constant 0 : i32
    %c0_i32_1 = arith.constant 0 : i32
    %c0_i32_2 = arith.constant 0 : i32
    return %c0_i32, %c0_i32_0, %c0_i32_1 : i32, i32, i32
  }
  func.func @transform_4(%arg0: i32) -> (i32, i32) {
    %c0_i32 = arith.constant 0 : i32
    %c0_i32_0 = arith.constant 0 : i32
    %c0_i32_1 = arith.constant 0 : i32
    return %c0_i32, %c0_i32_0 : i32, i32
  }
  func.func @transform_5(%arg0: i32) -> (i32, i32, i32) {
    %c0_i32 = arith.constant 0 : i32
    %c0_i32_0 = arith.constant 0 : i32
    %c0_i32_1 = arith.constant 0 : i32
    %c0_i32_2 = arith.constant 0 : i32
    return %c0_i32, %c0_i32_0, %c0_i32_1 : i32, i32, i32
  }
  func.func @transform_6(%arg0: i32) -> (i32, i32) {
    %c0_i32 = arith.constant 0 : i32
    %c0_i32_0 = arith.constant 0 : i32
    %c0_i32_1 = arith.constant 0 : i32
    return %c0_i32, %c0_i32_0 : i32, i32
  }
  func.func @transform_7(%arg0: i32) -> (i32, i32) {
    %c0_i32 = arith.constant 0 : i32
    %c0_i32_0 = arith.constant 0 : i32
    %c0_i32_1 = arith.constant 0 : i32
    return %c0_i32, %c0_i32_0 : i32, i32
  }
  func.func @transform_8(%arg0: i32) -> (i32, i32) {
    %c0_i32 = arith.constant 0 : i32
    %c0_i32_0 = arith.constant 0 : i32
    %c0_i32_1 = arith.constant 0 : i32
    return %c0_i32, %c0_i32_0 : i32, i32
  }
  func.func @transform_9(%arg0: i32) -> (i32, i32) {
    %c0_i32 = arith.constant 0 : i32
    %c0_i32_0 = arith.constant 0 : i32
    %c0_i32_1 = arith.constant 0 : i32
    return %c0_i32, %c0_i32_0 : i32, i32
  }
  func.func @transform_10(%arg0: i32) -> (i32, i32, i32) {
    %c0_i32 = arith.constant 0 : i32
    %c0_i32_0 = arith.constant 0 : i32
    %c0_i32_1 = arith.constant 0 : i32
    return %arg0, %c0_i32, %c0_i32_0 : i32, i32, i32
  }
}

module attributes {stable_mosaic.version = 11 : i64} {
  func.func @mixvpr_kernel(%arg0: i32, %arg1: memref<2x64x64xf32, #tpu.memory_space<vmem>>, %arg2: memref<2x64xf32, #tpu.memory_space<vmem>>, %arg3: memref<2x64xf32, #tpu.memory_space<vmem>>, %arg4: memref<2x64x64xbf16, #tpu.memory_space<vmem>>, %arg5: memref<2x64xf32, #tpu.memory_space<vmem>>, %arg6: memref<2x64x64xbf16, #tpu.memory_space<vmem>>, %arg7: memref<2x64xf32, #tpu.memory_space<vmem>>, %arg8: memref<64x32xbf16, #tpu.memory_space<vmem>>, %arg9: memref<64x4xbf16, #tpu.memory_space<vmem>>, %arg10: memref<4x32xf32, #tpu.memory_space<vmem>>, %arg11: memref<2x4x32xf32, #tpu.memory_space<vmem>>) attributes {dimension_semantics = [#tpu.dimension_semantics<parallel>], iteration_bounds = array<i64: 1>, scalar_prefetch = 0 : i64, scratch_operands = 0 : i64, tpu.core_type = #tpu.core_type<tc>, window_params = [{transform_indices = @transform_0, window_bounds = array<i64: 2, 64, 64>}, {pipeline_mode = #tpu.pipeline_mode<synchronous>, transform_indices = @transform_1, window_bounds = array<i64: 2, 64>}, {pipeline_mode = #tpu.pipeline_mode<synchronous>, transform_indices = @transform_2, window_bounds = array<i64: 2, 64>}, {pipeline_mode = #tpu.pipeline_mode<synchronous>, transform_indices = @transform_3, window_bounds = array<i64: 2, 64, 64>}, {pipeline_mode = #tpu.pipeline_mode<synchronous>, transform_indices = @transform_4, window_bounds = array<i64: 2, 64>}, {pipeline_mode = #tpu.pipeline_mode<synchronous>, transform_indices = @transform_5, window_bounds = array<i64: 2, 64, 64>}, {pipeline_mode = #tpu.pipeline_mode<synchronous>, transform_indices = @transform_6, window_bounds = array<i64: 2, 64>}, {pipeline_mode = #tpu.pipeline_mode<synchronous>, transform_indices = @transform_7, window_bounds = array<i64: 64, 32>}, {pipeline_mode = #tpu.pipeline_mode<synchronous>, transform_indices = @transform_8, window_bounds = array<i64: 64, 4>}, {pipeline_mode = #tpu.pipeline_mode<synchronous>, transform_indices = @transform_9, window_bounds = array<i64: 4, 32>}, {transform_indices = @transform_10, window_bounds = array<i64: 2, 4, 32>}]} {
    %c0 = arith.constant 0 : index
    %c0_0 = arith.constant 0 : index
    %c0_1 = arith.constant 0 : index
    %0 = vector.load %arg1[%c0, %c0_0, %c0_1] : memref<2x64x64xf32, #tpu.memory_space<vmem>>, vector<2x64x64xf32>
    %1 = vector.shape_cast %0 : vector<2x64x64xf32> to vector<128x64xf32>
    %cst = arith.constant dense<0.000000e+00> : vector<128xf32>
    %2 = vector.multi_reduction <add>, %1, %cst [1] : vector<128x64xf32> to vector<128xf32>
    %3 = vector.shape_cast %2 : vector<128xf32> to vector<128x1xf32>
    %4 = arith.mulf %1, %1 : vector<128x64xf32>
    %cst_2 = arith.constant dense<0.000000e+00> : vector<128xf32>
    %5 = vector.multi_reduction <add>, %4, %cst_2 [1] : vector<128x64xf32> to vector<128xf32>
    %6 = vector.shape_cast %5 : vector<128xf32> to vector<128x1xf32>
    %cst_3 = arith.constant 1.562500e-02 : f32
    %7 = vector.broadcast %cst_3 : f32 to vector<128x1xf32>
    %8 = arith.mulf %3, %7 : vector<128x1xf32>
    %cst_4 = arith.constant 1.562500e-02 : f32
    %9 = vector.broadcast %cst_4 : f32 to vector<128x1xf32>
    %10 = arith.mulf %6, %9 : vector<128x1xf32>
    %11 = arith.mulf %8, %8 : vector<128x1xf32>
    %12 = arith.subf %10, %11 : vector<128x1xf32>
    %13 = vector.broadcast %8 : vector<128x1xf32> to vector<128x64xf32>
    %14 = arith.subf %1, %13 : vector<128x64xf32>
    %cst_5 = arith.constant 9.99999974E-6 : f32
    %15 = vector.broadcast %cst_5 : f32 to vector<128x1xf32>
    %16 = arith.addf %12, %15 : vector<128x1xf32>
    %17 = math.rsqrt %16 : vector<128x1xf32>
    %18 = vector.broadcast %17 : vector<128x1xf32> to vector<128x64xf32>
    %19 = arith.mulf %14, %18 : vector<128x64xf32>
    %c0_6 = arith.constant 0 : index
    %c0_7 = arith.constant 0 : index
    %20 = vector.load %arg2[%c0_6, %c0_7] : memref<2x64xf32, #tpu.memory_space<vmem>>, vector<1x64xf32>
    %21 = vector.shape_cast %20 : vector<1x64xf32> to vector<64xf32>
    %22 = vector.shape_cast %21 : vector<64xf32> to vector<1x64xf32>
    %23 = vector.broadcast %22 : vector<1x64xf32> to vector<128x64xf32>
    %24 = arith.mulf %19, %23 : vector<128x64xf32>
    %c0_8 = arith.constant 0 : index
    %c0_9 = arith.constant 0 : index
    %25 = vector.load %arg3[%c0_8, %c0_9] : memref<2x64xf32, #tpu.memory_space<vmem>>, vector<1x64xf32>
    %26 = vector.shape_cast %25 : vector<1x64xf32> to vector<64xf32>
    %27 = vector.shape_cast %26 : vector<64xf32> to vector<1x64xf32>
    %28 = vector.broadcast %27 : vector<1x64xf32> to vector<128x64xf32>
    %29 = arith.addf %24, %28 : vector<128x64xf32>
    %30 = arith.truncf %29 : vector<128x64xf32> to vector<128x64xbf16>
    %c0_10 = arith.constant 0 : index
    %c0_11 = arith.constant 0 : index
    %c0_12 = arith.constant 0 : index
    %31 = vector.load %arg4[%c0_10, %c0_11, %c0_12] : memref<2x64x64xbf16, #tpu.memory_space<vmem>>, vector<1x64x64xbf16>
    %32 = vector.shape_cast %31 : vector<1x64x64xbf16> to vector<64x64xbf16>
    %cst_13 = arith.constant dense<0.000000e+00> : vector<128x64xf32>
    %33 = tpu.matmul %30, %32, %cst_13 {dimension_numbers = #tpu.dot_dimension_numbers<[1], [0], [0], [1], [0, 0, 1, 1], [], []>} : vector<128x64xbf16>, vector<64x64xbf16>, vector<128x64xf32> -> vector<128x64xf32>
    %c0_14 = arith.constant 0 : index
    %c0_15 = arith.constant 0 : index
    %34 = vector.load %arg5[%c0_14, %c0_15] : memref<2x64xf32, #tpu.memory_space<vmem>>, vector<1x64xf32>
    %35 = vector.shape_cast %34 : vector<1x64xf32> to vector<64xf32>
    %36 = vector.shape_cast %35 : vector<64xf32> to vector<1x64xf32>
    %37 = vector.broadcast %36 : vector<1x64xf32> to vector<128x64xf32>
    %38 = arith.addf %33, %37 : vector<128x64xf32>
    %cst_16 = arith.constant 0.000000e+00 : f32
    %39 = vector.broadcast %cst_16 : f32 to vector<128x64xf32>
    %40 = arith.maximumf %38, %39 : vector<128x64xf32>
    %41 = arith.truncf %40 : vector<128x64xf32> to vector<128x64xbf16>
    %c0_17 = arith.constant 0 : index
    %c0_18 = arith.constant 0 : index
    %c0_19 = arith.constant 0 : index
    %42 = vector.load %arg6[%c0_17, %c0_18, %c0_19] : memref<2x64x64xbf16, #tpu.memory_space<vmem>>, vector<1x64x64xbf16>
    %43 = vector.shape_cast %42 : vector<1x64x64xbf16> to vector<64x64xbf16>
    %cst_20 = arith.constant dense<0.000000e+00> : vector<128x64xf32>
    %44 = tpu.matmul %41, %43, %cst_20 {dimension_numbers = #tpu.dot_dimension_numbers<[1], [0], [0], [1], [0, 0, 1, 1], [], []>} : vector<128x64xbf16>, vector<64x64xbf16>, vector<128x64xf32> -> vector<128x64xf32>
    %45 = arith.addf %1, %44 : vector<128x64xf32>
    %c0_21 = arith.constant 0 : index
    %c0_22 = arith.constant 0 : index
    %46 = vector.load %arg7[%c0_21, %c0_22] : memref<2x64xf32, #tpu.memory_space<vmem>>, vector<1x64xf32>
    %47 = vector.shape_cast %46 : vector<1x64xf32> to vector<64xf32>
    %48 = vector.shape_cast %47 : vector<64xf32> to vector<1x64xf32>
    %49 = vector.broadcast %48 : vector<1x64xf32> to vector<128x64xf32>
    %50 = arith.addf %45, %49 : vector<128x64xf32>
    %cst_23 = arith.constant dense<0.000000e+00> : vector<128xf32>
    %51 = vector.multi_reduction <add>, %50, %cst_23 [1] : vector<128x64xf32> to vector<128xf32>
    %52 = vector.shape_cast %51 : vector<128xf32> to vector<128x1xf32>
    %53 = arith.mulf %50, %50 : vector<128x64xf32>
    %cst_24 = arith.constant dense<0.000000e+00> : vector<128xf32>
    %54 = vector.multi_reduction <add>, %53, %cst_24 [1] : vector<128x64xf32> to vector<128xf32>
    %55 = vector.shape_cast %54 : vector<128xf32> to vector<128x1xf32>
    %cst_25 = arith.constant 1.562500e-02 : f32
    %56 = vector.broadcast %cst_25 : f32 to vector<128x1xf32>
    %57 = arith.mulf %52, %56 : vector<128x1xf32>
    %cst_26 = arith.constant 1.562500e-02 : f32
    %58 = vector.broadcast %cst_26 : f32 to vector<128x1xf32>
    %59 = arith.mulf %55, %58 : vector<128x1xf32>
    %60 = arith.mulf %57, %57 : vector<128x1xf32>
    %61 = arith.subf %59, %60 : vector<128x1xf32>
    %62 = vector.broadcast %57 : vector<128x1xf32> to vector<128x64xf32>
    %63 = arith.subf %50, %62 : vector<128x64xf32>
    %cst_27 = arith.constant 9.99999974E-6 : f32
    %64 = vector.broadcast %cst_27 : f32 to vector<128x1xf32>
    %65 = arith.addf %61, %64 : vector<128x1xf32>
    %66 = math.rsqrt %65 : vector<128x1xf32>
    %67 = vector.broadcast %66 : vector<128x1xf32> to vector<128x64xf32>
    %68 = arith.mulf %63, %67 : vector<128x64xf32>
    %c1 = arith.constant 1 : index
    %c0_28 = arith.constant 0 : index
    %69 = vector.load %arg2[%c1, %c0_28] : memref<2x64xf32, #tpu.memory_space<vmem>>, vector<1x64xf32>
    %70 = vector.shape_cast %69 : vector<1x64xf32> to vector<64xf32>
    %71 = vector.shape_cast %70 : vector<64xf32> to vector<1x64xf32>
    %72 = vector.broadcast %71 : vector<1x64xf32> to vector<128x64xf32>
    %73 = arith.mulf %68, %72 : vector<128x64xf32>
    %c1_29 = arith.constant 1 : index
    %c0_30 = arith.constant 0 : index
    %74 = vector.load %arg3[%c1_29, %c0_30] : memref<2x64xf32, #tpu.memory_space<vmem>>, vector<1x64xf32>
    %75 = vector.shape_cast %74 : vector<1x64xf32> to vector<64xf32>
    %76 = vector.shape_cast %75 : vector<64xf32> to vector<1x64xf32>
    %77 = vector.broadcast %76 : vector<1x64xf32> to vector<128x64xf32>
    %78 = arith.addf %73, %77 : vector<128x64xf32>
    %79 = arith.truncf %78 : vector<128x64xf32> to vector<128x64xbf16>
    %c1_31 = arith.constant 1 : index
    %c0_32 = arith.constant 0 : index
    %c0_33 = arith.constant 0 : index
    %80 = vector.load %arg4[%c1_31, %c0_32, %c0_33] : memref<2x64x64xbf16, #tpu.memory_space<vmem>>, vector<1x64x64xbf16>
    %81 = vector.shape_cast %80 : vector<1x64x64xbf16> to vector<64x64xbf16>
    %cst_34 = arith.constant dense<0.000000e+00> : vector<128x64xf32>
    %82 = tpu.matmul %79, %81, %cst_34 {dimension_numbers = #tpu.dot_dimension_numbers<[1], [0], [0], [1], [0, 0, 1, 1], [], []>} : vector<128x64xbf16>, vector<64x64xbf16>, vector<128x64xf32> -> vector<128x64xf32>
    %c1_35 = arith.constant 1 : index
    %c0_36 = arith.constant 0 : index
    %83 = vector.load %arg5[%c1_35, %c0_36] : memref<2x64xf32, #tpu.memory_space<vmem>>, vector<1x64xf32>
    %84 = vector.shape_cast %83 : vector<1x64xf32> to vector<64xf32>
    %85 = vector.shape_cast %84 : vector<64xf32> to vector<1x64xf32>
    %86 = vector.broadcast %85 : vector<1x64xf32> to vector<128x64xf32>
    %87 = arith.addf %82, %86 : vector<128x64xf32>
    %cst_37 = arith.constant 0.000000e+00 : f32
    %88 = vector.broadcast %cst_37 : f32 to vector<128x64xf32>
    %89 = arith.maximumf %87, %88 : vector<128x64xf32>
    %90 = arith.truncf %89 : vector<128x64xf32> to vector<128x64xbf16>
    %c1_38 = arith.constant 1 : index
    %c0_39 = arith.constant 0 : index
    %c0_40 = arith.constant 0 : index
    %91 = vector.load %arg6[%c1_38, %c0_39, %c0_40] : memref<2x64x64xbf16, #tpu.memory_space<vmem>>, vector<1x64x64xbf16>
    %92 = vector.shape_cast %91 : vector<1x64x64xbf16> to vector<64x64xbf16>
    %cst_41 = arith.constant dense<0.000000e+00> : vector<128x64xf32>
    %93 = tpu.matmul %90, %92, %cst_41 {dimension_numbers = #tpu.dot_dimension_numbers<[1], [0], [0], [1], [0, 0, 1, 1], [], []>} : vector<128x64xbf16>, vector<64x64xbf16>, vector<128x64xf32> -> vector<128x64xf32>
    %94 = arith.addf %50, %93 : vector<128x64xf32>
    %c1_42 = arith.constant 1 : index
    %c0_43 = arith.constant 0 : index
    %95 = vector.load %arg7[%c1_42, %c0_43] : memref<2x64xf32, #tpu.memory_space<vmem>>, vector<1x64xf32>
    %96 = vector.shape_cast %95 : vector<1x64xf32> to vector<64xf32>
    %97 = vector.shape_cast %96 : vector<64xf32> to vector<1x64xf32>
    %98 = vector.broadcast %97 : vector<1x64xf32> to vector<128x64xf32>
    %99 = arith.addf %94, %98 : vector<128x64xf32>
    %100 = arith.truncf %99 : vector<128x64xf32> to vector<128x64xbf16>
    %c0_44 = arith.constant 0 : index
    %c0_45 = arith.constant 0 : index
    %101 = vector.load %arg9[%c0_44, %c0_45] : memref<64x4xbf16, #tpu.memory_space<vmem>>, vector<64x4xbf16>
    %cst_46 = arith.constant dense<0.000000e+00> : vector<128x4xf32>
    %102 = tpu.matmul %100, %101, %cst_46 {dimension_numbers = #tpu.dot_dimension_numbers<[1], [0], [0], [1], [0, 0, 1, 1], [], []>} : vector<128x64xbf16>, vector<64x4xbf16>, vector<128x4xf32> -> vector<128x4xf32>
    %c0_47 = arith.constant 0 : index
    %c0_48 = arith.constant 0 : index
    %103 = vector.load %arg10[%c0_47, %c0_48] : memref<4x32xf32, #tpu.memory_space<vmem>>, vector<4x32xf32>
    %104 = vector.extract_strided_slice %102 {offsets = [0, 0], sizes = [64, 4], strides = [1, 1]} : vector<128x4xf32> to vector<64x4xf32>
    %105 = tpu.transpose %104, [1, 0] : vector<64x4xf32> -> vector<4x64xf32>
    %106 = arith.truncf %105 : vector<4x64xf32> to vector<4x64xbf16>
    %c0_49 = arith.constant 0 : index
    %c0_50 = arith.constant 0 : index
    %107 = vector.load %arg8[%c0_49, %c0_50] : memref<64x32xbf16, #tpu.memory_space<vmem>>, vector<64x32xbf16>
    %cst_51 = arith.constant dense<0.000000e+00> : vector<4x32xf32>
    %108 = tpu.matmul %106, %107, %cst_51 {dimension_numbers = #tpu.dot_dimension_numbers<[1], [0], [0], [1], [0, 0, 1, 1], [], []>} : vector<4x64xbf16>, vector<64x32xbf16>, vector<4x32xf32> -> vector<4x32xf32>
    %109 = arith.addf %108, %103 : vector<4x32xf32>
    %110 = arith.mulf %109, %109 : vector<4x32xf32>
    %111 = vector.shape_cast %110 : vector<4x32xf32> to vector<1x4x32xf32>
    %cst_52 = arith.constant dense<0.000000e+00> : vector<1xf32>
    %112 = vector.multi_reduction <add>, %111, %cst_52 [1, 2] : vector<1x4x32xf32> to vector<1xf32>
    %113 = vector.shape_cast %112 : vector<1xf32> to vector<1x1x1xf32>
    %114 = vector.extract %113[0, 0, 0] : f32 from vector<1x1x1xf32>
    %115 = math.sqrt %114 : f32
    %cst_53 = arith.constant 9.99999996E-13 : f32
    %116 = arith.maximumf %115, %cst_53 : f32
    %cst_54 = arith.constant 1.000000e+00 : f32
    %117 = arith.divf %cst_54, %116 : f32
    %118 = vector.broadcast %117 : f32 to vector<4x32xf32>
    %119 = arith.mulf %109, %118 : vector<4x32xf32>
    %c0_55 = arith.constant 0 : index
    %c0_56 = arith.constant 0 : index
    %c0_57 = arith.constant 0 : index
    %120 = vector.load %arg11[%c0_55, %c0_56, %c0_57] : memref<2x4x32xf32, #tpu.memory_space<vmem>>, vector<1x4x32xf32>
    %121 = vector.shape_cast %120 : vector<1x4x32xf32> to vector<4x32xf32>
    %122 = vector.shape_cast %119 : vector<4x32xf32> to vector<1x4x32xf32>
    tpu.vector_store %arg11[%c0_55, %c0_56, %c0_57], %122 {strides = array<i32>} : memref<2x4x32xf32, #tpu.memory_space<vmem>>, vector<1x4x32xf32>,
    %123 = vector.extract_strided_slice %102 {offsets = [64, 0], sizes = [64, 4], strides = [1, 1]} : vector<128x4xf32> to vector<64x4xf32>
    %124 = tpu.transpose %123, [1, 0] : vector<64x4xf32> -> vector<4x64xf32>
    %125 = arith.truncf %124 : vector<4x64xf32> to vector<4x64xbf16>
    %c0_58 = arith.constant 0 : index
    %c0_59 = arith.constant 0 : index
    %126 = vector.load %arg8[%c0_58, %c0_59] : memref<64x32xbf16, #tpu.memory_space<vmem>>, vector<64x32xbf16>
    %cst_60 = arith.constant dense<0.000000e+00> : vector<4x32xf32>
    %127 = tpu.matmul %125, %126, %cst_60 {dimension_numbers = #tpu.dot_dimension_numbers<[1], [0], [0], [1], [0, 0, 1, 1], [], []>} : vector<4x64xbf16>, vector<64x32xbf16>, vector<4x32xf32> -> vector<4x32xf32>
    %128 = arith.addf %127, %103 : vector<4x32xf32>
    %129 = arith.mulf %128, %128 : vector<4x32xf32>
    %130 = vector.shape_cast %129 : vector<4x32xf32> to vector<1x4x32xf32>
    %cst_61 = arith.constant dense<0.000000e+00> : vector<1xf32>
    %131 = vector.multi_reduction <add>, %130, %cst_61 [1, 2] : vector<1x4x32xf32> to vector<1xf32>
    %132 = vector.shape_cast %131 : vector<1xf32> to vector<1x1x1xf32>
    %133 = vector.extract %132[0, 0, 0] : f32 from vector<1x1x1xf32>
    %134 = math.sqrt %133 : f32
    %cst_62 = arith.constant 9.99999996E-13 : f32
    %135 = arith.maximumf %134, %cst_62 : f32
    %cst_63 = arith.constant 1.000000e+00 : f32
    %136 = arith.divf %cst_63, %135 : f32
    %137 = vector.broadcast %136 : f32 to vector<4x32xf32>
    %138 = arith.mulf %128, %137 : vector<4x32xf32>
    %c1_64 = arith.constant 1 : index
    %c0_65 = arith.constant 0 : index
    %c0_66 = arith.constant 0 : index
    %139 = vector.load %arg11[%c1_64, %c0_65, %c0_66] : memref<2x4x32xf32, #tpu.memory_space<vmem>>, vector<1x4x32xf32>
    %140 = vector.shape_cast %139 : vector<1x4x32xf32> to vector<4x32xf32>
    %141 = vector.shape_cast %138 : vector<4x32xf32> to vector<1x4x32xf32>
    tpu.vector_store %arg11[%c1_64, %c0_65, %c0_66], %141 {strides = array<i32>} : memref<2x4x32xf32, #tpu.memory_space<vmem>>, vector<1x4x32xf32>,
    return
  }
  func.func @transform_0(%arg0: i32) -> (i32, i32, i32) {
    %c0_i32 = arith.constant 0 : i32
    %c0_i32_0 = arith.constant 0 : i32
    %c0_i32_1 = arith.constant 0 : i32
    return %arg0, %c0_i32, %c0_i32_0 : i32, i32, i32
  }
  func.func @transform_1(%arg0: i32) -> (i32, i32) {
    %c0_i32 = arith.constant 0 : i32
    %c0_i32_0 = arith.constant 0 : i32
    %c0_i32_1 = arith.constant 0 : i32
    return %c0_i32, %c0_i32_0 : i32, i32
  }
  func.func @transform_2(%arg0: i32) -> (i32, i32) {
    %c0_i32 = arith.constant 0 : i32
    %c0_i32_0 = arith.constant 0 : i32
    %c0_i32_1 = arith.constant 0 : i32
    return %c0_i32, %c0_i32_0 : i32, i32
  }
  func.func @transform_3(%arg0: i32) -> (i32, i32, i32) {
    %c0_i32 = arith.constant 0 : i32
    %c0_i32_0 = arith.constant 0 : i32
    %c0_i32_1 = arith.constant 0 : i32
    %c0_i32_2 = arith.constant 0 : i32
    return %c0_i32, %c0_i32_0, %c0_i32_1 : i32, i32, i32
  }
  func.func @transform_4(%arg0: i32) -> (i32, i32) {
    %c0_i32 = arith.constant 0 : i32
    %c0_i32_0 = arith.constant 0 : i32
    %c0_i32_1 = arith.constant 0 : i32
    return %c0_i32, %c0_i32_0 : i32, i32
  }
  func.func @transform_5(%arg0: i32) -> (i32, i32, i32) {
    %c0_i32 = arith.constant 0 : i32
    %c0_i32_0 = arith.constant 0 : i32
    %c0_i32_1 = arith.constant 0 : i32
    %c0_i32_2 = arith.constant 0 : i32
    return %c0_i32, %c0_i32_0, %c0_i32_1 : i32, i32, i32
  }
  func.func @transform_6(%arg0: i32) -> (i32, i32) {
    %c0_i32 = arith.constant 0 : i32
    %c0_i32_0 = arith.constant 0 : i32
    %c0_i32_1 = arith.constant 0 : i32
    return %c0_i32, %c0_i32_0 : i32, i32
  }
  func.func @transform_7(%arg0: i32) -> (i32, i32) {
    %c0_i32 = arith.constant 0 : i32
    %c0_i32_0 = arith.constant 0 : i32
    %c0_i32_1 = arith.constant 0 : i32
    return %c0_i32, %c0_i32_0 : i32, i32
  }
  func.func @transform_8(%arg0: i32) -> (i32, i32) {
    %c0_i32 = arith.constant 0 : i32
    %c0_i32_0 = arith.constant 0 : i32
    %c0_i32_1 = arith.constant 0 : i32
    return %c0_i32, %c0_i32_0 : i32, i32
  }
  func.func @transform_9(%arg0: i32) -> (i32, i32) {
    %c0_i32 = arith.constant 0 : i32
    %c0_i32_0 = arith.constant 0 : i32
    %c0_i32_1 = arith.constant 0 : i32
    return %c0_i32, %c0_i32_0 : i32, i32
  }
  func.func @transform_10(%arg0: i32) -> (i32, i32, i32) {
    %c0_i32 = arith.constant 0 : i32
    %c0_i32_0 = arith.constant 0 : i32
    %c0_i32_1 = arith.constant 0 : i32
    return %arg0, %c0_i32, %c0_i32_0 : i32, i32, i32
  }
}

</mosaic_0001>

<llo_original>
// kernel: tpu_custom_call.1
$region0: #{tpu_custom_call.1}
  #allocation0 [shape = 'u32[]', space=smem, size = 0x4, offset = 0x4, fixed_abs, tag = 'smem constant byte address 0x4 - core index']
  #allocation1 [shape = 'u32[72,128]{1,0:T(1,128)}', space=vmem, size = 0x9000, scoped, tag = 'internal scratch']
  %s0 = inlined_call_operand.hbm [shape: f32[2,64,64], index: 0, kind: input, shape index: {}]
  %s1 = inlined_call_operand.vmem [shape: f32[2,64], index: 1, kind: input, shape index: {}]
  %s2 = inlined_call_operand.vmem [shape: f32[2,64], index: 2, kind: input, shape index: {}]
  %s3 = inlined_call_operand.vmem [shape: bf16[2,64,64], index: 3, kind: input, shape index: {}]
  %s4 = inlined_call_operand.vmem [shape: f32[2,64], index: 4, kind: input, shape index: {}]
  %s5 = inlined_call_operand.hbm [shape: bf16[2,64,64], index: 5, kind: input, shape index: {}]
  %s6 = inlined_call_operand.vmem [shape: f32[2,64], index: 6, kind: input, shape index: {}]
  %s7 = inlined_call_operand.vmem [shape: bf16[64,32], index: 7, kind: input, shape index: {}]
  %s8 = inlined_call_operand.vmem [shape: bf16[64,4], index: 8, kind: input, shape index: {}]
  %s9 = inlined_call_operand.vmem [shape: f32[4,32], index: 9, kind: input, shape index: {}]
  %s10 = inlined_call_operand.hbm [shape: f32[2,4,32], index: 10, kind: output, shape index: {}]
  %s11 = sld [smem:[#allocation0]]
  $region58: #{tpu_custom_call.1} parent=0
    _
  %s13 = ssub.s32 1, %s11
  %s14 = scalar_select 0, %s13, %s11
  $region1: #{tpu_custom_call.1} parent=0
    #allocation2 [shape = 'u8[65536]{0}', space=vmem, size = 0x10000, scoped, tag = 'input window, operand 0, single buffered']
    #allocation3 [shape = 's32[1]{0}', space=sflag, size = 0x4, scoped, tag = 'scoped memory for tpu_custom_call.1']
    #allocation4 [shape = 's32[1]{0}', space=sflag, size = 0x4, scoped, tag = 'scoped memory for tpu_custom_call.1']
    #allocation5 [shape = 'u8[32768]{0}', space=vmem, size = 0x8000, scoped, tag = 'input window, operand 5, single buffered']
    #allocation6 [shape = 's32[1]{0}', space=sflag, size = 0x4, scoped, tag = 'scoped memory for tpu_custom_call.1']
    #allocation7 [shape = 'u8[4096]{0}', space=vmem, size = 0x1000, scoped, tag = 'output window, operand 0, single buffered']
    %15 = vsyncpa [#allocation3], 0
    %16 = vsyncpa [#allocation6], 0
    %17 = vsyncpa [#allocation4], 0
    // Predicated region
    $region2: #{tpu_custom_call.1} parent=1 // pred_check
      _
    $region3: #{tpu_custom_call.1} parent=1 // pred_check_branch
      %19 = sbr.rel (0) target = $region5
    $region4: #{tpu_custom_call.1} parent=1 // pred_region
      %21 = vsyncadd [#allocation3], 0
      %s22 = sshll.u32 %s0, 4
      %s23 = int_to_ptr.hbm [resolvable:$true] %s22
      %s24 = sshll.u32 [#allocation2], 4
      %s25 = int_to_ptr.vmem [resolvable:$true] %s24
      %30 = dma.hbm_to_vmem [thread:$0]  %s23, 2048, %s25, [#allocation3], 128, 128, 8
    $region5: #{tpu_custom_call.1} parent=1 // pred_fallthru
      _
    // Predicated region
    $region6: #{tpu_custom_call.1} parent=1 // pred_check
      _
    $region7: #{tpu_custom_call.1} parent=1 // pred_check_branch
      %32 = sbr.rel (0) target = $region9
    $region8: #{tpu_custom_call.1} parent=1 // pred_region
      _
    $region9: #{tpu_custom_call.1} parent=1 // pred_fallthru
      _
    // Predicated region
    $region10: #{tpu_custom_call.1} parent=1 // pred_check
      _
    $region11: #{tpu_custom_call.1} parent=1 // pred_check_branch
      %34 = sbr.rel (0) target = $region13
    $region12: #{tpu_custom_call.1} parent=1 // pred_region
      _
    $region13: #{tpu_custom_call.1} parent=1 // pred_fallthru
      _
    // Predicated region
    $region14: #{tpu_custom_call.1} parent=1 // pred_check
      _
    $region15: #{tpu_custom_call.1} parent=1 // pred_check_branch
      %36 = sbr.rel (0) target = $region17
    $region16: #{tpu_custom_call.1} parent=1 // pred_region
      _
    $region17: #{tpu_custom_call.1} parent=1 // pred_fallthru
      _
    // Predicated region
    $region18: #{tpu_custom_call.1} parent=1 // pred_check
      _
    $region19: #{tpu_custom_call.1} parent=1 // pred_check_branch
      %38 = sbr.rel (0) target = $region21
    $region20: #{tpu_custom_call.1} parent=1 // pred_region
      _
    $region21: #{tpu_custom_call.1} parent=1 // pred_fallthru
      _
    // Predicated region
    $region22: #{tpu_custom_call.1} parent=1 // pred_check
      _
    $region23: #{tpu_custom_call.1} parent=1 // pred_check_branch
      %40 = sbr.rel (0) target = $region25
    $region24: #{tpu_custom_call.1} parent=1 // pred_region
      %42 = vsyncadd [#allocation6], 0
      %s43 = sshll.u32 %s5, 4
      %s44 = int_to_ptr.hbm [resolvable:$true] %s43
      %s45 = sshll.u32 [#allocation5], 4
      %s46 = int_to_ptr.vmem [resolvable:$true] %s45
      %51 = dma.hbm_to_vmem [thread:$0]  %s44, 1024, %s46, [#allocation6], 64, 64, 4
    $region25: #{tpu_custom_call.1} parent=1 // pred_fallthru
      _
    // Predicated region
    $region26: #{tpu_custom_call.1} parent=1 // pred_check
      _
    $region27: #{tpu_custom_call.1} parent=1 // pred_check_branch
      %53 = sbr.rel (0) target = $region29
    $region28: #{tpu_custom_call.1} parent=1 // pred_region
      _
    $region29: #{tpu_custom_call.1} parent=1 // pred_fallthru
      _
    // Predicated region
    $region30: #{tpu_custom_call.1} parent=1 // pred_check
      _
    $region31: #{tpu_custom_call.1} parent=1 // pred_check_branch
      %55 = sbr.rel (0) target = $region33
    $region32: #{tpu_custom_call.1} parent=1 // pred_region
      _
    $region33: #{tpu_custom_call.1} parent=1 // pred_fallthru
      _
    // Predicated region
    $region34: #{tpu_custom_call.1} parent=1 // pred_check
      _
    $region35: #{tpu_custom_call.1} parent=1 // pred_check_branch
      %57 = sbr.rel (0) target = $region37
    $region36: #{tpu_custom_call.1} parent=1 // pred_region
      _
    $region37: #{tpu_custom_call.1} parent=1 // pred_fallthru
      _
    // Predicated region
    $region38: #{tpu_custom_call.1} parent=1 // pred_check
      _
    $region39: #{tpu_custom_call.1} parent=1 // pred_check_branch
      %59 = sbr.rel (0) target = $region41
    $region40: #{tpu_custom_call.1} parent=1 // pred_region
      _
    $region41: #{tpu_custom_call.1} parent=1 // pred_fallthru
      _
    // Predicated region
    $region42: #{tpu_custom_call.1} parent=1 // pred_check
      _
    $region43: #{tpu_custom_call.1} parent=1 // pred_check_branch
      %61 = sbr.rel (0) target = $region45
    $region44: #{tpu_custom_call.1} parent=1 // pred_region
      %63 = dma.done [#allocation3], 2048
    $region45: #{tpu_custom_call.1} parent=1 // pred_fallthru
      _
    // Predicated region
    $region46: #{tpu_custom_call.1} parent=1 // pred_check
      _
    $region47: #{tpu_custom_call.1} parent=1 // pred_check_branch
      %65 = sbr.rel (0) target = $region49
    $region48: #{tpu_custom_call.1} parent=1 // pred_region
      %67 = dma.done [#allocation6], 1024
    $region49: #{tpu_custom_call.1} parent=1 // pred_fallthru
      _
    %v69 = vld [vmem:[#allocation2] sm:$0xff]
    %v70 = vld [vmem:[#allocation2 + $0x8] sm:$0xff]
    %v71 = vld [vmem:[#allocation2 + $0x10] sm:$0xff]
    %v72 = vld [vmem:[#allocation2 + $0x18] sm:$0xff]
    %v73 = vld [vmem:[#allocation2 + $0x20] sm:$0xff]
    %v74 = vld [vmem:[#allocation2 + $0x28] sm:$0xff]
    %v75 = vld [vmem:[#allocation2 + $0x30] sm:$0xff]
    %v76 = vld [vmem:[#allocation2 + $0x38] sm:$0xff]
    %v77 = vld [vmem:[#allocation2 + $0x40] sm:$0xff]
    %v78 = vld [vmem:[#allocation2 + $0x48] sm:$0xff]
    %v79 = vld [vmem:[#allocation2 + $0x50] sm:$0xff]
    %v80 = vld [vmem:[#allocation2 + $0x58] sm:$0xff]
    %v81 = vld [vmem:[#allocation2 + $0x60] sm:$0xff]
    %v82 = vld [vmem:[#allocation2 + $0x68] sm:$0xff]
    %v83 = vld [vmem:[#allocation2 + $0x70] sm:$0xff]
    %v84 = vld [vmem:[#allocation2 + $0x78] sm:$0xff]
    %vm85 = vcmask 523264
    %v86 = vsel %vm85, %v69, 0.0
    %87 = vadd.xlane.f32.xlu0 %v86
    %v88 = vpop.xlane.xlu0 %87
    %v89 = vsel %vm85, %v70, 0.0
    %90 = vadd.xlane.f32.xlu0 %v89
    %v91 = vpop.xlane.xlu0 %90
    %v92 = vsel %vm85, %v71, 0.0
    %93 = vadd.xlane.f32.xlu0 %v92
    %v94 = vpop.xlane.xlu0 %93
    %v95 = vsel %vm85, %v72, 0.0
    %96 = vadd.xlane.f32.xlu0 %v95
    %v97 = vpop.xlane.xlu0 %96
    %v98 = vsel %vm85, %v73, 0.0
    %99 = vadd.xlane.f32.xlu0 %v98
    %v100 = vpop.xlane.xlu0 %99
    %v101 = vsel %vm85, %v74, 0.0
    %102 = vadd.xlane.f32.xlu0 %v101
    %v103 = vpop.xlane.xlu0 %102
    %v104 = vsel %vm85, %v75, 0.0
    %105 = vadd.xlane.f32.xlu0 %v104
    %v106 = vpop.xlane.xlu0 %105
    %v107 = vsel %vm85, %v76, 0.0
    %108 = vadd.xlane.f32.xlu0 %v107
    %v109 = vpop.xlane.xlu0 %108
    %v110 = vsel %vm85, %v77, 0.0
    %111 = vadd.xlane.f32.xlu0 %v110
    %v112 = vpop.xlane.xlu0 %111
    %v113 = vsel %vm85, %v78, 0.0
    %114 = vadd.xlane.f32.xlu0 %v113
    %v115 = vpop.xlane.xlu0 %114
    %v116 = vsel %vm85, %v79, 0.0
    %117 = vadd.xlane.f32.xlu0 %v116
    %v118 = vpop.xlane.xlu0 %117
    %v119 = vsel %vm85, %v80, 0.0
    %120 = vadd.xlane.f32.xlu0 %v119
    %v121 = vpop.xlane.xlu0 %120
    %v122 = vsel %vm85, %v81, 0.0
    %123 = vadd.xlane.f32.xlu0 %v122
    %v124 = vpop.xlane.xlu0 %123
    %v125 = vsel %vm85, %v82, 0.0
    %126 = vadd.xlane.f32.xlu0 %v125
    %v127 = vpop.xlane.xlu0 %126
    %v128 = vsel %vm85, %v83, 0.0
    %129 = vadd.xlane.f32.xlu0 %v128
    %v130 = vpop.xlane.xlu0 %129
    %v131 = vsel %vm85, %v84, 0.0
    %132 = vadd.xlane.f32.xlu0 %v131
    %v133 = vpop.xlane.xlu0 %132
    %v134 = vmul.f32 %v69, %v69
    %v135 = vmul.f32 %v70, %v70
    %v136 = vmul.f32 %v71, %v71
    %v137 = vmul.f32 %v72, %v72
    %v138 = vmul.f32 %v73, %v73
    %v139 = vmul.f32 %v74, %v74
    %v140 = vmul.f32 %v75, %v75
    %v141 = vmul.f32 %v76, %v76
    %v142 = vmul.f32 %v77, %v77
    %v143 = vmul.f32 %v78, %v78
    %v144 = vmul.f32 %v79, %v79
    %v145 = vmul.f32 %v80, %v80
    %v146 = vmul.f32 %v81, %v81
    %v147 = vmul.f32 %v82, %v82
    %v148 = vmul.f32 %v83, %v83
    %v149 = vmul.f32 %v84, %v84
    %v150 = vsel %vm85, %v134, 0.0
    %151 = vadd.xlane.f32.xlu0 %v150
    %v152 = vpop.xlane.xlu0 %151
    %v153 = vsel %vm85, %v135, 0.0
    %154 = vadd.xlane.f32.xlu0 %v153
    %v155 = vpop.xlane.xlu0 %154
    %v156 = vsel %vm85, %v136, 0.0
    %157 = vadd.xlane.f32.xlu0 %v156
    %v158 = vpop.xlane.xlu0 %157
    %v159 = vsel %vm85, %v137, 0.0
    %160 = vadd.xlane.f32.xlu0 %v159
    %v161 = vpop.xlane.xlu0 %160
    %v162 = vsel %vm85, %v138, 0.0
    %163 = vadd.xlane.f32.xlu0 %v162
    %v164 = vpop.xlane.xlu0 %163
    %v165 = vsel %vm85, %v139, 0.0
    %166 = vadd.xlane.f32.xlu0 %v165
    %v167 = vpop.xlane.xlu0 %166
    %v168 = vsel %vm85, %v140, 0.0
    %169 = vadd.xlane.f32.xlu0 %v168
    %v170 = vpop.xlane.xlu0 %169
    %v171 = vsel %vm85, %v141, 0.0
    %172 = vadd.xlane.f32.xlu0 %v171
    %v173 = vpop.xlane.xlu0 %172
    %v174 = vsel %vm85, %v142, 0.0
    %175 = vadd.xlane.f32.xlu0 %v174
    %v176 = vpop.xlane.xlu0 %175
    %v177 = vsel %vm85, %v143, 0.0
    %178 = vadd.xlane.f32.xlu0 %v177
    %v179 = vpop.xlane.xlu0 %178
    %v180 = vsel %vm85, %v144, 0.0
    %181 = vadd.xlane.f32.xlu0 %v180
    %v182 = vpop.xlane.xlu0 %181
    %v183 = vsel %vm85, %v145, 0.0
    %184 = vadd.xlane.f32.xlu0 %v183
    %v185 = vpop.xlane.xlu0 %184
    %v186 = vsel %vm85, %v146, 0.0
    %187 = vadd.xlane.f32.xlu0 %v186
    %v188 = vpop.xlane.xlu0 %187
    %v189 = vsel %vm85, %v147, 0.0
    %190 = vadd.xlane.f32.xlu0 %v189
    %v191 = vpop.xlane.xlu0 %190
    %v192 = vsel %vm85, %v148, 0.0
    %193 = vadd.xlane.f32.xlu0 %v192
    %v194 = vpop.xlane.xlu0 %193
    %v195 = vsel %vm85, %v149, 0.0
    %196 = vadd.xlane.f32.xlu0 %v195
    %v197 = vpop.xlane.xlu0 %196
    %v198 = vmul.f32 %v88, 0.015625
    %v199 = vmul.f32 %v91, 0.015625
    %v200 = vmul.f32 %v94, 0.015625
    %v201 = vmul.f32 %v97, 0.015625
    %v202 = vmul.f32 %v100, 0.015625
    %v203 = vmul.f32 %v103, 0.015625
    %v204 = vmul.f32 %v106, 0.015625
    %v205 = vmul.f32 %v109, 0.015625
    %v206 = vmul.f32 %v112, 0.015625
    %v207 = vmul.f32 %v115, 0.015625
    %v208 = vmul.f32 %v118, 0.015625
    %v209 = vmul.f32 %v121, 0.015625
    %v210 = vmul.f32 %v124, 0.015625
    %v211 = vmul.f32 %v127, 0.015625
    %v212 = vmul.f32 %v130, 0.015625
    %v213 = vmul.f32 %v133, 0.015625
    %v214 = vmul.f32 %v152, 0.015625
    %v215 = vmul.f32 %v155, 0.015625
    %v216 = vmul.f32 %v158, 0.015625
    %v217 = vmul.f32 %v161, 0.015625
    %v218 = vmul.f32 %v164, 0.015625
    %v219 = vmul.f32 %v167, 0.015625
    %v220 = vmul.f32 %v170, 0.015625
    %v221 = vmul.f32 %v173, 0.015625
    %v222 = vmul.f32 %v176, 0.015625
    %v223 = vmul.f32 %v179, 0.015625
    %v224 = vmul.f32 %v182, 0.015625
    %v225 = vmul.f32 %v185, 0.015625
    %v226 = vmul.f32 %v188, 0.015625
    %v227 = vmul.f32 %v191, 0.015625
    %v228 = vmul.f32 %v194, 0.015625
    %v229 = vmul.f32 %v197, 0.015625
    %v230 = vmul.f32 %v198, %v198
    %v231 = vmul.f32 %v199, %v199
    %v232 = vmul.f32 %v200, %v200
    %v233 = vmul.f32 %v201, %v201
    %v234 = vmul.f32 %v202, %v202
    %v235 = vmul.f32 %v203, %v203
    %v236 = vmul.f32 %v204, %v204
    %v237 = vmul.f32 %v205, %v205
    %v238 = vmul.f32 %v206, %v206
    %v239 = vmul.f32 %v207, %v207
    %v240 = vmul.f32 %v208, %v208
    %v241 = vmul.f32 %v209, %v209
    %v242 = vmul.f32 %v210, %v210
    %v243 = vmul.f32 %v211, %v211
    %v244 = vmul.f32 %v212, %v212
    %v245 = vmul.f32 %v213, %v213
    %v246 = vsub.f32 %v214, %v230
    %v247 = vsub.f32 %v215, %v231
    %v248 = vsub.f32 %v216, %v232
    %v249 = vsub.f32 %v217, %v233
    %v250 = vsub.f32 %v218, %v234
    %v251 = vsub.f32 %v219, %v235
    %v252 = vsub.f32 %v220, %v236
    %v253 = vsub.f32 %v221, %v237
    %v254 = vsub.f32 %v222, %v238
    %v255 = vsub.f32 %v223, %v239
    %v256 = vsub.f32 %v224, %v240
    %v257 = vsub.f32 %v225, %v241
    %v258 = vsub.f32 %v226, %v242
    %v259 = vsub.f32 %v227, %v243
    %v260 = vsub.f32 %v228, %v244
    %v261 = vsub.f32 %v229, %v245
    %v262 = vsub.f32 %v69, %v198
    %v263 = vsub.f32 %v70, %v199
    %v264 = vsub.f32 %v71, %v200
    %v265 = vsub.f32 %v72, %v201
    %v266 = vsub.f32 %v73, %v202
    %v267 = vsub.f32 %v74, %v203
    %v268 = vsub.f32 %v75, %v204
    %v269 = vsub.f32 %v76, %v205
    %v270 = vsub.f32 %v77, %v206
    %v271 = vsub.f32 %v78, %v207
    %v272 = vsub.f32 %v79, %v208
    %v273 = vsub.f32 %v80, %v209
    %v274 = vsub.f32 %v81, %v210
    %v275 = vsub.f32 %v82, %v211
    %v276 = vsub.f32 %v83, %v212
    %v277 = vsub.f32 %v84, %v213
    %v278 = vadd.f32 %v246, 1e-05
    %v279 = vadd.f32 %v247, 1e-05
    %v280 = vadd.f32 %v248, 1e-05
    %v281 = vadd.f32 %v249, 1e-05
    %v282 = vadd.f32 %v250, 1e-05
    %v283 = vadd.f32 %v251, 1e-05
    %v284 = vadd.f32 %v252, 1e-05
    %v285 = vadd.f32 %v253, 1e-05
    %v286 = vadd.f32 %v254, 1e-05
    %v287 = vadd.f32 %v255, 1e-05
    %v288 = vadd.f32 %v256, 1e-05
    %v289 = vadd.f32 %v257, 1e-05
    %v290 = vadd.f32 %v258, 1e-05
    %v291 = vadd.f32 %v259, 1e-05
    %v292 = vadd.f32 %v260, 1e-05
    %v293 = vadd.f32 %v261, 1e-05
    %v294 = vrsqrt.pop %v278
    %v295 = vmul.f32 %v294, %v278
    %v296 = vmul.f32 %v295, %v294
    %v297 = vmul.f32 0.5, %v296
    %v298 = vsub.f32 1.5, %v297
    %v299 = vmul.f32 %v294, %v298
    %vm300 = vweird.f32 %v278
    %vm301 = vweird.f32 %v294
    %vm302 = vmor %vm300, %vm301
    %v303 = vsel %vm302, %v294, %v299
    %v304 = vrsqrt.pop %v279
    %v305 = vmul.f32 %v304, %v279
    %v306 = vmul.f32 %v305, %v304
    %v307 = vmul.f32 0.5, %v306
    %v308 = vsub.f32 1.5, %v307
    %v309 = vmul.f32 %v304, %v308
    %vm310 = vweird.f32 %v279
    %vm311 = vweird.f32 %v304
    %vm312 = vmor %vm310, %vm311
    %v313 = vsel %vm312, %v304, %v309
    %v314 = vrsqrt.pop %v280
    %v315 = vmul.f32 %v314, %v280
    %v316 = vmul.f32 %v315, %v314
    %v317 = vmul.f32 0.5, %v316
    %v318 = vsub.f32 1.5, %v317
    %v319 = vmul.f32 %v314, %v318
    %vm320 = vweird.f32 %v280
    %vm321 = vweird.f32 %v314
    %vm322 = vmor %vm320, %vm321
    %v323 = vsel %vm322, %v314, %v319
    %v324 = vrsqrt.pop %v281
    %v325 = vmul.f32 %v324, %v281
    %v326 = vmul.f32 %v325, %v324
    %v327 = vmul.f32 0.5, %v326
    %v328 = vsub.f32 1.5, %v327
    %v329 = vmul.f32 %v324, %v328
    %vm330 = vweird.f32 %v281
    %vm331 = vweird.f32 %v324
    %vm332 = vmor %vm330, %vm331
    %v333 = vsel %vm332, %v324, %v329
    %v334 = vrsqrt.pop %v282
    %v335 = vmul.f32 %v334, %v282
    %v336 = vmul.f32 %v335, %v334
    %v337 = vmul.f32 0.5, %v336
    %v338 = vsub.f32 1.5, %v337
    %v339 = vmul.f32 %v334, %v338
    %vm340 = vweird.f32 %v282
    %vm341 = vweird.f32 %v334
    %vm342 = vmor %vm340, %vm341
    %v343 = vsel %vm342, %v334, %v339
    %v344 = vrsqrt.pop %v283
    %v345 = vmul.f32 %v344, %v283
    %v346 = vmul.f32 %v345, %v344
    %v347 = vmul.f32 0.5, %v346
    %v348 = vsub.f32 1.5, %v347
    %v349 = vmul.f32 %v344, %v348
    %vm350 = vweird.f32 %v283
    %vm351 = vweird.f32 %v344
    %vm352 = vmor %vm350, %vm351
    %v353 = vsel %vm352, %v344, %v349
    %v354 = vrsqrt.pop %v284
    %v355 = vmul.f32 %v354, %v284
    %v356 = vmul.f32 %v355, %v354
    %v357 = vmul.f32 0.5, %v356
    %v358 = vsub.f32 1.5, %v357
    %v359 = vmul.f32 %v354, %v358
    %vm360 = vweird.f32 %v284
    %vm361 = vweird.f32 %v354
    %vm362 = vmor %vm360, %vm361
    %v363 = vsel %vm362, %v354, %v359
    %v364 = vrsqrt.pop %v285
    %v365 = vmul.f32 %v364, %v285
    %v366 = vmul.f32 %v365, %v364
    %v367 = vmul.f32 0.5, %v366
    %v368 = vsub.f32 1.5, %v367
    %v369 = vmul.f32 %v364, %v368
    %vm370 = vweird.f32 %v285
    %vm371 = vweird.f32 %v364
    %vm372 = vmor %vm370, %vm371
    %v373 = vsel %vm372, %v364, %v369
    %v374 = vrsqrt.pop %v286
    %v375 = vmul.f32 %v374, %v286
    %v376 = vmul.f32 %v375, %v374
    %v377 = vmul.f32 0.5, %v376
    %v378 = vsub.f32 1.5, %v377
    %v379 = vmul.f32 %v374, %v378
    %vm380 = vweird.f32 %v286
    %vm381 = vweird.f32 %v374
    %vm382 = vmor %vm380, %vm381
    %v383 = vsel %vm382, %v374, %v379
    %v384 = vrsqrt.pop %v287
    %v385 = vmul.f32 %v384, %v287
    %v386 = vmul.f32 %v385, %v384
    %v387 = vmul.f32 0.5, %v386
    %v388 = vsub.f32 1.5, %v387
    %v389 = vmul.f32 %v384, %v388
    %vm390 = vweird.f32 %v287
    %vm391 = vweird.f32 %v384
    %vm392 = vmor %vm390, %vm391
    %v393 = vsel %vm392, %v384, %v389
    %v394 = vrsqrt.pop %v288
    %v395 = vmul.f32 %v394, %v288
    %v396 = vmul.f32 %v395, %v394
    %v397 = vmul.f32 0.5, %v396
    %v398 = vsub.f32 1.5, %v397
    %v399 = vmul.f32 %v394, %v398
    %vm400 = vweird.f32 %v288
    %vm401 = vweird.f32 %v394
    %vm402 = vmor %vm400, %vm401
    %v403 = vsel %vm402, %v394, %v399
    %v404 = vrsqrt.pop %v289
    %v405 = vmul.f32 %v404, %v289
    %v406 = vmul.f32 %v405, %v404
    %v407 = vmul.f32 0.5, %v406
    %v408 = vsub.f32 1.5, %v407
    %v409 = vmul.f32 %v404, %v408
    %vm410 = vweird.f32 %v289
    %vm411 = vweird.f32 %v404
    %vm412 = vmor %vm410, %vm411
    %v413 = vsel %vm412, %v404, %v409
    %v414 = vrsqrt.pop %v290
    %v415 = vmul.f32 %v414, %v290
    %v416 = vmul.f32 %v415, %v414
    %v417 = vmul.f32 0.5, %v416
    %v418 = vsub.f32 1.5, %v417
    %v419 = vmul.f32 %v414, %v418
    %vm420 = vweird.f32 %v290
    %vm421 = vweird.f32 %v414
    %vm422 = vmor %vm420, %vm421
    %v423 = vsel %vm422, %v414, %v419
    %v424 = vrsqrt.pop %v291
    %v425 = vmul.f32 %v424, %v291
    %v426 = vmul.f32 %v425, %v424
    %v427 = vmul.f32 0.5, %v426
    %v428 = vsub.f32 1.5, %v427
    %v429 = vmul.f32 %v424, %v428
    %vm430 = vweird.f32 %v291
    %vm431 = vweird.f32 %v424
    %vm432 = vmor %vm430, %vm431
    %v433 = vsel %vm432, %v424, %v429
    %v434 = vrsqrt.pop %v292
    %v435 = vmul.f32 %v434, %v292
    %v436 = vmul.f32 %v435, %v434
    %v437 = vmul.f32 0.5, %v436
    %v438 = vsub.f32 1.5, %v437
    %v439 = vmul.f32 %v434, %v438
    %vm440 = vweird.f32 %v292
    %vm441 = vweird.f32 %v434
    %vm442 = vmor %vm440, %vm441
    %v443 = vsel %vm442, %v434, %v439
    %v444 = vrsqrt.pop %v293
    %v445 = vmul.f32 %v444, %v293
    %v446 = vmul.f32 %v445, %v444
    %v447 = vmul.f32 0.5, %v446
    %v448 = vsub.f32 1.5, %v447
    %v449 = vmul.f32 %v444, %v448
    %vm450 = vweird.f32 %v293
    %vm451 = vweird.f32 %v444
    %vm452 = vmor %vm450, %vm451
    %v453 = vsel %vm452, %v444, %v449
    %v454 = vmul.f32 %v262, %v303
    %v455 = vmul.f32 %v263, %v313
    %v456 = vmul.f32 %v264, %v323
    %v457 = vmul.f32 %v265, %v333
    %v458 = vmul.f32 %v266, %v343
    %v459 = vmul.f32 %v267, %v353
    %v460 = vmul.f32 %v268, %v363
    %v461 = vmul.f32 %v269, %v373
    %v462 = vmul.f32 %v270, %v383
    %v463 = vmul.f32 %v271, %v393
    %v464 = vmul.f32 %v272, %v403
    %v465 = vmul.f32 %v273, %v413
    %v466 = vmul.f32 %v274, %v423
    %v467 = vmul.f32 %v275, %v433
    %v468 = vmul.f32 %v276, %v443
    %v469 = vmul.f32 %v277, %v453
    %v470 = vld [vmem:[%s1] sm:$0x1]
    %v471 = vperm.slane %v470, 0
    %v472 = vmul.f32 %v454, %v471
    %v473 = vmul.f32 %v455, %v471
    %v474 = vmul.f32 %v456, %v471
    %v475 = vmul.f32 %v457, %v471
    %v476 = vmul.f32 %v458, %v471
    %v477 = vmul.f32 %v459, %v471
    %v478 = vmul.f32 %v460, %v471
    %v479 = vmul.f32 %v461, %v471
    %v480 = vmul.f32 %v462, %v471
    %v481 = vmul.f32 %v463, %v471
    %v482 = vmul.f32 %v464, %v471
    %v483 = vmul.f32 %v465, %v471
    %v484 = vmul.f32 %v466, %v471
    %v485 = vmul.f32 %v467, %v471
    %v486 = vmul.f32 %v468, %v471
    %v487 = vmul.f32 %v469, %v471
    %v488 = vld [vmem:[%s2] sm:$0x1]
    %v489 = vperm.slane %v488, 0
    %v490 = vadd.f32 %v472, %v489
    %v491 = vadd.f32 %v473, %v489
    %v492 = vadd.f32 %v474, %v489
    %v493 = vadd.f32 %v475, %v489
    %v494 = vadd.f32 %v476, %v489
    %v495 = vadd.f32 %v477, %v489
    %v496 = vadd.f32 %v478, %v489
    %v497 = vadd.f32 %v479, %v489
    %v498 = vadd.f32 %v480, %v489
    %v499 = vadd.f32 %v481, %v489
    %v500 = vadd.f32 %v482, %v489
    %v501 = vadd.f32 %v483, %v489
    %v502 = vadd.f32 %v484, %v489
    %v503 = vadd.f32 %v485, %v489
    %v504 = vadd.f32 %v486, %v489
    %v505 = vadd.f32 %v487, %v489
    %v506 = vpack.c.bf16 %v491, %v490
    %v507 = vpack.c.bf16 %v493, %v492
    %v508 = vpack.c.bf16 %v495, %v494
    %v509 = vpack.c.bf16 %v497, %v496
    %v510 = vpack.c.bf16 %v499, %v498
    %v511 = vpack.c.bf16 %v501, %v500
    %v512 = vpack.c.bf16 %v503, %v502
    %v513 = vpack.c.bf16 %v505, %v504
    %v514 = vld [vmem:[%s3] sm:$0xf]
    %v515 = vld [vmem:[%s3 + $0x4] sm:$0xf]
    %v516 = vld [vmem:[%s3 + $0x8] sm:$0xf]
    %v517 = vld [vmem:[%s3 + $0xc] sm:$0xf]
    %v518 = vld [vmem:[%s3 + $0x10] sm:$0xf]
    %v519 = vld [vmem:[%s3 + $0x14] sm:$0xf]
    %v520 = vld [vmem:[%s3 + $0x18] sm:$0xf]
    %v521 = vld [vmem:[%s3 + $0x1c] sm:$0xf]
    %v522 = vld [vmem:[%s4] sm:$0x1]
    %v523 = vperm.slane %v522, 0
    %v532 = vunpack.c.l.b16 %v514
    %v533 = vunpack.c.l.b16 %v515
    %v534 = vunpack.c.l.b16 %v516
    %v535 = vunpack.c.l.b16 %v517
    %v536 = vunpack.c.l.b16 %v518
    %v537 = vunpack.c.l.b16 %v519
    %v538 = vunpack.c.l.b16 %v520
    %v539 = vunpack.c.l.b16 %v521
    %v540 = vpack.c.b16 %v533, %v532
    %v541 = vpack.c.b16 %v535, %v534
    %v542 = vpack.c.b16 %v537, %v536
    %v543 = vpack.c.b16 %v539, %v538
    %v549 = vsel %vm85, %v506, 0
    %v552 = vsel %vm85, %v507, 0
    %v555 = vsel %vm85, %v508, 0
    %v558 = vsel %vm85, %v509, 0
    %v561 = vsel %vm85, %v510, 0
    %v564 = vsel %vm85, %v511, 0
    %v567 = vsel %vm85, %v512, 0
    %v570 = vsel %vm85, %v513, 0
    %572 = vmatpush.bf16.msra.mxu0 0
    %573 = vmatpush.bf16.msra.mxu0 0
    %574 = vmatpush.bf16.msra.mxu0 0
    %575 = vmatpush.bf16.msra.mxu0 0
    %576 = vmatpush.bf16.msra.mxu0 %v543
    %577 = vmatpush.bf16.msra.mxu0 %v542
    %578 = vmatpush.bf16.msra.mxu0 %v541
    %579 = vmatpush.bf16.msra.mxu0 %v540
    %580 = vmatmul.bf16.gmra.mxu0 %v549
    %v581 = vpop.f32.mrf.mxu0
    %v582 = vadd.f32 %v523, %v581
    %v583 = vpop.f32.mrf.mxu0
    %v584 = vadd.f32 %v523, %v583
    %585 = vmatmul.bf16.gmra.mxu0 %v552
    %v586 = vpop.f32.mrf.mxu0
    %v587 = vadd.f32 %v523, %v586
    %v588 = vpop.f32.mrf.mxu0
    %v589 = vadd.f32 %v523, %v588
    %590 = vmatmul.bf16.gmra.mxu0 %v555
    %v591 = vpop.f32.mrf.mxu0
    %v592 = vadd.f32 %v523, %v591
    %v593 = vpop.f32.mrf.mxu0
    %v594 = vadd.f32 %v523, %v593
    %595 = vmatmul.bf16.gmra.mxu0 %v558
    %v596 = vpop.f32.mrf.mxu0
    %v597 = vadd.f32 %v523, %v596
    %v598 = vpop.f32.mrf.mxu0
    %v599 = vadd.f32 %v523, %v598
    %600 = vmatmul.bf16.gmra.mxu0 %v561
    %v601 = vpop.f32.mrf.mxu0
    %v602 = vadd.f32 %v523, %v601
    %v603 = vpop.f32.mrf.mxu0
    %v604 = vadd.f32 %v523, %v603
    %605 = vmatmul.bf16.gmra.mxu0 %v564
    %v606 = vpop.f32.mrf.mxu0
    %v607 = vadd.f32 %v523, %v606
    %v608 = vpop.f32.mrf.mxu0
    %v609 = vadd.f32 %v523, %v608
    %610 = vmatmul.bf16.gmra.mxu0 %v567
    %v611 = vpop.f32.mrf.mxu0
    %v612 = vadd.f32 %v523, %v611
    %v613 = vpop.f32.mrf.mxu0
    %v614 = vadd.f32 %v523, %v613
    %615 = vmatmul.bf16.gmra.mxu0 %v570
    %v616 = vpop.f32.mrf.mxu0
    %v617 = vadd.f32 %v523, %v616
    %v618 = vpop.f32.mrf.mxu0
    %v619 = vadd.f32 %v523, %v618
    %620 = vdwg.mxu0
    %v621 = vmax.f32 %v582, 0.0
    %v622 = vmax.f32 %v584, 0.0
    %v623 = vmax.f32 %v587, 0.0
    %v624 = vmax.f32 %v589, 0.0
    %v625 = vmax.f32 %v592, 0.0
    %v626 = vmax.f32 %v594, 0.0
    %v627 = vmax.f32 %v597, 0.0
    %v628 = vmax.f32 %v599, 0.0
    %v629 = vmax.f32 %v602, 0.0
    %v630 = vmax.f32 %v604, 0.0
    %v631 = vmax.f32 %v607, 0.0
    %v632 = vmax.f32 %v609, 0.0
    %v633 = vmax.f32 %v612, 0.0
    %v634 = vmax.f32 %v614, 0.0
    %v635 = vmax.f32 %v617, 0.0
    %v636 = vmax.f32 %v619, 0.0
    %v637 = vpack.c.bf16 %v622, %v621
    %v638 = vpack.c.bf16 %v624, %v623
    %v639 = vpack.c.bf16 %v626, %v625
    %v640 = vpack.c.bf16 %v628, %v627
    %v641 = vpack.c.bf16 %v630, %v629
    %v642 = vpack.c.bf16 %v632, %v631
    %v643 = vpack.c.bf16 %v634, %v633
    %v644 = vpack.c.bf16 %v636, %v635
    %v645 = vld [vmem:[#allocation5] sm:$0xf]
    %v646 = vld [vmem:[#allocation5 + $0x4] sm:$0xf]
    %v647 = vld [vmem:[#allocation5 + $0x8] sm:$0xf]
    %v648 = vld [vmem:[#allocation5 + $0xc] sm:$0xf]
    %v649 = vld [vmem:[#allocation5 + $0x10] sm:$0xf]
    %v650 = vld [vmem:[#allocation5 + $0x14] sm:$0xf]
    %v651 = vld [vmem:[#allocation5 + $0x18] sm:$0xf]
    %v652 = vld [vmem:[#allocation5 + $0x1c] sm:$0xf]
    %v661 = vunpack.c.l.b16 %v645
    %v662 = vunpack.c.l.b16 %v646
    %v663 = vunpack.c.l.b16 %v647
    %v664 = vunpack.c.l.b16 %v648
    %v665 = vunpack.c.l.b16 %v649
    %v666 = vunpack.c.l.b16 %v650
    %v667 = vunpack.c.l.b16 %v651
    %v668 = vunpack.c.l.b16 %v652
    %v669 = vpack.c.b16 %v662, %v661
    %v670 = vpack.c.b16 %v664, %v663
    %v671 = vpack.c.b16 %v666, %v665
    %v672 = vpack.c.b16 %v668, %v667
    %v678 = vsel %vm85, %v637, 0
    %v681 = vsel %vm85, %v638, 0
    %v684 = vsel %vm85, %v639, 0
    %v687 = vsel %vm85, %v640, 0
    %v690 = vsel %vm85, %v641, 0
    %v693 = vsel %vm85, %v642, 0
    %v696 = vsel %vm85, %v643, 0
    %v699 = vsel %vm85, %v644, 0
    %701 = vmatpush.bf16.msra.mxu0 0
    %702 = vmatpush.bf16.msra.mxu0 0
    %703 = vmatpush.bf16.msra.mxu0 0
    %704 = vmatpush.bf16.msra.mxu0 0
    %705 = vmatpush.bf16.msra.mxu0 %v672
    %706 = vmatpush.bf16.msra.mxu0 %v671
    %707 = vmatpush.bf16.msra.mxu0 %v670
    %708 = vmatpush.bf16.msra.mxu0 %v669
    %709 = vmatmul.bf16.gmra.mxu0 %v678
    %v710 = vpop.f32.mrf.mxu0
    %v711 = vadd.f32 0.0, %v710
    %v712 = vpop.f32.mrf.mxu0
    %v713 = vadd.f32 0.0, %v712
    %714 = vmatmul.bf16.gmra.mxu0 %v681
    %v715 = vpop.f32.mrf.mxu0
    %v716 = vadd.f32 0.0, %v715
    %v717 = vpop.f32.mrf.mxu0
    %v718 = vadd.f32 0.0, %v717
    %719 = vmatmul.bf16.gmra.mxu0 %v684
    %v720 = vpop.f32.mrf.mxu0
    %v721 = vadd.f32 0.0, %v720
    %v722 = vpop.f32.mrf.mxu0
    %v723 = vadd.f32 0.0, %v722
    %724 = vmatmul.bf16.gmra.mxu0 %v687
    %v725 = vpop.f32.mrf.mxu0
    %v726 = vadd.f32 0.0, %v725
    %v727 = vpop.f32.mrf.mxu0
    %v728 = vadd.f32 0.0, %v727
    %729 = vmatmul.bf16.gmra.mxu0 %v690
    %v730 = vpop.f32.mrf.mxu0
    %v731 = vadd.f32 0.0, %v730
    %v732 = vpop.f32.mrf.mxu0
    %v733 = vadd.f32 0.0, %v732
    %734 = vmatmul.bf16.gmra.mxu0 %v693
    %v735 = vpop.f32.mrf.mxu0
    %v736 = vadd.f32 0.0, %v735
    %v737 = vpop.f32.mrf.mxu0
    %v738 = vadd.f32 0.0, %v737
    %739 = vmatmul.bf16.gmra.mxu0 %v696
    %v740 = vpop.f32.mrf.mxu0
    %v741 = vadd.f32 0.0, %v740
    %v742 = vpop.f32.mrf.mxu0
    %v743 = vadd.f32 0.0, %v742
    %744 = vmatmul.bf16.gmra.mxu0 %v699
    %v745 = vpop.f32.mrf.mxu0
    %v746 = vadd.f32 0.0, %v745
    %v747 = vpop.f32.mrf.mxu0
    %v748 = vadd.f32 0.0, %v747
    %749 = vdwg.mxu0
    %v750 = vadd.f32 %v69, %v711
    %v751 = vadd.f32 %v70, %v713
    %v752 = vadd.f32 %v71, %v716
    %v753 = vadd.f32 %v72, %v718
    %v754 = vadd.f32 %v73, %v721
    %v755 = vadd.f32 %v74, %v723
    %v756 = vadd.f32 %v75, %v726
    %v757 = vadd.f32 %v76, %v728
    %v758 = vadd.f32 %v77, %v731
    %v759 = vadd.f32 %v78, %v733
    %v760 = vadd.f32 %v79, %v736
    %v761 = vadd.f32 %v80, %v738
    %v762 = vadd.f32 %v81, %v741
    %v763 = vadd.f32 %v82, %v743
    %v764 = vadd.f32 %v83, %v746
    %v765 = vadd.f32 %v84, %v748
    %v766 = vld [vmem:[%s6] sm:$0x1]
    %v767 = vperm.slane %v766, 0
    %v768 = vadd.f32 %v750, %v767
    %v769 = vadd.f32 %v751, %v767
    %v770 = vadd.f32 %v752, %v767
    %v771 = vadd.f32 %v753, %v767
    %v772 = vadd.f32 %v754, %v767
    %v773 = vadd.f32 %v755, %v767
    %v774 = vadd.f32 %v756, %v767
    %v775 = vadd.f32 %v757, %v767
    %v776 = vadd.f32 %v758, %v767
    %v777 = vadd.f32 %v759, %v767
    %v778 = vadd.f32 %v760, %v767
    %v779 = vadd.f32 %v761, %v767
    %v780 = vadd.f32 %v762, %v767
    %v781 = vadd.f32 %v763, %v767
    %v782 = vadd.f32 %v764, %v767
    %v783 = vadd.f32 %v765, %v767
    %v784 = vsel %vm85, %v768, 0.0
    %785 = vadd.xlane.f32.xlu0 %v784
    %v786 = vpop.xlane.xlu0 %785
    %v787 = vsel %vm85, %v769, 0.0
    %788 = vadd.xlane.f32.xlu0 %v787
    %v789 = vpop.xlane.xlu0 %788
    %v790 = vsel %vm85, %v770, 0.0
    %791 = vadd.xlane.f32.xlu0 %v790
    %v792 = vpop.xlane.xlu0 %791
    %v793 = vsel %vm85, %v771, 0.0
    %794 = vadd.xlane.f32.xlu0 %v793
    %v795 = vpop.xlane.xlu0 %794
    %v796 = vsel %vm85, %v772, 0.0
    %797 = vadd.xlane.f32.xlu0 %v796
    %v798 = vpop.xlane.xlu0 %797
    %v799 = vsel %vm85, %v773, 0.0
    %800 = vadd.xlane.f32.xlu0 %v799
    %v801 = vpop.xlane.xlu0 %800
    %v802 = vsel %vm85, %v774, 0.0
    %803 = vadd.xlane.f32.xlu0 %v802
    %v804 = vpop.xlane.xlu0 %803
    %v805 = vsel %vm85, %v775, 0.0
    %806 = vadd.xlane.f32.xlu0 %v805
    %v807 = vpop.xlane.xlu0 %806
    %v808 = vsel %vm85, %v776, 0.0
    %809 = vadd.xlane.f32.xlu0 %v808
    %v810 = vpop.xlane.xlu0 %809
    %v811 = vsel %vm85, %v777, 0.0
    %812 = vadd.xlane.f32.xlu0 %v811
    %v813 = vpop.xlane.xlu0 %812
    %v814 = vsel %vm85, %v778, 0.0
    %815 = vadd.xlane.f32.xlu0 %v814
    %v816 = vpop.xlane.xlu0 %815
    %v817 = vsel %vm85, %v779, 0.0
    %818 = vadd.xlane.f32.xlu0 %v817
    %v819 = vpop.xlane.xlu0 %818
    %v820 = vsel %vm85, %v780, 0.0
    %821 = vadd.xlane.f32.xlu0 %v820
    %v822 = vpop.xlane.xlu0 %821
    %v823 = vsel %vm85, %v781, 0.0
    %824 = vadd.xlane.f32.xlu0 %v823
    %v825 = vpop.xlane.xlu0 %824
    %v826 = vsel %vm85, %v782, 0.0
    %827 = vadd.xlane.f32.xlu0 %v826
    %v828 = vpop.xlane.xlu0 %827
    %v829 = vsel %vm85, %v783, 0.0
    %830 = vadd.xlane.f32.xlu0 %v829
    %v831 = vpop.xlane.xlu0 %830
    %v832 = vmul.f32 %v768, %v768
    %v833 = vmul.f32 %v769, %v769
    %v834 = vmul.f32 %v770, %v770
    %v835 = vmul.f32 %v771, %v771
    %v836 = vmul.f32 %v772, %v772
    %v837 = vmul.f32 %v773, %v773
    %v838 = vmul.f32 %v774, %v774
    %v839 = vmul.f32 %v775, %v775
    %v840 = vmul.f32 %v776, %v776
    %v841 = vmul.f32 %v777, %v777
    %v842 = vmul.f32 %v778, %v778
    %v843 = vmul.f32 %v779, %v779
    %v844 = vmul.f32 %v780, %v780
    %v845 = vmul.f32 %v781, %v781
    %v846 = vmul.f32 %v782, %v782
    %v847 = vmul.f32 %v783, %v783
    %v848 = vsel %vm85, %v832, 0.0
    %849 = vadd.xlane.f32.xlu0 %v848
    %v850 = vpop.xlane.xlu0 %849
    %v851 = vsel %vm85, %v833, 0.0
    %852 = vadd.xlane.f32.xlu0 %v851
    %v853 = vpop.xlane.xlu0 %852
    %v854 = vsel %vm85, %v834, 0.0
    %855 = vadd.xlane.f32.xlu0 %v854
    %v856 = vpop.xlane.xlu0 %855
    %v857 = vsel %vm85, %v835, 0.0
    %858 = vadd.xlane.f32.xlu0 %v857
    %v859 = vpop.xlane.xlu0 %858
    %v860 = vsel %vm85, %v836, 0.0
    %861 = vadd.xlane.f32.xlu0 %v860
    %v862 = vpop.xlane.xlu0 %861
    %v863 = vsel %vm85, %v837, 0.0
    %864 = vadd.xlane.f32.xlu0 %v863
    %v865 = vpop.xlane.xlu0 %864
    %v866 = vsel %vm85, %v838, 0.0
    %867 = vadd.xlane.f32.xlu0 %v866
    %v868 = vpop.xlane.xlu0 %867
    %v869 = vsel %vm85, %v839, 0.0
    %870 = vadd.xlane.f32.xlu0 %v869
    %v871 = vpop.xlane.xlu0 %870
    %v872 = vsel %vm85, %v840, 0.0
    %873 = vadd.xlane.f32.xlu0 %v872
    %v874 = vpop.xlane.xlu0 %873
    %v875 = vsel %vm85, %v841, 0.0
    %876 = vadd.xlane.f32.xlu0 %v875
    %v877 = vpop.xlane.xlu0 %876
    %v878 = vsel %vm85, %v842, 0.0
    %879 = vadd.xlane.f32.xlu0 %v878
    %v880 = vpop.xlane.xlu0 %879
    %v881 = vsel %vm85, %v843, 0.0
    %882 = vadd.xlane.f32.xlu0 %v881
    %v883 = vpop.xlane.xlu0 %882
    %v884 = vsel %vm85, %v844, 0.0
    %885 = vadd.xlane.f32.xlu0 %v884
    %v886 = vpop.xlane.xlu0 %885
    %v887 = vsel %vm85, %v845, 0.0
    %888 = vadd.xlane.f32.xlu0 %v887
    %v889 = vpop.xlane.xlu0 %888
    %v890 = vsel %vm85, %v846, 0.0
    %891 = vadd.xlane.f32.xlu0 %v890
    %v892 = vpop.xlane.xlu0 %891
    %v893 = vsel %vm85, %v847, 0.0
    %894 = vadd.xlane.f32.xlu0 %v893
    %v895 = vpop.xlane.xlu0 %894
    %v896 = vmul.f32 %v786, 0.015625
    %v897 = vmul.f32 %v789, 0.015625
    %v898 = vmul.f32 %v792, 0.015625
    %v899 = vmul.f32 %v795, 0.015625
    %v900 = vmul.f32 %v798, 0.015625
    %v901 = vmul.f32 %v801, 0.015625
    %v902 = vmul.f32 %v804, 0.015625
    %v903 = vmul.f32 %v807, 0.015625
    %v904 = vmul.f32 %v810, 0.015625
    %v905 = vmul.f32 %v813, 0.015625
    %v906 = vmul.f32 %v816, 0.015625
    %v907 = vmul.f32 %v819, 0.015625
    %v908 = vmul.f32 %v822, 0.015625
    %v909 = vmul.f32 %v825, 0.015625
    %v910 = vmul.f32 %v828, 0.015625
    %v911 = vmul.f32 %v831, 0.015625
    %v912 = vmul.f32 %v850, 0.015625
    %v913 = vmul.f32 %v853, 0.015625
    %v914 = vmul.f32 %v856, 0.015625
    %v915 = vmul.f32 %v859, 0.015625
    %v916 = vmul.f32 %v862, 0.015625
    %v917 = vmul.f32 %v865, 0.015625
    %v918 = vmul.f32 %v868, 0.015625
    %v919 = vmul.f32 %v871, 0.015625
    %v920 = vmul.f32 %v874, 0.015625
    %v921 = vmul.f32 %v877, 0.015625
    %v922 = vmul.f32 %v880, 0.015625
    %v923 = vmul.f32 %v883, 0.015625
    %v924 = vmul.f32 %v886, 0.015625
    %v925 = vmul.f32 %v889, 0.015625
    %v926 = vmul.f32 %v892, 0.015625
    %v927 = vmul.f32 %v895, 0.015625
    %v928 = vmul.f32 %v896, %v896
    %v929 = vmul.f32 %v897, %v897
    %v930 = vmul.f32 %v898, %v898
    %v931 = vmul.f32 %v899, %v899
    %v932 = vmul.f32 %v900, %v900
    %v933 = vmul.f32 %v901, %v901
    %v934 = vmul.f32 %v902, %v902
    %v935 = vmul.f32 %v903, %v903
    %v936 = vmul.f32 %v904, %v904
    %v937 = vmul.f32 %v905, %v905
    %v938 = vmul.f32 %v906, %v906
    %v939 = vmul.f32 %v907, %v907
    %v940 = vmul.f32 %v908, %v908
    %v941 = vmul.f32 %v909, %v909
    %v942 = vmul.f32 %v910, %v910
    %v943 = vmul.f32 %v911, %v911
    %v944 = vsub.f32 %v912, %v928
    %v945 = vsub.f32 %v913, %v929
    %v946 = vsub.f32 %v914, %v930
    %v947 = vsub.f32 %v915, %v931
    %v948 = vsub.f32 %v916, %v932
    %v949 = vsub.f32 %v917, %v933
    %v950 = vsub.f32 %v918, %v934
    %v951 = vsub.f32 %v919, %v935
    %v952 = vsub.f32 %v920, %v936
    %v953 = vsub.f32 %v921, %v937
    %v954 = vsub.f32 %v922, %v938
    %v955 = vsub.f32 %v923, %v939
    %v956 = vsub.f32 %v924, %v940
    %v957 = vsub.f32 %v925, %v941
    %v958 = vsub.f32 %v926, %v942
    %v959 = vsub.f32 %v927, %v943
    %v960 = vsub.f32 %v768, %v896
    %v961 = vsub.f32 %v769, %v897
    %v962 = vsub.f32 %v770, %v898
    %v963 = vsub.f32 %v771, %v899
    %v964 = vsub.f32 %v772, %v900
    %v965 = vsub.f32 %v773, %v901
    %v966 = vsub.f32 %v774, %v902
    %v967 = vsub.f32 %v775, %v903
    %v968 = vsub.f32 %v776, %v904
    %v969 = vsub.f32 %v777, %v905
    %v970 = vsub.f32 %v778, %v906
    %v971 = vsub.f32 %v779, %v907
    %v972 = vsub.f32 %v780, %v908
    %v973 = vsub.f32 %v781, %v909
    %v974 = vsub.f32 %v782, %v910
    %v975 = vsub.f32 %v783, %v911
    %v976 = vadd.f32 %v944, 1e-05
    %v977 = vadd.f32 %v945, 1e-05
    %v978 = vadd.f32 %v946, 1e-05
    %v979 = vadd.f32 %v947, 1e-05
    %v980 = vadd.f32 %v948, 1e-05
    %v981 = vadd.f32 %v949, 1e-05
    %v982 = vadd.f32 %v950, 1e-05
    %v983 = vadd.f32 %v951, 1e-05
    %v984 = vadd.f32 %v952, 1e-05
    %v985 = vadd.f32 %v953, 1e-05
    %v986 = vadd.f32 %v954, 1e-05
    %v987 = vadd.f32 %v955, 1e-05
    %v988 = vadd.f32 %v956, 1e-05
    %v989 = vadd.f32 %v957, 1e-05
    %v990 = vadd.f32 %v958, 1e-05
    %v991 = vadd.f32 %v959, 1e-05
    %v992 = vrsqrt.pop %v976
    %v993 = vmul.f32 %v992, %v976
    %v994 = vmul.f32 %v993, %v992
    %v995 = vmul.f32 0.5, %v994
    %v996 = vsub.f32 1.5, %v995
    %v997 = vmul.f32 %v992, %v996
    %vm998 = vweird.f32 %v976
    %vm999 = vweird.f32 %v992
    %vm1000 = vmor %vm998, %vm999
    %v1001 = vsel %vm1000, %v992, %v997
    %v1002 = vrsqrt.pop %v977
    %v1003 = vmul.f32 %v1002, %v977
    %v1004 = vmul.f32 %v1003, %v1002
    %v1005 = vmul.f32 0.5, %v1004
    %v1006 = vsub.f32 1.5, %v1005
    %v1007 = vmul.f32 %v1002, %v1006
    %vm1008 = vweird.f32 %v977
    %vm1009 = vweird.f32 %v1002
    %vm1010 = vmor %vm1008, %vm1009
    %v1011 = vsel %vm1010, %v1002, %v1007
    %v1012 = vrsqrt.pop %v978
    %v1013 = vmul.f32 %v1012, %v978
    %v1014 = vmul.f32 %v1013, %v1012
    %v1015 = vmul.f32 0.5, %v1014
    %v1016 = vsub.f32 1.5, %v1015
    %v1017 = vmul.f32 %v1012, %v1016
    %vm1018 = vweird.f32 %v978
    %vm1019 = vweird.f32 %v1012
    %vm1020 = vmor %vm1018, %vm1019
    %v1021 = vsel %vm1020, %v1012, %v1017
    %v1022 = vrsqrt.pop %v979
    %v1023 = vmul.f32 %v1022, %v979
    %v1024 = vmul.f32 %v1023, %v1022
    %v1025 = vmul.f32 0.5, %v1024
    %v1026 = vsub.f32 1.5, %v1025
    %v1027 = vmul.f32 %v1022, %v1026
    %vm1028 = vweird.f32 %v979
    %vm1029 = vweird.f32 %v1022
    %vm1030 = vmor %vm1028, %vm1029
    %v1031 = vsel %vm1030, %v1022, %v1027
    %v1032 = vrsqrt.pop %v980
    %v1033 = vmul.f32 %v1032, %v980
    %v1034 = vmul.f32 %v1033, %v1032
    %v1035 = vmul.f32 0.5, %v1034
    %v1036 = vsub.f32 1.5, %v1035
    %v1037 = vmul.f32 %v1032, %v1036
    %vm1038 = vweird.f32 %v980
    %vm1039 = vweird.f32 %v1032
    %vm1040 = vmor %vm1038, %vm1039
    %v1041 = vsel %vm1040, %v1032, %v1037
    %v1042 = vrsqrt.pop %v981
    %v1043 = vmul.f32 %v1042, %v981
    %v1044 = vmul.f32 %v1043, %v1042
    %v1045 = vmul.f32 0.5, %v1044
    %v1046 = vsub.f32 1.5, %v1045
    %v1047 = vmul.f32 %v1042, %v1046
    %vm1048 = vweird.f32 %v981
    %vm1049 = vweird.f32 %v1042
    %vm1050 = vmor %vm1048, %vm1049
    %v1051 = vsel %vm1050, %v1042, %v1047
    %v1052 = vrsqrt.pop %v982
    %v1053 = vmul.f32 %v1052, %v982
    %v1054 = vmul.f32 %v1053, %v1052
    %v1055 = vmul.f32 0.5, %v1054
    %v1056 = vsub.f32 1.5, %v1055
    %v1057 = vmul.f32 %v1052, %v1056
    %vm1058 = vweird.f32 %v982
    %vm1059 = vweird.f32 %v1052
    %vm1060 = vmor %vm1058, %vm1059
    %v1061 = vsel %vm1060, %v1052, %v1057
    %v1062 = vrsqrt.pop %v983
    %v1063 = vmul.f32 %v1062, %v983
    %v1064 = vmul.f32 %v1063, %v1062
    %v1065 = vmul.f32 0.5, %v1064
    %v1066 = vsub.f32 1.5, %v1065
    %v1067 = vmul.f32 %v1062, %v1066
    %vm1068 = vweird.f32 %v983
    %vm1069 = vweird.f32 %v1062
    %vm1070 = vmor %vm1068, %vm1069
    %v1071 = vsel %vm1070, %v1062, %v1067
    %v1072 = vrsqrt.pop %v984
    %v1073 = vmul.f32 %v1072, %v984
    %v1074 = vmul.f32 %v1073, %v1072
    %v1075 = vmul.f32 0.5, %v1074
    %v1076 = vsub.f32 1.5, %v1075
    %v1077 = vmul.f32 %v1072, %v1076
    %vm1078 = vweird.f32 %v984
    %vm1079 = vweird.f32 %v1072
    %vm1080 = vmor %vm1078, %vm1079
    %v1081 = vsel %vm1080, %v1072, %v1077
    %v1082 = vrsqrt.pop %v985
    %v1083 = vmul.f32 %v1082, %v985
    %v1084 = vmul.f32 %v1083, %v1082
    %v1085 = vmul.f32 0.5, %v1084
    %v1086 = vsub.f32 1.5, %v1085
    %v1087 = vmul.f32 %v1082, %v1086
    %vm1088 = vweird.f32 %v985
    %vm1089 = vweird.f32 %v1082
    %vm1090 = vmor %vm1088, %vm1089
    %v1091 = vsel %vm1090, %v1082, %v1087
    %v1092 = vrsqrt.pop %v986
    %v1093 = vmul.f32 %v1092, %v986
    %v1094 = vmul.f32 %v1093, %v1092
    %v1095 = vmul.f32 0.5, %v1094
    %v1096 = vsub.f32 1.5, %v1095
    %v1097 = vmul.f32 %v1092, %v1096
    %vm1098 = vweird.f32 %v986
    %vm1099 = vweird.f32 %v1092
    %vm1100 = vmor %vm1098, %vm1099
    %v1101 = vsel %vm1100, %v1092, %v1097
    %v1102 = vrsqrt.pop %v987
    %v1103 = vmul.f32 %v1102, %v987
    %v1104 = vmul.f32 %v1103, %v1102
    %v1105 = vmul.f32 0.5, %v1104
    %v1106 = vsub.f32 1.5, %v1105
    %v1107 = vmul.f32 %v1102, %v1106
    %vm1108 = vweird.f32 %v987
    %vm1109 = vweird.f32 %v1102
    %vm1110 = vmor %vm1108, %vm1109
    %v1111 = vsel %vm1110, %v1102, %v1107
    %v1112 = vrsqrt.pop %v988
    %v1113 = vmul.f32 %v1112, %v988
    %v1114 = vmul.f32 %v1113, %v1112
    %v1115 = vmul.f32 0.5, %v1114
    %v1116 = vsub.f32 1.5, %v1115
    %v1117 = vmul.f32 %v1112, %v1116
    %vm1118 = vweird.f32 %v988
    %vm1119 = vweird.f32 %v1112
    %vm1120 = vmor %vm1118, %vm1119
    %v1121 = vsel %vm1120, %v1112, %v1117
    %v1122 = vrsqrt.pop %v989
    %v1123 = vmul.f32 %v1122, %v989
    %v1124 = vmul.f32 %v1123, %v1122
    %v1125 = vmul.f32 0.5, %v1124
    %v1126 = vsub.f32 1.5, %v1125
    %v1127 = vmul.f32 %v1122, %v1126
    %vm1128 = vweird.f32 %v989
    %vm1129 = vweird.f32 %v1122
    %vm1130 = vmor %vm1128, %vm1129
    %v1131 = vsel %vm1130, %v1122, %v1127
    %v1132 = vrsqrt.pop %v990
    %v1133 = vmul.f32 %v1132, %v990
    %v1134 = vmul.f32 %v1133, %v1132
    %v1135 = vmul.f32 0.5, %v1134
    %v1136 = vsub.f32 1.5, %v1135
    %v1137 = vmul.f32 %v1132, %v1136
    %vm1138 = vweird.f32 %v990
    %vm1139 = vweird.f32 %v1132
    %vm1140 = vmor %vm1138, %vm1139
    %v1141 = vsel %vm1140, %v1132, %v1137
    %v1142 = vrsqrt.pop %v991
    %v1143 = vmul.f32 %v1142, %v991
    %v1144 = vmul.f32 %v1143, %v1142
    %v1145 = vmul.f32 0.5, %v1144
    %v1146 = vsub.f32 1.5, %v1145
    %v1147 = vmul.f32 %v1142, %v1146
    %vm1148 = vweird.f32 %v991
    %vm1149 = vweird.f32 %v1142
    %vm1150 = vmor %vm1148, %vm1149
    %v1151 = vsel %vm1150, %v1142, %v1147
    %v1152 = vmul.f32 %v960, %v1001
    %v1153 = vmul.f32 %v961, %v1011
    %v1154 = vmul.f32 %v962, %v1021
    %v1155 = vmul.f32 %v963, %v1031
    %v1156 = vmul.f32 %v964, %v1041
    %v1157 = vmul.f32 %v965, %v1051
    %v1158 = vmul.f32 %v966, %v1061
    %v1159 = vmul.f32 %v967, %v1071
    %v1160 = vmul.f32 %v968, %v1081
    %v1161 = vmul.f32 %v969, %v1091
    %v1162 = vmul.f32 %v970, %v1101
    %v1163 = vmul.f32 %v971, %v1111
    %v1164 = vmul.f32 %v972, %v1121
    %v1165 = vmul.f32 %v973, %v1131
    %v1166 = vmul.f32 %v974, %v1141
    %v1167 = vmul.f32 %v975, %v1151
    %v1168 = vld [vmem:[%s1 + $0x1] sm:$0x1]
    %v1169 = vperm.slane %v1168, 0
    %v1170 = vmul.f32 %v1152, %v1169
    %v1171 = vmul.f32 %v1153, %v1169
    %v1172 = vmul.f32 %v1154, %v1169
    %v1173 = vmul.f32 %v1155, %v1169
    %v1174 = vmul.f32 %v1156, %v1169
    %v1175 = vmul.f32 %v1157, %v1169
    %v1176 = vmul.f32 %v1158, %v1169
    %v1177 = vmul.f32 %v1159, %v1169
    %v1178 = vmul.f32 %v1160, %v1169
    %v1179 = vmul.f32 %v1161, %v1169
    %v1180 = vmul.f32 %v1162, %v1169
    %v1181 = vmul.f32 %v1163, %v1169
    %v1182 = vmul.f32 %v1164, %v1169
    %v1183 = vmul.f32 %v1165, %v1169
    %v1184 = vmul.f32 %v1166, %v1169
    %v1185 = vmul.f32 %v1167, %v1169
    %v1186 = vld [vmem:[%s2 + $0x1] sm:$0x1]
    %v1187 = vperm.slane %v1186, 0
    %v1188 = vadd.f32 %v1170, %v1187
    %v1189 = vadd.f32 %v1171, %v1187
    %v1190 = vadd.f32 %v1172, %v1187
    %v1191 = vadd.f32 %v1173, %v1187
    %v1192 = vadd.f32 %v1174, %v1187
    %v1193 = vadd.f32 %v1175, %v1187
    %v1194 = vadd.f32 %v1176, %v1187
    %v1195 = vadd.f32 %v1177, %v1187
    %v1196 = vadd.f32 %v1178, %v1187
    %v1197 = vadd.f32 %v1179, %v1187
    %v1198 = vadd.f32 %v1180, %v1187
    %v1199 = vadd.f32 %v1181, %v1187
    %v1200 = vadd.f32 %v1182, %v1187
    %v1201 = vadd.f32 %v1183, %v1187
    %v1202 = vadd.f32 %v1184, %v1187
    %v1203 = vadd.f32 %v1185, %v1187
    %v1204 = vpack.c.bf16 %v1189, %v1188
    %v1205 = vpack.c.bf16 %v1191, %v1190
    %v1206 = vpack.c.bf16 %v1193, %v1192
    %v1207 = vpack.c.bf16 %v1195, %v1194
    %v1208 = vpack.c.bf16 %v1197, %v1196
    %v1209 = vpack.c.bf16 %v1199, %v1198
    %v1210 = vpack.c.bf16 %v1201, %v1200
    %v1211 = vpack.c.bf16 %v1203, %v1202
    %s1212 = scalar_lea.vmem %s3, 32
    %v1213 = vld [vmem:[%s1212] sm:$0xf]
    %v1214 = vld [vmem:[%s1212 + $0x4] sm:$0xf]
    %v1215 = vld [vmem:[%s1212 + $0x8] sm:$0xf]
    %v1216 = vld [vmem:[%s1212 + $0xc] sm:$0xf]
    %v1217 = vld [vmem:[%s1212 + $0x10] sm:$0xf]
    %v1218 = vld [vmem:[%s1212 + $0x14] sm:$0xf]
    %v1219 = vld [vmem:[%s1212 + $0x18] sm:$0xf]
    %v1220 = vld [vmem:[%s1212 + $0x1c] sm:$0xf]
    %v1221 = vld [vmem:[%s4 + $0x1] sm:$0x1]
    %v1222 = vperm.slane %v1221, 0
    %v1231 = vunpack.c.l.b16 %v1213
    %v1232 = vunpack.c.l.b16 %v1214
    %v1233 = vunpack.c.l.b16 %v1215
    %v1234 = vunpack.c.l.b16 %v1216
    %v1235 = vunpack.c.l.b16 %v1217
    %v1236 = vunpack.c.l.b16 %v1218
    %v1237 = vunpack.c.l.b16 %v1219
    %v1238 = vunpack.c.l.b16 %v1220
    %v1239 = vpack.c.b16 %v1232, %v1231
    %v1240 = vpack.c.b16 %v1234, %v1233
    %v1241 = vpack.c.b16 %v1236, %v1235
    %v1242 = vpack.c.b16 %v1238, %v1237
    %v1248 = vsel %vm85, %v1204, 0
    %v1251 = vsel %vm85, %v1205, 0
    %v1254 = vsel %vm85, %v1206, 0
    %v1257 = vsel %vm85, %v1207, 0
    %v1260 = vsel %vm85, %v1208, 0
    %v1263 = vsel %vm85, %v1209, 0
    %v1266 = vsel %vm85, %v1210, 0
    %v1269 = vsel %vm85, %v1211, 0
    %1271 = vmatpush.bf16.msra.mxu0 0
    %1272 = vmatpush.bf16.msra.mxu0 0
    %1273 = vmatpush.bf16.msra.mxu0 0
    %1274 = vmatpush.bf16.msra.mxu0 0
    %1275 = vmatpush.bf16.msra.mxu0 %v1242
    %1276 = vmatpush.bf16.msra.mxu0 %v1241
    %1277 = vmatpush.bf16.msra.mxu0 %v1240
    %1278 = vmatpush.bf16.msra.mxu0 %v1239
    %1279 = vmatmul.bf16.gmra.mxu0 %v1248
    %v1280 = vpop.f32.mrf.mxu0
    %v1281 = vadd.f32 %v1222, %v1280
    %v1282 = vpop.f32.mrf.mxu0
    %v1283 = vadd.f32 %v1222, %v1282
    %1284 = vmatmul.bf16.gmra.mxu0 %v1251
    %v1285 = vpop.f32.mrf.mxu0
    %v1286 = vadd.f32 %v1222, %v1285
    %v1287 = vpop.f32.mrf.mxu0
    %v1288 = vadd.f32 %v1222, %v1287
    %1289 = vmatmul.bf16.gmra.mxu0 %v1254
    %v1290 = vpop.f32.mrf.mxu0
    %v1291 = vadd.f32 %v1222, %v1290
    %v1292 = vpop.f32.mrf.mxu0
    %v1293 = vadd.f32 %v1222, %v1292
    %1294 = vmatmul.bf16.gmra.mxu0 %v1257
    %v1295 = vpop.f32.mrf.mxu0
    %v1296 = vadd.f32 %v1222, %v1295
    %v1297 = vpop.f32.mrf.mxu0
    %v1298 = vadd.f32 %v1222, %v1297
    %1299 = vmatmul.bf16.gmra.mxu0 %v1260
    %v1300 = vpop.f32.mrf.mxu0
    %v1301 = vadd.f32 %v1222, %v1300
    %v1302 = vpop.f32.mrf.mxu0
    %v1303 = vadd.f32 %v1222, %v1302
    %1304 = vmatmul.bf16.gmra.mxu0 %v1263
    %v1305 = vpop.f32.mrf.mxu0
    %v1306 = vadd.f32 %v1222, %v1305
    %v1307 = vpop.f32.mrf.mxu0
    %v1308 = vadd.f32 %v1222, %v1307
    %1309 = vmatmul.bf16.gmra.mxu0 %v1266
    %v1310 = vpop.f32.mrf.mxu0
    %v1311 = vadd.f32 %v1222, %v1310
    %v1312 = vpop.f32.mrf.mxu0
    %v1313 = vadd.f32 %v1222, %v1312
    %1314 = vmatmul.bf16.gmra.mxu0 %v1269
    %v1315 = vpop.f32.mrf.mxu0
    %v1316 = vadd.f32 %v1222, %v1315
    %v1317 = vpop.f32.mrf.mxu0
    %v1318 = vadd.f32 %v1222, %v1317
    %1319 = vdwg.mxu0
    %v1320 = vmax.f32 %v1281, 0.0
    %v1321 = vmax.f32 %v1283, 0.0
    %v1322 = vmax.f32 %v1286, 0.0
    %v1323 = vmax.f32 %v1288, 0.0
    %v1324 = vmax.f32 %v1291, 0.0
    %v1325 = vmax.f32 %v1293, 0.0
    %v1326 = vmax.f32 %v1296, 0.0
    %v1327 = vmax.f32 %v1298, 0.0
    %v1328 = vmax.f32 %v1301, 0.0
    %v1329 = vmax.f32 %v1303, 0.0
    %v1330 = vmax.f32 %v1306, 0.0
    %v1331 = vmax.f32 %v1308, 0.0
    %v1332 = vmax.f32 %v1311, 0.0
    %v1333 = vmax.f32 %v1313, 0.0
    %v1334 = vmax.f32 %v1316, 0.0
    %v1335 = vmax.f32 %v1318, 0.0
    %v1336 = vpack.c.bf16 %v1321, %v1320
    %v1337 = vpack.c.bf16 %v1323, %v1322
    %v1338 = vpack.c.bf16 %v1325, %v1324
    %v1339 = vpack.c.bf16 %v1327, %v1326
    %v1340 = vpack.c.bf16 %v1329, %v1328
    %v1341 = vpack.c.bf16 %v1331, %v1330
    %v1342 = vpack.c.bf16 %v1333, %v1332
    %v1343 = vpack.c.bf16 %v1335, %v1334
    %s1344 = scalar_lea.vmem [#allocation5], 32
    %v1345 = vld [vmem:[%s1344] sm:$0xf]
    %v1346 = vld [vmem:[%s1344 + $0x4] sm:$0xf]
    %v1347 = vld [vmem:[%s1344 + $0x8] sm:$0xf]
    %v1348 = vld [vmem:[%s1344 + $0xc] sm:$0xf]
    %v1349 = vld [vmem:[%s1344 + $0x10] sm:$0xf]
    %v1350 = vld [vmem:[%s1344 + $0x14] sm:$0xf]
    %v1351 = vld [vmem:[%s1344 + $0x18] sm:$0xf]
    %v1352 = vld [vmem:[%s1344 + $0x1c] sm:$0xf]
    %v1361 = vunpack.c.l.b16 %v1345
    %v1362 = vunpack.c.l.b16 %v1346
    %v1363 = vunpack.c.l.b16 %v1347
    %v1364 = vunpack.c.l.b16 %v1348
    %v1365 = vunpack.c.l.b16 %v1349
    %v1366 = vunpack.c.l.b16 %v1350
    %v1367 = vunpack.c.l.b16 %v1351
    %v1368 = vunpack.c.l.b16 %v1352
    %v1369 = vpack.c.b16 %v1362, %v1361
    %v1370 = vpack.c.b16 %v1364, %v1363
    %v1371 = vpack.c.b16 %v1366, %v1365
    %v1372 = vpack.c.b16 %v1368, %v1367
    %v1378 = vsel %vm85, %v1336, 0
    %v1381 = vsel %vm85, %v1337, 0
    %v1384 = vsel %vm85, %v1338, 0
    %v1387 = vsel %vm85, %v1339, 0
    %v1390 = vsel %vm85, %v1340, 0
    %v1393 = vsel %vm85, %v1341, 0
    %v1396 = vsel %vm85, %v1342, 0
    %v1399 = vsel %vm85, %v1343, 0
    %1401 = vmatpush.bf16.msra.mxu0 0
    %1402 = vmatpush.bf16.msra.mxu0 0
    %1403 = vmatpush.bf16.msra.mxu0 0
    %1404 = vmatpush.bf16.msra.mxu0 0
    %1405 = vmatpush.bf16.msra.mxu0 %v1372
    %1406 = vmatpush.bf16.msra.mxu0 %v1371
    %1407 = vmatpush.bf16.msra.mxu0 %v1370
    %1408 = vmatpush.bf16.msra.mxu0 %v1369
    %1409 = vmatmul.bf16.gmra.mxu0 %v1378
    %v1410 = vpop.f32.mrf.mxu0
    %v1411 = vadd.f32 0.0, %v1410
    %v1412 = vpop.f32.mrf.mxu0
    %v1413 = vadd.f32 0.0, %v1412
    %1414 = vmatmul.bf16.gmra.mxu0 %v1381
    %v1415 = vpop.f32.mrf.mxu0
    %v1416 = vadd.f32 0.0, %v1415
    %v1417 = vpop.f32.mrf.mxu0
    %v1418 = vadd.f32 0.0, %v1417
    %1419 = vmatmul.bf16.gmra.mxu0 %v1384
    %v1420 = vpop.f32.mrf.mxu0
    %v1421 = vadd.f32 0.0, %v1420
    %v1422 = vpop.f32.mrf.mxu0
    %v1423 = vadd.f32 0.0, %v1422
    %1424 = vmatmul.bf16.gmra.mxu0 %v1387
    %v1425 = vpop.f32.mrf.mxu0
    %v1426 = vadd.f32 0.0, %v1425
    %v1427 = vpop.f32.mrf.mxu0
    %v1428 = vadd.f32 0.0, %v1427
    %1429 = vmatmul.bf16.gmra.mxu0 %v1390
    %v1430 = vpop.f32.mrf.mxu0
    %v1431 = vadd.f32 0.0, %v1430
    %v1432 = vpop.f32.mrf.mxu0
    %v1433 = vadd.f32 0.0, %v1432
    %1434 = vmatmul.bf16.gmra.mxu0 %v1393
    %v1435 = vpop.f32.mrf.mxu0
    %v1436 = vadd.f32 0.0, %v1435
    %v1437 = vpop.f32.mrf.mxu0
    %v1438 = vadd.f32 0.0, %v1437
    %1439 = vmatmul.bf16.gmra.mxu0 %v1396
    %v1440 = vpop.f32.mrf.mxu0
    %v1441 = vadd.f32 0.0, %v1440
    %v1442 = vpop.f32.mrf.mxu0
    %v1443 = vadd.f32 0.0, %v1442
    %1444 = vmatmul.bf16.gmra.mxu0 %v1399
    %v1445 = vpop.f32.mrf.mxu0
    %v1446 = vadd.f32 0.0, %v1445
    %v1447 = vpop.f32.mrf.mxu0
    %v1448 = vadd.f32 0.0, %v1447
    %1449 = vdwg.mxu0
    %v1450 = vadd.f32 %v768, %v1411
    %v1451 = vadd.f32 %v769, %v1413
    %v1452 = vadd.f32 %v770, %v1416
    %v1453 = vadd.f32 %v771, %v1418
    %v1454 = vadd.f32 %v772, %v1421
    %v1455 = vadd.f32 %v773, %v1423
    %v1456 = vadd.f32 %v774, %v1426
    %v1457 = vadd.f32 %v775, %v1428
    %v1458 = vadd.f32 %v776, %v1431
    %v1459 = vadd.f32 %v777, %v1433
    %v1460 = vadd.f32 %v778, %v1436
    %v1461 = vadd.f32 %v779, %v1438
    %v1462 = vadd.f32 %v780, %v1441
    %v1463 = vadd.f32 %v781, %v1443
    %v1464 = vadd.f32 %v782, %v1446
    %v1465 = vadd.f32 %v783, %v1448
    %v1466 = vld [vmem:[%s6 + $0x1] sm:$0x1]
    %v1467 = vperm.slane %v1466, 0
    %v1468 = vadd.f32 %v1450, %v1467
    %v1469 = vadd.f32 %v1451, %v1467
    %v1470 = vadd.f32 %v1452, %v1467
    %v1471 = vadd.f32 %v1453, %v1467
    %v1472 = vadd.f32 %v1454, %v1467
    %v1473 = vadd.f32 %v1455, %v1467
    %v1474 = vadd.f32 %v1456, %v1467
    %v1475 = vadd.f32 %v1457, %v1467
    %v1476 = vadd.f32 %v1458, %v1467
    %v1477 = vadd.f32 %v1459, %v1467
    %v1478 = vadd.f32 %v1460, %v1467
    %v1479 = vadd.f32 %v1461, %v1467
    %v1480 = vadd.f32 %v1462, %v1467
    %v1481 = vadd.f32 %v1463, %v1467
    %v1482 = vadd.f32 %v1464, %v1467
    %v1483 = vadd.f32 %v1465, %v1467
    %v1484 = vpack.c.bf16 %v1469, %v1468
    %v1485 = vpack.c.bf16 %v1471, %v1470
    %v1486 = vpack.c.bf16 %v1473, %v1472
    %v1487 = vpack.c.bf16 %v1475, %v1474
    %v1488 = vpack.c.bf16 %v1477, %v1476
    %v1489 = vpack.c.bf16 %v1479, %v1478
    %v1490 = vpack.c.bf16 %v1481, %v1480
    %v1491 = vpack.c.bf16 %v1483, %v1482
    %v1492 = vld [vmem:[%s8] sm:$0xf]
    %v1493 = vld [vmem:[%s8 + $0x4] sm:$0xf]
    %v1494 = vld [vmem:[%s8 + $0x8] sm:$0xf]
    %v1495 = vld [vmem:[%s8 + $0xc] sm:$0xf]
    %v1496 = vld [vmem:[%s8 + $0x10] sm:$0xf]
    %v1497 = vld [vmem:[%s8 + $0x14] sm:$0xf]
    %v1498 = vld [vmem:[%s8 + $0x18] sm:$0xf]
    %v1499 = vld [vmem:[%s8 + $0x1c] sm:$0xf]
    %v1508 = vunpack.c.l.b16 %v1492
    %v1509 = vunpack.c.l.b16 %v1493
    %v1510 = vunpack.c.l.b16 %v1494
    %v1511 = vunpack.c.l.b16 %v1495
    %v1512 = vunpack.c.l.b16 %v1496
    %v1513 = vunpack.c.l.b16 %v1497
    %v1514 = vunpack.c.l.b16 %v1498
    %v1515 = vunpack.c.l.b16 %v1499
    %v1516 = vpack.c.b16 %v1509, %v1508
    %v1517 = vpack.c.b16 %v1511, %v1510
    %v1518 = vpack.c.b16 %v1513, %v1512
    %v1519 = vpack.c.b16 %v1515, %v1514
    %v1525 = vsel %vm85, %v1484, 0
    %v1528 = vsel %vm85, %v1485, 0
    %v1531 = vsel %vm85, %v1486, 0
    %v1534 = vsel %vm85, %v1487, 0
    %v1537 = vsel %vm85, %v1488, 0
    %v1540 = vsel %vm85, %v1489, 0
    %v1543 = vsel %vm85, %v1490, 0
    %v1546 = vsel %vm85, %v1491, 0
    %1548 = vmatpush.bf16.msra.mxu0 0
    %1549 = vmatpush.bf16.msra.mxu0 0
    %1550 = vmatpush.bf16.msra.mxu0 0
    %1551 = vmatpush.bf16.msra.mxu0 0
    %1552 = vmatpush.bf16.msra.mxu0 %v1519
    %1553 = vmatpush.bf16.msra.mxu0 %v1518
    %1554 = vmatpush.bf16.msra.mxu0 %v1517
    %1555 = vmatpush.bf16.msra.mxu0 %v1516
    %1556 = vmatmul.bf16.gmra.mxu0 %v1525
    %v1557 = vpop.f32.mrf.mxu0
    %v1558 = vadd.f32 0.0, %v1557
    %v1559 = vpop.f32.mrf.mxu0
    %v1560 = vadd.f32 0.0, %v1559
    %1561 = vmatmul.bf16.gmra.mxu0 %v1528
    %v1562 = vpop.f32.mrf.mxu0
    %v1563 = vadd.f32 0.0, %v1562
    %v1564 = vpop.f32.mrf.mxu0
    %v1565 = vadd.f32 0.0, %v1564
    %1566 = vmatmul.bf16.gmra.mxu0 %v1531
    %v1567 = vpop.f32.mrf.mxu0
    %v1568 = vadd.f32 0.0, %v1567
    %v1569 = vpop.f32.mrf.mxu0
    %v1570 = vadd.f32 0.0, %v1569
    %1571 = vmatmul.bf16.gmra.mxu0 %v1534
    %v1572 = vpop.f32.mrf.mxu0
    %v1573 = vadd.f32 0.0, %v1572
    %v1574 = vpop.f32.mrf.mxu0
    %v1575 = vadd.f32 0.0, %v1574
    %1576 = vmatmul.bf16.gmra.mxu0 %v1537
    %v1577 = vpop.f32.mrf.mxu0
    %v1578 = vadd.f32 0.0, %v1577
    %v1579 = vpop.f32.mrf.mxu0
    %v1580 = vadd.f32 0.0, %v1579
    %1581 = vmatmul.bf16.gmra.mxu0 %v1540
    %v1582 = vpop.f32.mrf.mxu0
    %v1583 = vadd.f32 0.0, %v1582
    %v1584 = vpop.f32.mrf.mxu0
    %v1585 = vadd.f32 0.0, %v1584
    %1586 = vmatmul.bf16.gmra.mxu0 %v1543
    %v1587 = vpop.f32.mrf.mxu0
    %v1588 = vadd.f32 0.0, %v1587
    %v1589 = vpop.f32.mrf.mxu0
    %v1590 = vadd.f32 0.0, %v1589
    %1591 = vmatmul.bf16.gmra.mxu0 %v1546
    %v1592 = vpop.f32.mrf.mxu0
    %v1593 = vadd.f32 0.0, %v1592
    %v1594 = vpop.f32.mrf.mxu0
    %v1595 = vadd.f32 0.0, %v1594
    %1596 = vdwg.mxu0
    %v1597 = vld [vmem:[%s9] sm:$0xf]
    %1598 = vxpose.xlu0.b32.start [1/16] %v1558, 128
    %1599 = vxpose.xlu0.b32.cont [2/16] %v1560, 128
    %1600 = vxpose.xlu0.b32.cont [3/16] %v1563, 128
    %1601 = vxpose.xlu0.b32.cont [4/16] %v1565, 128
    %1602 = vxpose.xlu0.b32.cont [5/16] %v1568, 128
    %1603 = vxpose.xlu0.b32.cont [6/16] %v1570, 128
    %1604 = vxpose.xlu0.b32.cont [7/16] %v1573, 128
    %1605 = vxpose.xlu0.b32.cont [8/16] %v1575, 128
    %1606 = vxpose.xlu0.b32.cont [9/16] 0.0, 128
    %1607 = vxpose.xlu0.b32.cont [10/16] 0.0, 128
    %1608 = vxpose.xlu0.b32.cont [11/16] 0.0, 128
    %1609 = vxpose.xlu0.b32.cont [12/16] 0.0, 128
    %1610 = vxpose.xlu0.b32.cont [13/16] 0.0, 128
    %1611 = vxpose.xlu0.b32.cont [14/16] 0.0, 128
    %1612 = vxpose.xlu0.b32.cont [15/16] 0.0, 128
    %1613 = vxpose.xlu0.b32.end [16/16] 0.0, 128
    %v1614 = vpop.trf.xlu0
    %v1615 = vpop.trf.xlu0
    %v1616 = vpop.trf.xlu0
    %v1617 = vpop.trf.xlu0
    %v1618 = vpop.trf.xlu0
    %v1619 = vpop.trf.xlu0
    %v1620 = vpop.trf.xlu0
    %v1621 = vpop.trf.xlu0
    %v1622 = vpop.trf.xlu0
    %v1623 = vpop.trf.xlu0
    %v1624 = vpop.trf.xlu0
    %v1625 = vpop.trf.xlu0
    %v1626 = vpop.trf.xlu0
    %v1627 = vpop.trf.xlu0
    %v1628 = vpop.trf.xlu0
    %v1629 = vpop.trf.xlu0
    %v1630 = vpack.c.bf16 %v1614, %v1614
    %v1631 = vld [vmem:[%s7] sm:$0xf]
    %v1632 = vld [vmem:[%s7 + $0x4] sm:$0xf]
    %v1633 = vld [vmem:[%s7 + $0x8] sm:$0xf]
    %v1634 = vld [vmem:[%s7 + $0xc] sm:$0xf]
    %v1635 = vld [vmem:[%s7 + $0x10] sm:$0xf]
    %v1636 = vld [vmem:[%s7 + $0x14] sm:$0xf]
    %v1637 = vld [vmem:[%s7 + $0x18] sm:$0xf]
    %v1638 = vld [vmem:[%s7 + $0x1c] sm:$0xf]
    %v1647 = vunpack.c.l.b16 %v1631
    %v1648 = vunpack.c.l.b16 %v1632
    %v1649 = vunpack.c.l.b16 %v1633
    %v1650 = vunpack.c.l.b16 %v1634
    %v1651 = vunpack.c.l.b16 %v1635
    %v1652 = vunpack.c.l.b16 %v1636
    %v1653 = vunpack.c.l.b16 %v1637
    %v1654 = vunpack.c.l.b16 %v1638
    %v1655 = vpack.c.b16 %v1648, %v1647
    %v1656 = vpack.c.b16 %v1650, %v1649
    %v1657 = vpack.c.b16 %v1652, %v1651
    %v1658 = vpack.c.b16 %v1654, %v1653
    %v1664 = vsel %vm85, %v1630, 0
    %1666 = vmatpush.bf16.msra.mxu0 0
    %1667 = vmatpush.bf16.msra.mxu0 0
    %1668 = vmatpush.bf16.msra.mxu0 0
    %1669 = vmatpush.bf16.msra.mxu0 0
    %1670 = vmatpush.bf16.msra.mxu0 %v1658
    %1671 = vmatpush.bf16.msra.mxu0 %v1657
    %1672 = vmatpush.bf16.msra.mxu0 %v1656
    %1673 = vmatpush.bf16.msra.mxu0 %v1655
    %1674 = vmatmul.bf16.gmra.mxu0 %v1664
    %v1675 = vpop.f32.mrf.mxu0
    %v1676 = vadd.f32 %v1597, %v1675
    %v1677 = vpop.f32.mrf.mxu0
    %1678 = vdwg.mxu0
    %v1679 = vmul.f32 %v1676, %v1676
    %vm1680 = vcmask 257024
    %v1681 = vsel %vm1680, %v1679, 0.0
    %1682 = vadd.xlane.f32.xlu0 %v1681
    %v1683 = vpop.xlane.xlu0 %1682
    %v1684 = vrot.slane %v1683, 4
    %v1685 = vadd.f32 %v1683, %v1684
    %v1686 = vrot.slane %v1685, 2
    %v1687 = vadd.f32 %v1685, %v1686
    %v1688 = vrot.slane %v1687, 1
    %v1689 = vadd.f32 %v1687, %v1688
    %s1690 = vtos %v1689
    %v1691 = vstv %s1690
    %v1692 = vrsqrt.pop %v1691
    %v1693 = vmul.f32 %v1692, %v1691
    %v1694 = vmul.f32 %v1693, %v1692
    %v1695 = vmul.f32 0.5, %v1694
    %v1696 = vsub.f32 1.5, %v1695
    %v1697 = vmul.f32 %v1692, %v1696
    %v1698 = vmul.f32 %v1691, %v1697
    %vm1699 = vcmp.eq.f32.partialorder %v1691, inf
    %v1700 = vsel %vm1699, %v1691, %v1698
    %vm1701 = vcmp.eq.f32.partialorder %v1691, 0.0
    %v1702 = vand.u32 %v1691, 2147483648
    %v1703 = vsel %vm1701, %v1702, %v1700
    %s1704 = vtos %v1703
    %s1705 = smax.f32 %s1704, 1e-12
    %v1706 = vstv %s1705
    %v1707 = vrcp.pop %v1706
    %v1708 = vmul.f32 %v1706, %v1707
    %v1709 = vsub.f32 1.0, %v1708
    %v1710 = vmul.f32 %v1707, %v1709
    %v1711 = vadd.f32 %v1707, %v1710
    %vm1712 = vweird.f32 %v1706
    %vm1713 = vweird.f32 %v1707
    %vm1714 = vmor %vm1712, %vm1713
    %v1715 = vsel %vm1714, %v1707, %v1711
    %v1716 = vand.u32 2147483647, %v1706
    %vm1717 = vcmp.eq.f32.partialorder %v1716, 8.507059e+37
    %v1718 = vand.u32 %v1706, 2147483648
    %v1719 = vor.u32 1.1754944e-38, %v1718
    %v1720 = vsel %vm1717, %v1719, %v1715
    %s1721 = vtos %v1720
    %v1722 = vstv %s1721
    %v1723 = vmul.f32 %v1676, %v1722
    %1724 = vst.msk [vmem:[#allocation7] sm:$0xf] %vm1680, %v1723
    %1725 = vxpose.xlu0.b32.start [1/16] %v1578, 128
    %1726 = vxpose.xlu0.b32.cont [2/16] %v1580, 128
    %1727 = vxpose.xlu0.b32.cont [3/16] %v1583, 128
    %1728 = vxpose.xlu0.b32.cont [4/16] %v1585, 128
    %1729 = vxpose.xlu0.b32.cont [5/16] %v1588, 128
    %1730 = vxpose.xlu0.b32.cont [6/16] %v1590, 128
    %1731 = vxpose.xlu0.b32.cont [7/16] %v1593, 128
    %1732 = vxpose.xlu0.b32.cont [8/16] %v1595, 128
    %1733 = vxpose.xlu0.b32.cont [9/16] 0.0, 128
    %1734 = vxpose.xlu0.b32.cont [10/16] 0.0, 128
    %1735 = vxpose.xlu0.b32.cont [11/16] 0.0, 128
    %1736 = vxpose.xlu0.b32.cont [12/16] 0.0, 128
    %1737 = vxpose.xlu0.b32.cont [13/16] 0.0, 128
    %1738 = vxpose.xlu0.b32.cont [14/16] 0.0, 128
    %1739 = vxpose.xlu0.b32.cont [15/16] 0.0, 128
    %1740 = vxpose.xlu0.b32.end [16/16] 0.0, 128
    %v1741 = vpop.trf.xlu0
    %v1742 = vpop.trf.xlu0
    %v1743 = vpop.trf.xlu0
    %v1744 = vpop.trf.xlu0
    %v1745 = vpop.trf.xlu0
    %v1746 = vpop.trf.xlu0
    %v1747 = vpop.trf.xlu0
    %v1748 = vpop.trf.xlu0
    %v1749 = vpop.trf.xlu0
    %v1750 = vpop.trf.xlu0
    %v1751 = vpop.trf.xlu0
    %v1752 = vpop.trf.xlu0
    %v1753 = vpop.trf.xlu0
    %v1754 = vpop.trf.xlu0
    %v1755 = vpop.trf.xlu0
    %v1756 = vpop.trf.xlu0
    %v1757 = vpack.c.bf16 %v1741, %v1741
    %v1758 = vld [vmem:[%s7] sm:$0xf]
    %v1759 = vld [vmem:[%s7 + $0x4] sm:$0xf]
    %v1760 = vld [vmem:[%s7 + $0x8] sm:$0xf]
    %v1761 = vld [vmem:[%s7 + $0xc] sm:$0xf]
    %v1762 = vld [vmem:[%s7 + $0x10] sm:$0xf]
    %v1763 = vld [vmem:[%s7 + $0x14] sm:$0xf]
    %v1764 = vld [vmem:[%s7 + $0x18] sm:$0xf]
    %v1765 = vld [vmem:[%s7 + $0x1c] sm:$0xf]
    %v1774 = vunpack.c.l.b16 %v1758
    %v1775 = vunpack.c.l.b16 %v1759
    %v1776 = vunpack.c.l.b16 %v1760
    %v1777 = vunpack.c.l.b16 %v1761
    %v1778 = vunpack.c.l.b16 %v1762
    %v1779 = vunpack.c.l.b16 %v1763
    %v1780 = vunpack.c.l.b16 %v1764
    %v1781 = vunpack.c.l.b16 %v1765
    %v1782 = vpack.c.b16 %v1775, %v1774
    %v1783 = vpack.c.b16 %v1777, %v1776
    %v1784 = vpack.c.b16 %v1779, %v1778
    %v1785 = vpack.c.b16 %v1781, %v1780
    %v1791 = vsel %vm85, %v1757, 0
    %1793 = vmatpush.bf16.msra.mxu0 0
    %1794 = vmatpush.bf16.msra.mxu0 0
    %1795 = vmatpush.bf16.msra.mxu0 0
    %1796 = vmatpush.bf16.msra.mxu0 0
    %1797 = vmatpush.bf16.msra.mxu0 %v1785
    %1798 = vmatpush.bf16.msra.mxu0 %v1784
    %1799 = vmatpush.bf16.msra.mxu0 %v1783
    %1800 = vmatpush.bf16.msra.mxu0 %v1782
    %1801 = vmatmul.bf16.gmra.mxu0 %v1791
    %v1802 = vpop.f32.mrf.mxu0
    %v1803 = vadd.f32 %v1597, %v1802
    %v1804 = vpop.f32.mrf.mxu0
    %1805 = vdwg.mxu0
    %v1806 = vmul.f32 %v1803, %v1803
    %v1807 = vsel %vm1680, %v1806, 0.0
    %1808 = vadd.xlane.f32.xlu0 %v1807
    %v1809 = vpop.xlane.xlu0 %1808
    %v1810 = vrot.slane %v1809, 4
    %v1811 = vadd.f32 %v1809, %v1810
    %v1812 = vrot.slane %v1811, 2
    %v1813 = vadd.f32 %v1811, %v1812
    %v1814 = vrot.slane %v1813, 1
    %v1815 = vadd.f32 %v1813, %v1814
    %s1816 = vtos %v1815
    %v1817 = vstv %s1816
    %v1818 = vrsqrt.pop %v1817
    %v1819 = vmul.f32 %v1818, %v1817
    %v1820 = vmul.f32 %v1819, %v1818
    %v1821 = vmul.f32 0.5, %v1820
    %v1822 = vsub.f32 1.5, %v1821
    %v1823 = vmul.f32 %v1818, %v1822
    %v1824 = vmul.f32 %v1817, %v1823
    %vm1825 = vcmp.eq.f32.partialorder %v1817, inf
    %v1826 = vsel %vm1825, %v1817, %v1824
    %vm1827 = vcmp.eq.f32.partialorder %v1817, 0.0
    %v1828 = vand.u32 %v1817, 2147483648
    %v1829 = vsel %vm1827, %v1828, %v1826
    %s1830 = vtos %v1829
    %s1831 = smax.f32 %s1830, 1e-12
    %v1832 = vstv %s1831
    %v1833 = vrcp.pop %v1832
    %v1834 = vmul.f32 %v1832, %v1833
    %v1835 = vsub.f32 1.0, %v1834
    %v1836 = vmul.f32 %v1833, %v1835
    %v1837 = vadd.f32 %v1833, %v1836
    %vm1838 = vweird.f32 %v1832
    %vm1839 = vweird.f32 %v1833
    %vm1840 = vmor %vm1838, %vm1839
    %v1841 = vsel %vm1840, %v1833, %v1837
    %v1842 = vand.u32 2147483647, %v1832
    %vm1843 = vcmp.eq.f32.partialorder %v1842, 8.507059e+37
    %v1844 = vand.u32 %v1832, 2147483648
    %v1845 = vor.u32 1.1754944e-38, %v1844
    %v1846 = vsel %vm1843, %v1845, %v1841
    %s1847 = vtos %v1846
    %v1848 = vstv %s1847
    %v1849 = vmul.f32 %v1803, %v1848
    %s1850 = scalar_lea.vmem [#allocation7], 4
    %1851 = vst.msk [vmem:[%s1850] sm:$0xf] %vm1680, %v1849
    // Predicated region
    $region50: #{tpu_custom_call.1} parent=1 // pred_check
      _
    $region51: #{tpu_custom_call.1} parent=1 // pred_check_branch
      %1853 = sbr.rel (0) target = $region53
    $region52: #{tpu_custom_call.1} parent=1 // pred_region
      %1855 = vsyncadd [#allocation4], 0
      %s1856 = sshll.u32 [#allocation7], 4
      %s1857 = int_to_ptr.vmem [resolvable:$true] %s1856
      %s1858 = sshll.u32 %s10, 4
      %s1859 = int_to_ptr.hbm [resolvable:$true] %s1858
      %1864 = dma.vmem_to_hbm [thread:$0]  %s1857, 128, %s1859, [#allocation4], 64, 64, 4
    $region53: #{tpu_custom_call.1} parent=1 // pred_fallthru
      _
    // Predicated region
    $region54: #{tpu_custom_call.1} parent=1 // pred_check
      _
    $region55: #{tpu_custom_call.1} parent=1 // pred_check_branch
      %1866 = sbr.rel (0) target = $region57
    $region56: #{tpu_custom_call.1} parent=1 // pred_region
      %1868 = dma.done [#allocation4], 128
    $region57: #{tpu_custom_call.1} parent=1 // pred_fallthru
      _
    %1869 = vsyncpa [#allocation3], 1
    %1870 = vsyncpa [#allocation6], 1
    %1871 = vsyncpa [#allocation4], 1

// kernel: tpu_custom_call.1
$region0: #{tpu_custom_call.1}
  #allocation0 [shape = 'u32[]', space=smem, size = 0x4, offset = 0x4, fixed_abs, tag = 'smem constant byte address 0x4 - core index']
  #allocation1 [shape = 'u32[72,128]{1,0:T(1,128)}', space=vmem, size = 0x9000, scoped, tag = 'internal scratch']
  %s0 = inlined_call_operand.hbm [shape: f32[2,64,64], index: 0, kind: input, shape index: {}]
  %s1 = inlined_call_operand.vmem [shape: f32[2,64], index: 1, kind: input, shape index: {}]
  %s2 = inlined_call_operand.vmem [shape: f32[2,64], index: 2, kind: input, shape index: {}]
  %s3 = inlined_call_operand.vmem [shape: bf16[2,64,64], index: 3, kind: input, shape index: {}]
  %s4 = inlined_call_operand.vmem [shape: f32[2,64], index: 4, kind: input, shape index: {}]
  %s5 = inlined_call_operand.hbm [shape: bf16[2,64,64], index: 5, kind: input, shape index: {}]
  %s6 = inlined_call_operand.vmem [shape: f32[2,64], index: 6, kind: input, shape index: {}]
  %s7 = inlined_call_operand.vmem [shape: bf16[64,32], index: 7, kind: input, shape index: {}]
  %s8 = inlined_call_operand.vmem [shape: bf16[64,4], index: 8, kind: input, shape index: {}]
  %s9 = inlined_call_operand.vmem [shape: f32[4,32], index: 9, kind: input, shape index: {}]
  %s10 = inlined_call_operand.hbm [shape: f32[2,4,32], index: 10, kind: output, shape index: {}]
  %s11 = sld [smem:[#allocation0]]
  $region58: #{tpu_custom_call.1} parent=0
    _
  %s13 = ssub.s32 1, %s11
  %s14 = scalar_select 0, %s13, %s11
  $region1: #{tpu_custom_call.1} parent=0
    #allocation2 [shape = 'u8[65536]{0}', space=vmem, size = 0x10000, scoped, tag = 'input window, operand 0, single buffered']
    #allocation3 [shape = 's32[1]{0}', space=sflag, size = 0x4, scoped, tag = 'scoped memory for tpu_custom_call.1']
    #allocation4 [shape = 's32[1]{0}', space=sflag, size = 0x4, scoped, tag = 'scoped memory for tpu_custom_call.1']
    #allocation5 [shape = 'u8[32768]{0}', space=vmem, size = 0x8000, scoped, tag = 'input window, operand 5, single buffered']
    #allocation6 [shape = 's32[1]{0}', space=sflag, size = 0x4, scoped, tag = 'scoped memory for tpu_custom_call.1']
    #allocation7 [shape = 'u8[4096]{0}', space=vmem, size = 0x1000, scoped, tag = 'output window, operand 0, single buffered']
    %15 = vsyncpa [#allocation3], 0
    %16 = vsyncpa [#allocation6], 0
    %17 = vsyncpa [#allocation4], 0
    // Predicated region
    $region2: #{tpu_custom_call.1} parent=1 // pred_check
      _
    $region3: #{tpu_custom_call.1} parent=1 // pred_check_branch
      %19 = sbr.rel (0) target = $region5
    $region4: #{tpu_custom_call.1} parent=1 // pred_region
      %21 = vsyncadd [#allocation3], 0
      %s22 = sshll.u32 %s0, 4
      %s23 = int_to_ptr.hbm [resolvable:$true] %s22
      %s24 = sshll.u32 [#allocation2], 4
      %s25 = int_to_ptr.vmem [resolvable:$true] %s24
      %30 = dma.hbm_to_vmem [thread:$0]  %s23, 2048, %s25, [#allocation3], 128, 128, 8
    $region5: #{tpu_custom_call.1} parent=1 // pred_fallthru
      _
    // Predicated region
    $region6: #{tpu_custom_call.1} parent=1 // pred_check
      _
    $region7: #{tpu_custom_call.1} parent=1 // pred_check_branch
      %32 = sbr.rel (0) target = $region9
    $region8: #{tpu_custom_call.1} parent=1 // pred_region
      _
    $region9: #{tpu_custom_call.1} parent=1 // pred_fallthru
      _
    // Predicated region
    $region10: #{tpu_custom_call.1} parent=1 // pred_check
      _
    $region11: #{tpu_custom_call.1} parent=1 // pred_check_branch
      %34 = sbr.rel (0) target = $region13
    $region12: #{tpu_custom_call.1} parent=1 // pred_region
      _
    $region13: #{tpu_custom_call.1} parent=1 // pred_fallthru
      _
    // Predicated region
    $region14: #{tpu_custom_call.1} parent=1 // pred_check
      _
    $region15: #{tpu_custom_call.1} parent=1 // pred_check_branch
      %36 = sbr.rel (0) target = $region17
    $region16: #{tpu_custom_call.1} parent=1 // pred_region
      _
    $region17: #{tpu_custom_call.1} parent=1 // pred_fallthru
      _
    // Predicated region
    $region18: #{tpu_custom_call.1} parent=1 // pred_check
      _
    $region19: #{tpu_custom_call.1} parent=1 // pred_check_branch
      %38 = sbr.rel (0) target = $region21
    $region20: #{tpu_custom_call.1} parent=1 // pred_region
      _
    $region21: #{tpu_custom_call.1} parent=1 // pred_fallthru
      _
    // Predicated region
    $region22: #{tpu_custom_call.1} parent=1 // pred_check
      _
    $region23: #{tpu_custom_call.1} parent=1 // pred_check_branch
      %40 = sbr.rel (0) target = $region25
    $region24: #{tpu_custom_call.1} parent=1 // pred_region
      %42 = vsyncadd [#allocation6], 0
      %s43 = sshll.u32 %s5, 4
      %s44 = int_to_ptr.hbm [resolvable:$true] %s43
      %s45 = sshll.u32 [#allocation5], 4
      %s46 = int_to_ptr.vmem [resolvable:$true] %s45
      %51 = dma.hbm_to_vmem [thread:$0]  %s44, 1024, %s46, [#allocation6], 64, 64, 4
    $region25: #{tpu_custom_call.1} parent=1 // pred_fallthru
      _
    // Predicated region
    $region26: #{tpu_custom_call.1} parent=1 // pred_check
      _
    $region27: #{tpu_custom_call.1} parent=1 // pred_check_branch
      %53 = sbr.rel (0) target = $region29
    $region28: #{tpu_custom_call.1} parent=1 // pred_region
      _
    $region29: #{tpu_custom_call.1} parent=1 // pred_fallthru
      _
    // Predicated region
    $region30: #{tpu_custom_call.1} parent=1 // pred_check
      _
    $region31: #{tpu_custom_call.1} parent=1 // pred_check_branch
      %55 = sbr.rel (0) target = $region33
    $region32: #{tpu_custom_call.1} parent=1 // pred_region
      _
    $region33: #{tpu_custom_call.1} parent=1 // pred_fallthru
      _
    // Predicated region
    $region34: #{tpu_custom_call.1} parent=1 // pred_check
      _
    $region35: #{tpu_custom_call.1} parent=1 // pred_check_branch
      %57 = sbr.rel (0) target = $region37
    $region36: #{tpu_custom_call.1} parent=1 // pred_region
      _
    $region37: #{tpu_custom_call.1} parent=1 // pred_fallthru
      _
    // Predicated region
    $region38: #{tpu_custom_call.1} parent=1 // pred_check
      _
    $region39: #{tpu_custom_call.1} parent=1 // pred_check_branch
      %59 = sbr.rel (0) target = $region41
    $region40: #{tpu_custom_call.1} parent=1 // pred_region
      _
    $region41: #{tpu_custom_call.1} parent=1 // pred_fallthru
      _
    // Predicated region
    $region42: #{tpu_custom_call.1} parent=1 // pred_check
      _
    $region43: #{tpu_custom_call.1} parent=1 // pred_check_branch
      %61 = sbr.rel (0) target = $region45
    $region44: #{tpu_custom_call.1} parent=1 // pred_region
      %63 = dma.done [#allocation3], 2048
    $region45: #{tpu_custom_call.1} parent=1 // pred_fallthru
      _
    // Predicated region
    $region46: #{tpu_custom_call.1} parent=1 // pred_check
      _
    $region47: #{tpu_custom_call.1} parent=1 // pred_check_branch
      %65 = sbr.rel (0) target = $region49
    $region48: #{tpu_custom_call.1} parent=1 // pred_region
      %67 = dma.done [#allocation6], 1024
    $region49: #{tpu_custom_call.1} parent=1 // pred_fallthru
      _
    %v69 = vld [vmem:[#allocation2] sm:$0xff]
    %v70 = vld [vmem:[#allocation2 + $0x8] sm:$0xff]
    %v71 = vld [vmem:[#allocation2 + $0x10] sm:$0xff]
    %v72 = vld [vmem:[#allocation2 + $0x18] sm:$0xff]
    %v73 = vld [vmem:[#allocation2 + $0x20] sm:$0xff]
    %v74 = vld [vmem:[#allocation2 + $0x28] sm:$0xff]
    %v75 = vld [vmem:[#allocation2 + $0x30] sm:$0xff]
    %v76 = vld [vmem:[#allocation2 + $0x38] sm:$0xff]
    %v77 = vld [vmem:[#allocation2 + $0x40] sm:$0xff]
    %v78 = vld [vmem:[#allocation2 + $0x48] sm:$0xff]
    %v79 = vld [vmem:[#allocation2 + $0x50] sm:$0xff]
    %v80 = vld [vmem:[#allocation2 + $0x58] sm:$0xff]
    %v81 = vld [vmem:[#allocation2 + $0x60] sm:$0xff]
    %v82 = vld [vmem:[#allocation2 + $0x68] sm:$0xff]
    %v83 = vld [vmem:[#allocation2 + $0x70] sm:$0xff]
    %v84 = vld [vmem:[#allocation2 + $0x78] sm:$0xff]
    %vm85 = vcmask 523264
    %v86 = vsel %vm85, %v69, 0.0
    %87 = vadd.xlane.f32.xlu0 %v86
    %v88 = vpop.xlane.xlu0 %87
    %v89 = vsel %vm85, %v70, 0.0
    %90 = vadd.xlane.f32.xlu0 %v89
    %v91 = vpop.xlane.xlu0 %90
    %v92 = vsel %vm85, %v71, 0.0
    %93 = vadd.xlane.f32.xlu0 %v92
    %v94 = vpop.xlane.xlu0 %93
    %v95 = vsel %vm85, %v72, 0.0
    %96 = vadd.xlane.f32.xlu0 %v95
    %v97 = vpop.xlane.xlu0 %96
    %v98 = vsel %vm85, %v73, 0.0
    %99 = vadd.xlane.f32.xlu0 %v98
    %v100 = vpop.xlane.xlu0 %99
    %v101 = vsel %vm85, %v74, 0.0
    %102 = vadd.xlane.f32.xlu0 %v101
    %v103 = vpop.xlane.xlu0 %102
    %v104 = vsel %vm85, %v75, 0.0
    %105 = vadd.xlane.f32.xlu0 %v104
    %v106 = vpop.xlane.xlu0 %105
    %v107 = vsel %vm85, %v76, 0.0
    %108 = vadd.xlane.f32.xlu0 %v107
    %v109 = vpop.xlane.xlu0 %108
    %v110 = vsel %vm85, %v77, 0.0
    %111 = vadd.xlane.f32.xlu0 %v110
    %v112 = vpop.xlane.xlu0 %111
    %v113 = vsel %vm85, %v78, 0.0
    %114 = vadd.xlane.f32.xlu0 %v113
    %v115 = vpop.xlane.xlu0 %114
    %v116 = vsel %vm85, %v79, 0.0
    %117 = vadd.xlane.f32.xlu0 %v116
    %v118 = vpop.xlane.xlu0 %117
    %v119 = vsel %vm85, %v80, 0.0
    %120 = vadd.xlane.f32.xlu0 %v119
    %v121 = vpop.xlane.xlu0 %120
    %v122 = vsel %vm85, %v81, 0.0
    %123 = vadd.xlane.f32.xlu0 %v122
    %v124 = vpop.xlane.xlu0 %123
    %v125 = vsel %vm85, %v82, 0.0
    %126 = vadd.xlane.f32.xlu0 %v125
    %v127 = vpop.xlane.xlu0 %126
    %v128 = vsel %vm85, %v83, 0.0
    %129 = vadd.xlane.f32.xlu0 %v128
    %v130 = vpop.xlane.xlu0 %129
    %v131 = vsel %vm85, %v84, 0.0
    %132 = vadd.xlane.f32.xlu0 %v131
    %v133 = vpop.xlane.xlu0 %132
    %v134 = vmul.f32 %v69, %v69
    %v135 = vmul.f32 %v70, %v70
    %v136 = vmul.f32 %v71, %v71
    %v137 = vmul.f32 %v72, %v72
    %v138 = vmul.f32 %v73, %v73
    %v139 = vmul.f32 %v74, %v74
    %v140 = vmul.f32 %v75, %v75
    %v141 = vmul.f32 %v76, %v76
    %v142 = vmul.f32 %v77, %v77
    %v143 = vmul.f32 %v78, %v78
    %v144 = vmul.f32 %v79, %v79
    %v145 = vmul.f32 %v80, %v80
    %v146 = vmul.f32 %v81, %v81
    %v147 = vmul.f32 %v82, %v82
    %v148 = vmul.f32 %v83, %v83
    %v149 = vmul.f32 %v84, %v84
    %v150 = vsel %vm85, %v134, 0.0
    %151 = vadd.xlane.f32.xlu0 %v150
    %v152 = vpop.xlane.xlu0 %151
    %v153 = vsel %vm85, %v135, 0.0
    %154 = vadd.xlane.f32.xlu0 %v153
    %v155 = vpop.xlane.xlu0 %154
    %v156 = vsel %vm85, %v136, 0.0
    %157 = vadd.xlane.f32.xlu0 %v156
    %v158 = vpop.xlane.xlu0 %157
    %v159 = vsel %vm85, %v137, 0.0
    %160 = vadd.xlane.f32.xlu0 %v159
    %v161 = vpop.xlane.xlu0 %160
    %v162 = vsel %vm85, %v138, 0.0
    %163 = vadd.xlane.f32.xlu0 %v162
    %v164 = vpop.xlane.xlu0 %163
    %v165 = vsel %vm85, %v139, 0.0
    %166 = vadd.xlane.f32.xlu0 %v165
    %v167 = vpop.xlane.xlu0 %166
    %v168 = vsel %vm85, %v140, 0.0
    %169 = vadd.xlane.f32.xlu0 %v168
    %v170 = vpop.xlane.xlu0 %169
    %v171 = vsel %vm85, %v141, 0.0
    %172 = vadd.xlane.f32.xlu0 %v171
    %v173 = vpop.xlane.xlu0 %172
    %v174 = vsel %vm85, %v142, 0.0
    %175 = vadd.xlane.f32.xlu0 %v174
    %v176 = vpop.xlane.xlu0 %175
    %v177 = vsel %vm85, %v143, 0.0
    %178 = vadd.xlane.f32.xlu0 %v177
    %v179 = vpop.xlane.xlu0 %178
    %v180 = vsel %vm85, %v144, 0.0
    %181 = vadd.xlane.f32.xlu0 %v180
    %v182 = vpop.xlane.xlu0 %181
    %v183 = vsel %vm85, %v145, 0.0
    %184 = vadd.xlane.f32.xlu0 %v183
    %v185 = vpop.xlane.xlu0 %184
    %v186 = vsel %vm85, %v146, 0.0
    %187 = vadd.xlane.f32.xlu0 %v186
    %v188 = vpop.xlane.xlu0 %187
    %v189 = vsel %vm85, %v147, 0.0
    %190 = vadd.xlane.f32.xlu0 %v189
    %v191 = vpop.xlane.xlu0 %190
    %v192 = vsel %vm85, %v148, 0.0
    %193 = vadd.xlane.f32.xlu0 %v192
    %v194 = vpop.xlane.xlu0 %193
    %v195 = vsel %vm85, %v149, 0.0
    %196 = vadd.xlane.f32.xlu0 %v195
    %v197 = vpop.xlane.xlu0 %196
    %v198 = vmul.f32 %v88, 0.015625
    %v199 = vmul.f32 %v91, 0.015625
    %v200 = vmul.f32 %v94, 0.015625
    %v201 = vmul.f32 %v97, 0.015625
    %v202 = vmul.f32 %v100, 0.015625
    %v203 = vmul.f32 %v103, 0.015625
    %v204 = vmul.f32 %v106, 0.015625
    %v205 = vmul.f32 %v109, 0.015625
    %v206 = vmul.f32 %v112, 0.015625
    %v207 = vmul.f32 %v115, 0.015625
    %v208 = vmul.f32 %v118, 0.015625
    %v209 = vmul.f32 %v121, 0.015625
    %v210 = vmul.f32 %v124, 0.015625
    %v211 = vmul.f32 %v127, 0.015625
    %v212 = vmul.f32 %v130, 0.015625
    %v213 = vmul.f32 %v133, 0.015625
    %v214 = vmul.f32 %v152, 0.015625
    %v215 = vmul.f32 %v155, 0.015625
    %v216 = vmul.f32 %v158, 0.015625
    %v217 = vmul.f32 %v161, 0.015625
    %v218 = vmul.f32 %v164, 0.015625
    %v219 = vmul.f32 %v167, 0.015625
    %v220 = vmul.f32 %v170, 0.015625
    %v221 = vmul.f32 %v173, 0.015625
    %v222 = vmul.f32 %v176, 0.015625
    %v223 = vmul.f32 %v179, 0.015625
    %v224 = vmul.f32 %v182, 0.015625
    %v225 = vmul.f32 %v185, 0.015625
    %v226 = vmul.f32 %v188, 0.015625
    %v227 = vmul.f32 %v191, 0.015625
    %v228 = vmul.f32 %v194, 0.015625
    %v229 = vmul.f32 %v197, 0.015625
    %v230 = vmul.f32 %v198, %v198
    %v231 = vmul.f32 %v199, %v199
    %v232 = vmul.f32 %v200, %v200
    %v233 = vmul.f32 %v201, %v201
    %v234 = vmul.f32 %v202, %v202
    %v235 = vmul.f32 %v203, %v203
    %v236 = vmul.f32 %v204, %v204
    %v237 = vmul.f32 %v205, %v205
    %v238 = vmul.f32 %v206, %v206
    %v239 = vmul.f32 %v207, %v207
    %v240 = vmul.f32 %v208, %v208
    %v241 = vmul.f32 %v209, %v209
    %v242 = vmul.f32 %v210, %v210
    %v243 = vmul.f32 %v211, %v211
    %v244 = vmul.f32 %v212, %v212
    %v245 = vmul.f32 %v213, %v213
    %v246 = vsub.f32 %v214, %v230
    %v247 = vsub.f32 %v215, %v231
    %v248 = vsub.f32 %v216, %v232
    %v249 = vsub.f32 %v217, %v233
    %v250 = vsub.f32 %v218, %v234
    %v251 = vsub.f32 %v219, %v235
    %v252 = vsub.f32 %v220, %v236
    %v253 = vsub.f32 %v221, %v237
    %v254 = vsub.f32 %v222, %v238
    %v255 = vsub.f32 %v223, %v239
    %v256 = vsub.f32 %v224, %v240
    %v257 = vsub.f32 %v225, %v241
    %v258 = vsub.f32 %v226, %v242
    %v259 = vsub.f32 %v227, %v243
    %v260 = vsub.f32 %v228, %v244
    %v261 = vsub.f32 %v229, %v245
    %v262 = vsub.f32 %v69, %v198
    %v263 = vsub.f32 %v70, %v199
    %v264 = vsub.f32 %v71, %v200
    %v265 = vsub.f32 %v72, %v201
    %v266 = vsub.f32 %v73, %v202
    %v267 = vsub.f32 %v74, %v203
    %v268 = vsub.f32 %v75, %v204
    %v269 = vsub.f32 %v76, %v205
    %v270 = vsub.f32 %v77, %v206
    %v271 = vsub.f32 %v78, %v207
    %v272 = vsub.f32 %v79, %v208
    %v273 = vsub.f32 %v80, %v209
    %v274 = vsub.f32 %v81, %v210
    %v275 = vsub.f32 %v82, %v211
    %v276 = vsub.f32 %v83, %v212
    %v277 = vsub.f32 %v84, %v213
    %v278 = vadd.f32 %v246, 1e-05
    %v279 = vadd.f32 %v247, 1e-05
    %v280 = vadd.f32 %v248, 1e-05
    %v281 = vadd.f32 %v249, 1e-05
    %v282 = vadd.f32 %v250, 1e-05
    %v283 = vadd.f32 %v251, 1e-05
    %v284 = vadd.f32 %v252, 1e-05
    %v285 = vadd.f32 %v253, 1e-05
    %v286 = vadd.f32 %v254, 1e-05
    %v287 = vadd.f32 %v255, 1e-05
    %v288 = vadd.f32 %v256, 1e-05
    %v289 = vadd.f32 %v257, 1e-05
    %v290 = vadd.f32 %v258, 1e-05
    %v291 = vadd.f32 %v259, 1e-05
    %v292 = vadd.f32 %v260, 1e-05
    %v293 = vadd.f32 %v261, 1e-05
    %v294 = vrsqrt.pop %v278
    %v295 = vmul.f32 %v294, %v278
    %v296 = vmul.f32 %v295, %v294
    %v297 = vmul.f32 0.5, %v296
    %v298 = vsub.f32 1.5, %v297
    %v299 = vmul.f32 %v294, %v298
    %vm300 = vweird.f32 %v278
    %vm301 = vweird.f32 %v294
    %vm302 = vmor %vm300, %vm301
    %v303 = vsel %vm302, %v294, %v299
    %v304 = vrsqrt.pop %v279
    %v305 = vmul.f32 %v304, %v279
    %v306 = vmul.f32 %v305, %v304
    %v307 = vmul.f32 0.5, %v306
    %v308 = vsub.f32 1.5, %v307
    %v309 = vmul.f32 %v304, %v308
    %vm310 = vweird.f32 %v279
    %vm311 = vweird.f32 %v304
    %vm312 = vmor %vm310, %vm311
    %v313 = vsel %vm312, %v304, %v309
    %v314 = vrsqrt.pop %v280
    %v315 = vmul.f32 %v314, %v280
    %v316 = vmul.f32 %v315, %v314
    %v317 = vmul.f32 0.5, %v316
    %v318 = vsub.f32 1.5, %v317
    %v319 = vmul.f32 %v314, %v318
    %vm320 = vweird.f32 %v280
    %vm321 = vweird.f32 %v314
    %vm322 = vmor %vm320, %vm321
    %v323 = vsel %vm322, %v314, %v319
    %v324 = vrsqrt.pop %v281
    %v325 = vmul.f32 %v324, %v281
    %v326 = vmul.f32 %v325, %v324
    %v327 = vmul.f32 0.5, %v326
    %v328 = vsub.f32 1.5, %v327
    %v329 = vmul.f32 %v324, %v328
    %vm330 = vweird.f32 %v281
    %vm331 = vweird.f32 %v324
    %vm332 = vmor %vm330, %vm331
    %v333 = vsel %vm332, %v324, %v329
    %v334 = vrsqrt.pop %v282
    %v335 = vmul.f32 %v334, %v282
    %v336 = vmul.f32 %v335, %v334
    %v337 = vmul.f32 0.5, %v336
    %v338 = vsub.f32 1.5, %v337
    %v339 = vmul.f32 %v334, %v338
    %vm340 = vweird.f32 %v282
    %vm341 = vweird.f32 %v334
    %vm342 = vmor %vm340, %vm341
    %v343 = vsel %vm342, %v334, %v339
    %v344 = vrsqrt.pop %v283
    %v345 = vmul.f32 %v344, %v283
    %v346 = vmul.f32 %v345, %v344
    %v347 = vmul.f32 0.5, %v346
    %v348 = vsub.f32 1.5, %v347
    %v349 = vmul.f32 %v344, %v348
    %vm350 = vweird.f32 %v283
    %vm351 = vweird.f32 %v344
    %vm352 = vmor %vm350, %vm351
    %v353 = vsel %vm352, %v344, %v349
    %v354 = vrsqrt.pop %v284
    %v355 = vmul.f32 %v354, %v284
    %v356 = vmul.f32 %v355, %v354
    %v357 = vmul.f32 0.5, %v356
    %v358 = vsub.f32 1.5, %v357
    %v359 = vmul.f32 %v354, %v358
    %vm360 = vweird.f32 %v284
    %vm361 = vweird.f32 %v354
    %vm362 = vmor %vm360, %vm361
    %v363 = vsel %vm362, %v354, %v359
    %v364 = vrsqrt.pop %v285
    %v365 = vmul.f32 %v364, %v285
    %v366 = vmul.f32 %v365, %v364
    %v367 = vmul.f32 0.5, %v366
    %v368 = vsub.f32 1.5, %v367
    %v369 = vmul.f32 %v364, %v368
    %vm370 = vweird.f32 %v285
    %vm371 = vweird.f32 %v364
    %vm372 = vmor %vm370, %vm371
    %v373 = vsel %vm372, %v364, %v369
    %v374 = vrsqrt.pop %v286
    %v375 = vmul.f32 %v374, %v286
    %v376 = vmul.f32 %v375, %v374
    %v377 = vmul.f32 0.5, %v376
    %v378 = vsub.f32 1.5, %v377
    %v379 = vmul.f32 %v374, %v378
    %vm380 = vweird.f32 %v286
    %vm381 = vweird.f32 %v374
    %vm382 = vmor %vm380, %vm381
    %v383 = vsel %vm382, %v374, %v379
    %v384 = vrsqrt.pop %v287
    %v385 = vmul.f32 %v384, %v287
    %v386 = vmul.f32 %v385, %v384
    %v387 = vmul.f32 0.5, %v386
    %v388 = vsub.f32 1.5, %v387
    %v389 = vmul.f32 %v384, %v388
    %vm390 = vweird.f32 %v287
    %vm391 = vweird.f32 %v384
    %vm392 = vmor %vm390, %vm391
    %v393 = vsel %vm392, %v384, %v389
    %v394 = vrsqrt.pop %v288
    %v395 = vmul.f32 %v394, %v288
    %v396 = vmul.f32 %v395, %v394
    %v397 = vmul.f32 0.5, %v396
    %v398 = vsub.f32 1.5, %v397
    %v399 = vmul.f32 %v394, %v398
    %vm400 = vweird.f32 %v288
    %vm401 = vweird.f32 %v394
    %vm402 = vmor %vm400, %vm401
    %v403 = vsel %vm402, %v394, %v399
    %v404 = vrsqrt.pop %v289
    %v405 = vmul.f32 %v404, %v289
    %v406 = vmul.f32 %v405, %v404
    %v407 = vmul.f32 0.5, %v406
    %v408 = vsub.f32 1.5, %v407
    %v409 = vmul.f32 %v404, %v408
    %vm410 = vweird.f32 %v289
    %vm411 = vweird.f32 %v404
    %vm412 = vmor %vm410, %vm411
    %v413 = vsel %vm412, %v404, %v409
    %v414 = vrsqrt.pop %v290
    %v415 = vmul.f32 %v414, %v290
    %v416 = vmul.f32 %v415, %v414
    %v417 = vmul.f32 0.5, %v416
    %v418 = vsub.f32 1.5, %v417
    %v419 = vmul.f32 %v414, %v418
    %vm420 = vweird.f32 %v290
    %vm421 = vweird.f32 %v414
    %vm422 = vmor %vm420, %vm421
    %v423 = vsel %vm422, %v414, %v419
    %v424 = vrsqrt.pop %v291
    %v425 = vmul.f32 %v424, %v291
    %v426 = vmul.f32 %v425, %v424
    %v427 = vmul.f32 0.5, %v426
    %v428 = vsub.f32 1.5, %v427
    %v429 = vmul.f32 %v424, %v428
    %vm430 = vweird.f32 %v291
    %vm431 = vweird.f32 %v424
    %vm432 = vmor %vm430, %vm431
    %v433 = vsel %vm432, %v424, %v429
    %v434 = vrsqrt.pop %v292
    %v435 = vmul.f32 %v434, %v292
    %v436 = vmul.f32 %v435, %v434
    %v437 = vmul.f32 0.5, %v436
    %v438 = vsub.f32 1.5, %v437
    %v439 = vmul.f32 %v434, %v438
    %vm440 = vweird.f32 %v292
    %vm441 = vweird.f32 %v434
    %vm442 = vmor %vm440, %vm441
    %v443 = vsel %vm442, %v434, %v439
    %v444 = vrsqrt.pop %v293
    %v445 = vmul.f32 %v444, %v293
    %v446 = vmul.f32 %v445, %v444
    %v447 = vmul.f32 0.5, %v446
    %v448 = vsub.f32 1.5, %v447
    %v449 = vmul.f32 %v444, %v448
    %vm450 = vweird.f32 %v293
    %vm451 = vweird.f32 %v444
    %vm452 = vmor %vm450, %vm451
    %v453 = vsel %vm452, %v444, %v449
    %v454 = vmul.f32 %v262, %v303
    %v455 = vmul.f32 %v263, %v313
    %v456 = vmul.f32 %v264, %v323
    %v457 = vmul.f32 %v265, %v333
    %v458 = vmul.f32 %v266, %v343
    %v459 = vmul.f32 %v267, %v353
    %v460 = vmul.f32 %v268, %v363
    %v461 = vmul.f32 %v269, %v373
    %v462 = vmul.f32 %v270, %v383
    %v463 = vmul.f32 %v271, %v393
    %v464 = vmul.f32 %v272, %v403
    %v465 = vmul.f32 %v273, %v413
    %v466 = vmul.f32 %v274, %v423
    %v467 = vmul.f32 %v275, %v433
    %v468 = vmul.f32 %v276, %v443
    %v469 = vmul.f32 %v277, %v453
    %v470 = vld [vmem:[%s1] sm:$0x1]
    %v471 = vperm.slane %v470, 0
    %v472 = vmul.f32 %v454, %v471
    %v473 = vmul.f32 %v455, %v471
    %v474 = vmul.f32 %v456, %v471
    %v475 = vmul.f32 %v457, %v471
    %v476 = vmul.f32 %v458, %v471
    %v477 = vmul.f32 %v459, %v471
    %v478 = vmul.f32 %v460, %v471
    %v479 = vmul.f32 %v461, %v471
    %v480 = vmul.f32 %v462, %v471
    %v481 = vmul.f32 %v463, %v471
    %v482 = vmul.f32 %v464, %v471
    %v483 = vmul.f32 %v465, %v471
    %v484 = vmul.f32 %v466, %v471
    %v485 = vmul.f32 %v467, %v471
    %v486 = vmul.f32 %v468, %v471
    %v487 = vmul.f32 %v469, %v471
    %v488 = vld [vmem:[%s2] sm:$0x1]
    %v489 = vperm.slane %v488, 0
    %v490 = vadd.f32 %v472, %v489
    %v491 = vadd.f32 %v473, %v489
    %v492 = vadd.f32 %v474, %v489
    %v493 = vadd.f32 %v475, %v489
    %v494 = vadd.f32 %v476, %v489
    %v495 = vadd.f32 %v477, %v489
    %v496 = vadd.f32 %v478, %v489
    %v497 = vadd.f32 %v479, %v489
    %v498 = vadd.f32 %v480, %v489
    %v499 = vadd.f32 %v481, %v489
    %v500 = vadd.f32 %v482, %v489
    %v501 = vadd.f32 %v483, %v489
    %v502 = vadd.f32 %v484, %v489
    %v503 = vadd.f32 %v485, %v489
    %v504 = vadd.f32 %v486, %v489
    %v505 = vadd.f32 %v487, %v489
    %v506 = vpack.c.bf16 %v491, %v490
    %v507 = vpack.c.bf16 %v493, %v492
    %v508 = vpack.c.bf16 %v495, %v494
    %v509 = vpack.c.bf16 %v497, %v496
    %v510 = vpack.c.bf16 %v499, %v498
    %v511 = vpack.c.bf16 %v501, %v500
    %v512 = vpack.c.bf16 %v503, %v502
    %v513 = vpack.c.bf16 %v505, %v504
    %v514 = vld [vmem:[%s3] sm:$0xf]
    %v515 = vld [vmem:[%s3 + $0x4] sm:$0xf]
    %v516 = vld [vmem:[%s3 + $0x8] sm:$0xf]
    %v517 = vld [vmem:[%s3 + $0xc] sm:$0xf]
    %v518 = vld [vmem:[%s3 + $0x10] sm:$0xf]
    %v519 = vld [vmem:[%s3 + $0x14] sm:$0xf]
    %v520 = vld [vmem:[%s3 + $0x18] sm:$0xf]
    %v521 = vld [vmem:[%s3 + $0x1c] sm:$0xf]
    %v522 = vld [vmem:[%s4] sm:$0x1]
    %v523 = vperm.slane %v522, 0
    %v532 = vunpack.c.l.b16 %v514
    %v533 = vunpack.c.l.b16 %v515
    %v534 = vunpack.c.l.b16 %v516
    %v535 = vunpack.c.l.b16 %v517
    %v536 = vunpack.c.l.b16 %v518
    %v537 = vunpack.c.l.b16 %v519
    %v538 = vunpack.c.l.b16 %v520
    %v539 = vunpack.c.l.b16 %v521
    %v540 = vpack.c.b16 %v533, %v532
    %v541 = vpack.c.b16 %v535, %v534
    %v542 = vpack.c.b16 %v537, %v536
    %v543 = vpack.c.b16 %v539, %v538
    %v549 = vsel %vm85, %v506, 0
    %v552 = vsel %vm85, %v507, 0
    %v555 = vsel %vm85, %v508, 0
    %v558 = vsel %vm85, %v509, 0
    %v561 = vsel %vm85, %v510, 0
    %v564 = vsel %vm85, %v511, 0
    %v567 = vsel %vm85, %v512, 0
    %v570 = vsel %vm85, %v513, 0
    %572 = vmatpush.bf16.msra.mxu0 0
    %573 = vmatpush.bf16.msra.mxu0 0
    %574 = vmatpush.bf16.msra.mxu0 0
    %575 = vmatpush.bf16.msra.mxu0 0
    %576 = vmatpush.bf16.msra.mxu0 %v543
    %577 = vmatpush.bf16.msra.mxu0 %v542
    %578 = vmatpush.bf16.msra.mxu0 %v541
    %579 = vmatpush.bf16.msra.mxu0 %v540
    %580 = vmatmul.bf16.gmra.mxu0 %v549
    %v581 = vpop.f32.mrf.mxu0
    %v582 = vadd.f32 %v523, %v581
    %v583 = vpop.f32.mrf.mxu0
    %v584 = vadd.f32 %v523, %v583
    %585 = vmatmul.bf16.gmra.mxu0 %v552
    %v586 = vpop.f32.mrf.mxu0
    %v587 = vadd.f32 %v523, %v586
    %v588 = vpop.f32.mrf.mxu0
    %v589 = vadd.f32 %v523, %v588
    %590 = vmatmul.bf16.gmra.mxu0 %v555
    %v591 = vpop.f32.mrf.mxu0
    %v592 = vadd.f32 %v523, %v591
    %v593 = vpop.f32.mrf.mxu0
    %v594 = vadd.f32 %v523, %v593
    %595 = vmatmul.bf16.gmra.mxu0 %v558
    %v596 = vpop.f32.mrf.mxu0
    %v597 = vadd.f32 %v523, %v596
    %v598 = vpop.f32.mrf.mxu0
    %v599 = vadd.f32 %v523, %v598
    %600 = vmatmul.bf16.gmra.mxu0 %v561
    %v601 = vpop.f32.mrf.mxu0
    %v602 = vadd.f32 %v523, %v601
    %v603 = vpop.f32.mrf.mxu0
    %v604 = vadd.f32 %v523, %v603
    %605 = vmatmul.bf16.gmra.mxu0 %v564
    %v606 = vpop.f32.mrf.mxu0
    %v607 = vadd.f32 %v523, %v606
    %v608 = vpop.f32.mrf.mxu0
    %v609 = vadd.f32 %v523, %v608
    %610 = vmatmul.bf16.gmra.mxu0 %v567
    %v611 = vpop.f32.mrf.mxu0
    %v612 = vadd.f32 %v523, %v611
    %v613 = vpop.f32.mrf.mxu0
    %v614 = vadd.f32 %v523, %v613
    %615 = vmatmul.bf16.gmra.mxu0 %v570
    %v616 = vpop.f32.mrf.mxu0
    %v617 = vadd.f32 %v523, %v616
    %v618 = vpop.f32.mrf.mxu0
    %v619 = vadd.f32 %v523, %v618
    %620 = vdwg.mxu0
    %v621 = vmax.f32 %v582, 0.0
    %v622 = vmax.f32 %v584, 0.0
    %v623 = vmax.f32 %v587, 0.0
    %v624 = vmax.f32 %v589, 0.0
    %v625 = vmax.f32 %v592, 0.0
    %v626 = vmax.f32 %v594, 0.0
    %v627 = vmax.f32 %v597, 0.0
    %v628 = vmax.f32 %v599, 0.0
    %v629 = vmax.f32 %v602, 0.0
    %v630 = vmax.f32 %v604, 0.0
    %v631 = vmax.f32 %v607, 0.0
    %v632 = vmax.f32 %v609, 0.0
    %v633 = vmax.f32 %v612, 0.0
    %v634 = vmax.f32 %v614, 0.0
    %v635 = vmax.f32 %v617, 0.0
    %v636 = vmax.f32 %v619, 0.0
    %v637 = vpack.c.bf16 %v622, %v621
    %v638 = vpack.c.bf16 %v624, %v623
    %v639 = vpack.c.bf16 %v626, %v625
    %v640 = vpack.c.bf16 %v628, %v627
    %v641 = vpack.c.bf16 %v630, %v629
    %v642 = vpack.c.bf16 %v632, %v631
    %v643 = vpack.c.bf16 %v634, %v633
    %v644 = vpack.c.bf16 %v636, %v635
    %v645 = vld [vmem:[#allocation5] sm:$0xf]
    %v646 = vld [vmem:[#allocation5 + $0x4] sm:$0xf]
    %v647 = vld [vmem:[#allocation5 + $0x8] sm:$0xf]
    %v648 = vld [vmem:[#allocation5 + $0xc] sm:$0xf]
    %v649 = vld [vmem:[#allocation5 + $0x10] sm:$0xf]
    %v650 = vld [vmem:[#allocation5 + $0x14] sm:$0xf]
    %v651 = vld [vmem:[#allocation5 + $0x18] sm:$0xf]
    %v652 = vld [vmem:[#allocation5 + $0x1c] sm:$0xf]
    %v661 = vunpack.c.l.b16 %v645
    %v662 = vunpack.c.l.b16 %v646
    %v663 = vunpack.c.l.b16 %v647
    %v664 = vunpack.c.l.b16 %v648
    %v665 = vunpack.c.l.b16 %v649
    %v666 = vunpack.c.l.b16 %v650
    %v667 = vunpack.c.l.b16 %v651
    %v668 = vunpack.c.l.b16 %v652
    %v669 = vpack.c.b16 %v662, %v661
    %v670 = vpack.c.b16 %v664, %v663
    %v671 = vpack.c.b16 %v666, %v665
    %v672 = vpack.c.b16 %v668, %v667
    %v678 = vsel %vm85, %v637, 0
    %v681 = vsel %vm85, %v638, 0
    %v684 = vsel %vm85, %v639, 0
    %v687 = vsel %vm85, %v640, 0
    %v690 = vsel %vm85, %v641, 0
    %v693 = vsel %vm85, %v642, 0
    %v696 = vsel %vm85, %v643, 0
    %v699 = vsel %vm85, %v644, 0
    %701 = vmatpush.bf16.msra.mxu0 0
    %702 = vmatpush.bf16.msra.mxu0 0
    %703 = vmatpush.bf16.msra.mxu0 0
    %704 = vmatpush.bf16.msra.mxu0 0
    %705 = vmatpush.bf16.msra.mxu0 %v672
    %706 = vmatpush.bf16.msra.mxu0 %v671
    %707 = vmatpush.bf16.msra.mxu0 %v670
    %708 = vmatpush.bf16.msra.mxu0 %v669
    %709 = vmatmul.bf16.gmra.mxu0 %v678
    %v710 = vpop.f32.mrf.mxu0
    %v711 = vadd.f32 0.0, %v710
    %v712 = vpop.f32.mrf.mxu0
    %v713 = vadd.f32 0.0, %v712
    %714 = vmatmul.bf16.gmra.mxu0 %v681
    %v715 = vpop.f32.mrf.mxu0
    %v716 = vadd.f32 0.0, %v715
    %v717 = vpop.f32.mrf.mxu0
    %v718 = vadd.f32 0.0, %v717
    %719 = vmatmul.bf16.gmra.mxu0 %v684
    %v720 = vpop.f32.mrf.mxu0
    %v721 = vadd.f32 0.0, %v720
    %v722 = vpop.f32.mrf.mxu0
    %v723 = vadd.f32 0.0, %v722
    %724 = vmatmul.bf16.gmra.mxu0 %v687
    %v725 = vpop.f32.mrf.mxu0
    %v726 = vadd.f32 0.0, %v725
    %v727 = vpop.f32.mrf.mxu0
    %v728 = vadd.f32 0.0, %v727
    %729 = vmatmul.bf16.gmra.mxu0 %v690
    %v730 = vpop.f32.mrf.mxu0
    %v731 = vadd.f32 0.0, %v730
    %v732 = vpop.f32.mrf.mxu0
    %v733 = vadd.f32 0.0, %v732
    %734 = vmatmul.bf16.gmra.mxu0 %v693
    %v735 = vpop.f32.mrf.mxu0
    %v736 = vadd.f32 0.0, %v735
    %v737 = vpop.f32.mrf.mxu0
    %v738 = vadd.f32 0.0, %v737
    %739 = vmatmul.bf16.gmra.mxu0 %v696
    %v740 = vpop.f32.mrf.mxu0
    %v741 = vadd.f32 0.0, %v740
    %v742 = vpop.f32.mrf.mxu0
    %v743 = vadd.f32 0.0, %v742
    %744 = vmatmul.bf16.gmra.mxu0 %v699
    %v745 = vpop.f32.mrf.mxu0
    %v746 = vadd.f32 0.0, %v745
    %v747 = vpop.f32.mrf.mxu0
    %v748 = vadd.f32 0.0, %v747
    %749 = vdwg.mxu0
    %v750 = vadd.f32 %v69, %v711
    %v751 = vadd.f32 %v70, %v713
    %v752 = vadd.f32 %v71, %v716
    %v753 = vadd.f32 %v72, %v718
    %v754 = vadd.f32 %v73, %v721
    %v755 = vadd.f32 %v74, %v723
    %v756 = vadd.f32 %v75, %v726
    %v757 = vadd.f32 %v76, %v728
    %v758 = vadd.f32 %v77, %v731
    %v759 = vadd.f32 %v78, %v733
    %v760 = vadd.f32 %v79, %v736
    %v761 = vadd.f32 %v80, %v738
    %v762 = vadd.f32 %v81, %v741
    %v763 = vadd.f32 %v82, %v743
    %v764 = vadd.f32 %v83, %v746
    %v765 = vadd.f32 %v84, %v748
    %v766 = vld [vmem:[%s6] sm:$0x1]
    %v767 = vperm.slane %v766, 0
    %v768 = vadd.f32 %v750, %v767
    %v769 = vadd.f32 %v751, %v767
    %v770 = vadd.f32 %v752, %v767
    %v771 = vadd.f32 %v753, %v767
    %v772 = vadd.f32 %v754, %v767
    %v773 = vadd.f32 %v755, %v767
    %v774 = vadd.f32 %v756, %v767
    %v775 = vadd.f32 %v757, %v767
    %v776 = vadd.f32 %v758, %v767
    %v777 = vadd.f32 %v759, %v767
    %v778 = vadd.f32 %v760, %v767
    %v779 = vadd.f32 %v761, %v767
    %v780 = vadd.f32 %v762, %v767
    %v781 = vadd.f32 %v763, %v767
    %v782 = vadd.f32 %v764, %v767
    %v783 = vadd.f32 %v765, %v767
    %v784 = vsel %vm85, %v768, 0.0
    %785 = vadd.xlane.f32.xlu0 %v784
    %v786 = vpop.xlane.xlu0 %785
    %v787 = vsel %vm85, %v769, 0.0
    %788 = vadd.xlane.f32.xlu0 %v787
    %v789 = vpop.xlane.xlu0 %788
    %v790 = vsel %vm85, %v770, 0.0
    %791 = vadd.xlane.f32.xlu0 %v790
    %v792 = vpop.xlane.xlu0 %791
    %v793 = vsel %vm85, %v771, 0.0
    %794 = vadd.xlane.f32.xlu0 %v793
    %v795 = vpop.xlane.xlu0 %794
    %v796 = vsel %vm85, %v772, 0.0
    %797 = vadd.xlane.f32.xlu0 %v796
    %v798 = vpop.xlane.xlu0 %797
    %v799 = vsel %vm85, %v773, 0.0
    %800 = vadd.xlane.f32.xlu0 %v799
    %v801 = vpop.xlane.xlu0 %800
    %v802 = vsel %vm85, %v774, 0.0
    %803 = vadd.xlane.f32.xlu0 %v802
    %v804 = vpop.xlane.xlu0 %803
    %v805 = vsel %vm85, %v775, 0.0
    %806 = vadd.xlane.f32.xlu0 %v805
    %v807 = vpop.xlane.xlu0 %806
    %v808 = vsel %vm85, %v776, 0.0
    %809 = vadd.xlane.f32.xlu0 %v808
    %v810 = vpop.xlane.xlu0 %809
    %v811 = vsel %vm85, %v777, 0.0
    %812 = vadd.xlane.f32.xlu0 %v811
    %v813 = vpop.xlane.xlu0 %812
    %v814 = vsel %vm85, %v778, 0.0
    %815 = vadd.xlane.f32.xlu0 %v814
    %v816 = vpop.xlane.xlu0 %815
    %v817 = vsel %vm85, %v779, 0.0
    %818 = vadd.xlane.f32.xlu0 %v817
    %v819 = vpop.xlane.xlu0 %818
    %v820 = vsel %vm85, %v780, 0.0
    %821 = vadd.xlane.f32.xlu0 %v820
    %v822 = vpop.xlane.xlu0 %821
    %v823 = vsel %vm85, %v781, 0.0
    %824 = vadd.xlane.f32.xlu0 %v823
    %v825 = vpop.xlane.xlu0 %824
    %v826 = vsel %vm85, %v782, 0.0
    %827 = vadd.xlane.f32.xlu0 %v826
    %v828 = vpop.xlane.xlu0 %827
    %v829 = vsel %vm85, %v783, 0.0
    %830 = vadd.xlane.f32.xlu0 %v829
    %v831 = vpop.xlane.xlu0 %830
    %v832 = vmul.f32 %v768, %v768
    %v833 = vmul.f32 %v769, %v769
    %v834 = vmul.f32 %v770, %v770
    %v835 = vmul.f32 %v771, %v771
    %v836 = vmul.f32 %v772, %v772
    %v837 = vmul.f32 %v773, %v773
    %v838 = vmul.f32 %v774, %v774
    %v839 = vmul.f32 %v775, %v775
    %v840 = vmul.f32 %v776, %v776
    %v841 = vmul.f32 %v777, %v777
    %v842 = vmul.f32 %v778, %v778
    %v843 = vmul.f32 %v779, %v779
    %v844 = vmul.f32 %v780, %v780
    %v845 = vmul.f32 %v781, %v781
    %v846 = vmul.f32 %v782, %v782
    %v847 = vmul.f32 %v783, %v783
    %v848 = vsel %vm85, %v832, 0.0
    %849 = vadd.xlane.f32.xlu0 %v848
    %v850 = vpop.xlane.xlu0 %849
    %v851 = vsel %vm85, %v833, 0.0
    %852 = vadd.xlane.f32.xlu0 %v851
    %v853 = vpop.xlane.xlu0 %852
    %v854 = vsel %vm85, %v834, 0.0
    %855 = vadd.xlane.f32.xlu0 %v854
    %v856 = vpop.xlane.xlu0 %855
    %v857 = vsel %vm85, %v835, 0.0
    %858 = vadd.xlane.f32.xlu0 %v857
    %v859 = vpop.xlane.xlu0 %858
    %v860 = vsel %vm85, %v836, 0.0
    %861 = vadd.xlane.f32.xlu0 %v860
    %v862 = vpop.xlane.xlu0 %861
    %v863 = vsel %vm85, %v837, 0.0
    %864 = vadd.xlane.f32.xlu0 %v863
    %v865 = vpop.xlane.xlu0 %864
    %v866 = vsel %vm85, %v838, 0.0
    %867 = vadd.xlane.f32.xlu0 %v866
    %v868 = vpop.xlane.xlu0 %867
    %v869 = vsel %vm85, %v839, 0.0
    %870 = vadd.xlane.f32.xlu0 %v869
    %v871 = vpop.xlane.xlu0 %870
    %v872 = vsel %vm85, %v840, 0.0
    %873 = vadd.xlane.f32.xlu0 %v872
    %v874 = vpop.xlane.xlu0 %873
    %v875 = vsel %vm85, %v841, 0.0
    %876 = vadd.xlane.f32.xlu0 %v875
    %v877 = vpop.xlane.xlu0 %876
    %v878 = vsel %vm85, %v842, 0.0
    %879 = vadd.xlane.f32.xlu0 %v878
    %v880 = vpop.xlane.xlu0 %879
    %v881 = vsel %vm85, %v843, 0.0
    %882 = vadd.xlane.f32.xlu0 %v881
    %v883 = vpop.xlane.xlu0 %882
    %v884 = vsel %vm85, %v844, 0.0
    %885 = vadd.xlane.f32.xlu0 %v884
    %v886 = vpop.xlane.xlu0 %885
    %v887 = vsel %vm85, %v845, 0.0
    %888 = vadd.xlane.f32.xlu0 %v887
    %v889 = vpop.xlane.xlu0 %888
    %v890 = vsel %vm85, %v846, 0.0
    %891 = vadd.xlane.f32.xlu0 %v890
    %v892 = vpop.xlane.xlu0 %891
    %v893 = vsel %vm85, %v847, 0.0
    %894 = vadd.xlane.f32.xlu0 %v893
    %v895 = vpop.xlane.xlu0 %894
    %v896 = vmul.f32 %v786, 0.015625
    %v897 = vmul.f32 %v789, 0.015625
    %v898 = vmul.f32 %v792, 0.015625
    %v899 = vmul.f32 %v795, 0.015625
    %v900 = vmul.f32 %v798, 0.015625
    %v901 = vmul.f32 %v801, 0.015625
    %v902 = vmul.f32 %v804, 0.015625
    %v903 = vmul.f32 %v807, 0.015625
    %v904 = vmul.f32 %v810, 0.015625
    %v905 = vmul.f32 %v813, 0.015625
    %v906 = vmul.f32 %v816, 0.015625
    %v907 = vmul.f32 %v819, 0.015625
    %v908 = vmul.f32 %v822, 0.015625
    %v909 = vmul.f32 %v825, 0.015625
    %v910 = vmul.f32 %v828, 0.015625
    %v911 = vmul.f32 %v831, 0.015625
    %v912 = vmul.f32 %v850, 0.015625
    %v913 = vmul.f32 %v853, 0.015625
    %v914 = vmul.f32 %v856, 0.015625
    %v915 = vmul.f32 %v859, 0.015625
    %v916 = vmul.f32 %v862, 0.015625
    %v917 = vmul.f32 %v865, 0.015625
    %v918 = vmul.f32 %v868, 0.015625
    %v919 = vmul.f32 %v871, 0.015625
    %v920 = vmul.f32 %v874, 0.015625
    %v921 = vmul.f32 %v877, 0.015625
    %v922 = vmul.f32 %v880, 0.015625
    %v923 = vmul.f32 %v883, 0.015625
    %v924 = vmul.f32 %v886, 0.015625
    %v925 = vmul.f32 %v889, 0.015625
    %v926 = vmul.f32 %v892, 0.015625
    %v927 = vmul.f32 %v895, 0.015625
    %v928 = vmul.f32 %v896, %v896
    %v929 = vmul.f32 %v897, %v897
    %v930 = vmul.f32 %v898, %v898
    %v931 = vmul.f32 %v899, %v899
    %v932 = vmul.f32 %v900, %v900
    %v933 = vmul.f32 %v901, %v901
    %v934 = vmul.f32 %v902, %v902
    %v935 = vmul.f32 %v903, %v903
    %v936 = vmul.f32 %v904, %v904
    %v937 = vmul.f32 %v905, %v905
    %v938 = vmul.f32 %v906, %v906
    %v939 = vmul.f32 %v907, %v907
    %v940 = vmul.f32 %v908, %v908
    %v941 = vmul.f32 %v909, %v909
    %v942 = vmul.f32 %v910, %v910
    %v943 = vmul.f32 %v911, %v911
    %v944 = vsub.f32 %v912, %v928
    %v945 = vsub.f32 %v913, %v929
    %v946 = vsub.f32 %v914, %v930
    %v947 = vsub.f32 %v915, %v931
    %v948 = vsub.f32 %v916, %v932
    %v949 = vsub.f32 %v917, %v933
    %v950 = vsub.f32 %v918, %v934
    %v951 = vsub.f32 %v919, %v935
    %v952 = vsub.f32 %v920, %v936
    %v953 = vsub.f32 %v921, %v937
    %v954 = vsub.f32 %v922, %v938
    %v955 = vsub.f32 %v923, %v939
    %v956 = vsub.f32 %v924, %v940
    %v957 = vsub.f32 %v925, %v941
    %v958 = vsub.f32 %v926, %v942
    %v959 = vsub.f32 %v927, %v943
    %v960 = vsub.f32 %v768, %v896
    %v961 = vsub.f32 %v769, %v897
    %v962 = vsub.f32 %v770, %v898
    %v963 = vsub.f32 %v771, %v899
    %v964 = vsub.f32 %v772, %v900
    %v965 = vsub.f32 %v773, %v901
    %v966 = vsub.f32 %v774, %v902
    %v967 = vsub.f32 %v775, %v903
    %v968 = vsub.f32 %v776, %v904
    %v969 = vsub.f32 %v777, %v905
    %v970 = vsub.f32 %v778, %v906
    %v971 = vsub.f32 %v779, %v907
    %v972 = vsub.f32 %v780, %v908
    %v973 = vsub.f32 %v781, %v909
    %v974 = vsub.f32 %v782, %v910
    %v975 = vsub.f32 %v783, %v911
    %v976 = vadd.f32 %v944, 1e-05
    %v977 = vadd.f32 %v945, 1e-05
    %v978 = vadd.f32 %v946, 1e-05
    %v979 = vadd.f32 %v947, 1e-05
    %v980 = vadd.f32 %v948, 1e-05
    %v981 = vadd.f32 %v949, 1e-05
    %v982 = vadd.f32 %v950, 1e-05
    %v983 = vadd.f32 %v951, 1e-05
    %v984 = vadd.f32 %v952, 1e-05
    %v985 = vadd.f32 %v953, 1e-05
    %v986 = vadd.f32 %v954, 1e-05
    %v987 = vadd.f32 %v955, 1e-05
    %v988 = vadd.f32 %v956, 1e-05
    %v989 = vadd.f32 %v957, 1e-05
    %v990 = vadd.f32 %v958, 1e-05
    %v991 = vadd.f32 %v959, 1e-05
    %v992 = vrsqrt.pop %v976
    %v993 = vmul.f32 %v992, %v976
    %v994 = vmul.f32 %v993, %v992
    %v995 = vmul.f32 0.5, %v994
    %v996 = vsub.f32 1.5, %v995
    %v997 = vmul.f32 %v992, %v996
    %vm998 = vweird.f32 %v976
    %vm999 = vweird.f32 %v992
    %vm1000 = vmor %vm998, %vm999
    %v1001 = vsel %vm1000, %v992, %v997
    %v1002 = vrsqrt.pop %v977
    %v1003 = vmul.f32 %v1002, %v977
    %v1004 = vmul.f32 %v1003, %v1002
    %v1005 = vmul.f32 0.5, %v1004
    %v1006 = vsub.f32 1.5, %v1005
    %v1007 = vmul.f32 %v1002, %v1006
    %vm1008 = vweird.f32 %v977
    %vm1009 = vweird.f32 %v1002
    %vm1010 = vmor %vm1008, %vm1009
    %v1011 = vsel %vm1010, %v1002, %v1007
    %v1012 = vrsqrt.pop %v978
    %v1013 = vmul.f32 %v1012, %v978
    %v1014 = vmul.f32 %v1013, %v1012
    %v1015 = vmul.f32 0.5, %v1014
    %v1016 = vsub.f32 1.5, %v1015
    %v1017 = vmul.f32 %v1012, %v1016
    %vm1018 = vweird.f32 %v978
    %vm1019 = vweird.f32 %v1012
    %vm1020 = vmor %vm1018, %vm1019
    %v1021 = vsel %vm1020, %v1012, %v1017
    %v1022 = vrsqrt.pop %v979
    %v1023 = vmul.f32 %v1022, %v979
    %v1024 = vmul.f32 %v1023, %v1022
    %v1025 = vmul.f32 0.5, %v1024
    %v1026 = vsub.f32 1.5, %v1025
    %v1027 = vmul.f32 %v1022, %v1026
    %vm1028 = vweird.f32 %v979
    %vm1029 = vweird.f32 %v1022
    %vm1030 = vmor %vm1028, %vm1029
    %v1031 = vsel %vm1030, %v1022, %v1027
    %v1032 = vrsqrt.pop %v980
    %v1033 = vmul.f32 %v1032, %v980
    %v1034 = vmul.f32 %v1033, %v1032
    %v1035 = vmul.f32 0.5, %v1034
    %v1036 = vsub.f32 1.5, %v1035
    %v1037 = vmul.f32 %v1032, %v1036
    %vm1038 = vweird.f32 %v980
    %vm1039 = vweird.f32 %v1032
    %vm1040 = vmor %vm1038, %vm1039
    %v1041 = vsel %vm1040, %v1032, %v1037
    %v1042 = vrsqrt.pop %v981
    %v1043 = vmul.f32 %v1042, %v981
    %v1044 = vmul.f32 %v1043, %v1042
    %v1045 = vmul.f32 0.5, %v1044
    %v1046 = vsub.f32 1.5, %v1045
    %v1047 = vmul.f32 %v1042, %v1046
    %vm1048 = vweird.f32 %v981
    %vm1049 = vweird.f32 %v1042
    %vm1050 = vmor %vm1048, %vm1049
    %v1051 = vsel %vm1050, %v1042, %v1047
    %v1052 = vrsqrt.pop %v982
    %v1053 = vmul.f32 %v1052, %v982
    %v1054 = vmul.f32 %v1053, %v1052
    %v1055 = vmul.f32 0.5, %v1054
    %v1056 = vsub.f32 1.5, %v1055
    %v1057 = vmul.f32 %v1052, %v1056
    %vm1058 = vweird.f32 %v982
    %vm1059 = vweird.f32 %v1052
    %vm1060 = vmor %vm1058, %vm1059
    %v1061 = vsel %vm1060, %v1052, %v1057
    %v1062 = vrsqrt.pop %v983
    %v1063 = vmul.f32 %v1062, %v983
    %v1064 = vmul.f32 %v1063, %v1062
    %v1065 = vmul.f32 0.5, %v1064
    %v1066 = vsub.f32 1.5, %v1065
    %v1067 = vmul.f32 %v1062, %v1066
    %vm1068 = vweird.f32 %v983
    %vm1069 = vweird.f32 %v1062
    %vm1070 = vmor %vm1068, %vm1069
    %v1071 = vsel %vm1070, %v1062, %v1067
    %v1072 = vrsqrt.pop %v984
    %v1073 = vmul.f32 %v1072, %v984
    %v1074 = vmul.f32 %v1073, %v1072
    %v1075 = vmul.f32 0.5, %v1074
    %v1076 = vsub.f32 1.5, %v1075
    %v1077 = vmul.f32 %v1072, %v1076
    %vm1078 = vweird.f32 %v984
    %vm1079 = vweird.f32 %v1072
    %vm1080 = vmor %vm1078, %vm1079
    %v1081 = vsel %vm1080, %v1072, %v1077
    %v1082 = vrsqrt.pop %v985
    %v1083 = vmul.f32 %v1082, %v985
    %v1084 = vmul.f32 %v1083, %v1082
    %v1085 = vmul.f32 0.5, %v1084
    %v1086 = vsub.f32 1.5, %v1085
    %v1087 = vmul.f32 %v1082, %v1086
    %vm1088 = vweird.f32 %v985
    %vm1089 = vweird.f32 %v1082
    %vm1090 = vmor %vm1088, %vm1089
    %v1091 = vsel %vm1090, %v1082, %v1087
    %v1092 = vrsqrt.pop %v986
    %v1093 = vmul.f32 %v1092, %v986
    %v1094 = vmul.f32 %v1093, %v1092
    %v1095 = vmul.f32 0.5, %v1094
    %v1096 = vsub.f32 1.5, %v1095
    %v1097 = vmul.f32 %v1092, %v1096
    %vm1098 = vweird.f32 %v986
    %vm1099 = vweird.f32 %v1092
    %vm1100 = vmor %vm1098, %vm1099
    %v1101 = vsel %vm1100, %v1092, %v1097
    %v1102 = vrsqrt.pop %v987
    %v1103 = vmul.f32 %v1102, %v987
    %v1104 = vmul.f32 %v1103, %v1102
    %v1105 = vmul.f32 0.5, %v1104
    %v1106 = vsub.f32 1.5, %v1105
    %v1107 = vmul.f32 %v1102, %v1106
    %vm1108 = vweird.f32 %v987
    %vm1109 = vweird.f32 %v1102
    %vm1110 = vmor %vm1108, %vm1109
    %v1111 = vsel %vm1110, %v1102, %v1107
    %v1112 = vrsqrt.pop %v988
    %v1113 = vmul.f32 %v1112, %v988
    %v1114 = vmul.f32 %v1113, %v1112
    %v1115 = vmul.f32 0.5, %v1114
    %v1116 = vsub.f32 1.5, %v1115
    %v1117 = vmul.f32 %v1112, %v1116
    %vm1118 = vweird.f32 %v988
    %vm1119 = vweird.f32 %v1112
    %vm1120 = vmor %vm1118, %vm1119
    %v1121 = vsel %vm1120, %v1112, %v1117
    %v1122 = vrsqrt.pop %v989
    %v1123 = vmul.f32 %v1122, %v989
    %v1124 = vmul.f32 %v1123, %v1122
    %v1125 = vmul.f32 0.5, %v1124
    %v1126 = vsub.f32 1.5, %v1125
    %v1127 = vmul.f32 %v1122, %v1126
    %vm1128 = vweird.f32 %v989
    %vm1129 = vweird.f32 %v1122
    %vm1130 = vmor %vm1128, %vm1129
    %v1131 = vsel %vm1130, %v1122, %v1127
    %v1132 = vrsqrt.pop %v990
    %v1133 = vmul.f32 %v1132, %v990
    %v1134 = vmul.f32 %v1133, %v1132
    %v1135 = vmul.f32 0.5, %v1134
    %v1136 = vsub.f32 1.5, %v1135
    %v1137 = vmul.f32 %v1132, %v1136
    %vm1138 = vweird.f32 %v990
    %vm1139 = vweird.f32 %v1132
    %vm1140 = vmor %vm1138, %vm1139
    %v1141 = vsel %vm1140, %v1132, %v1137
    %v1142 = vrsqrt.pop %v991
    %v1143 = vmul.f32 %v1142, %v991
    %v1144 = vmul.f32 %v1143, %v1142
    %v1145 = vmul.f32 0.5, %v1144
    %v1146 = vsub.f32 1.5, %v1145
    %v1147 = vmul.f32 %v1142, %v1146
    %vm1148 = vweird.f32 %v991
    %vm1149 = vweird.f32 %v1142
    %vm1150 = vmor %vm1148, %vm1149
    %v1151 = vsel %vm1150, %v1142, %v1147
    %v1152 = vmul.f32 %v960, %v1001
    %v1153 = vmul.f32 %v961, %v1011
    %v1154 = vmul.f32 %v962, %v1021
    %v1155 = vmul.f32 %v963, %v1031
    %v1156 = vmul.f32 %v964, %v1041
    %v1157 = vmul.f32 %v965, %v1051
    %v1158 = vmul.f32 %v966, %v1061
    %v1159 = vmul.f32 %v967, %v1071
    %v1160 = vmul.f32 %v968, %v1081
    %v1161 = vmul.f32 %v969, %v1091
    %v1162 = vmul.f32 %v970, %v1101
    %v1163 = vmul.f32 %v971, %v1111
    %v1164 = vmul.f32 %v972, %v1121
    %v1165 = vmul.f32 %v973, %v1131
    %v1166 = vmul.f32 %v974, %v1141
    %v1167 = vmul.f32 %v975, %v1151
    %v1168 = vld [vmem:[%s1 + $0x1] sm:$0x1]
    %v1169 = vperm.slane %v1168, 0
    %v1170 = vmul.f32 %v1152, %v1169
    %v1171 = vmul.f32 %v1153, %v1169
    %v1172 = vmul.f32 %v1154, %v1169
    %v1173 = vmul.f32 %v1155, %v1169
    %v1174 = vmul.f32 %v1156, %v1169
    %v1175 = vmul.f32 %v1157, %v1169
    %v1176 = vmul.f32 %v1158, %v1169
    %v1177 = vmul.f32 %v1159, %v1169
    %v1178 = vmul.f32 %v1160, %v1169
    %v1179 = vmul.f32 %v1161, %v1169
    %v1180 = vmul.f32 %v1162, %v1169
    %v1181 = vmul.f32 %v1163, %v1169
    %v1182 = vmul.f32 %v1164, %v1169
    %v1183 = vmul.f32 %v1165, %v1169
    %v1184 = vmul.f32 %v1166, %v1169
    %v1185 = vmul.f32 %v1167, %v1169
    %v1186 = vld [vmem:[%s2 + $0x1] sm:$0x1]
    %v1187 = vperm.slane %v1186, 0
    %v1188 = vadd.f32 %v1170, %v1187
    %v1189 = vadd.f32 %v1171, %v1187
    %v1190 = vadd.f32 %v1172, %v1187
    %v1191 = vadd.f32 %v1173, %v1187
    %v1192 = vadd.f32 %v1174, %v1187
    %v1193 = vadd.f32 %v1175, %v1187
    %v1194 = vadd.f32 %v1176, %v1187
    %v1195 = vadd.f32 %v1177, %v1187
    %v1196 = vadd.f32 %v1178, %v1187
    %v1197 = vadd.f32 %v1179, %v1187
    %v1198 = vadd.f32 %v1180, %v1187
    %v1199 = vadd.f32 %v1181, %v1187
    %v1200 = vadd.f32 %v1182, %v1187
    %v1201 = vadd.f32 %v1183, %v1187
    %v1202 = vadd.f32 %v1184, %v1187
    %v1203 = vadd.f32 %v1185, %v1187
    %v1204 = vpack.c.bf16 %v1189, %v1188
    %v1205 = vpack.c.bf16 %v1191, %v1190
    %v1206 = vpack.c.bf16 %v1193, %v1192
    %v1207 = vpack.c.bf16 %v1195, %v1194
    %v1208 = vpack.c.bf16 %v1197, %v1196
    %v1209 = vpack.c.bf16 %v1199, %v1198
    %v1210 = vpack.c.bf16 %v1201, %v1200
    %v1211 = vpack.c.bf16 %v1203, %v1202
    %s1212 = scalar_lea.vmem %s3, 32
    %v1213 = vld [vmem:[%s1212] sm:$0xf]
    %v1214 = vld [vmem:[%s1212 + $0x4] sm:$0xf]
    %v1215 = vld [vmem:[%s1212 + $0x8] sm:$0xf]
    %v1216 = vld [vmem:[%s1212 + $0xc] sm:$0xf]
    %v1217 = vld [vmem:[%s1212 + $0x10] sm:$0xf]
    %v1218 = vld [vmem:[%s1212 + $0x14] sm:$0xf]
    %v1219 = vld [vmem:[%s1212 + $0x18] sm:$0xf]
    %v1220 = vld [vmem:[%s1212 + $0x1c] sm:$0xf]
    %v1221 = vld [vmem:[%s4 + $0x1] sm:$0x1]
    %v1222 = vperm.slane %v1221, 0
    %v1231 = vunpack.c.l.b16 %v1213
    %v1232 = vunpack.c.l.b16 %v1214
    %v1233 = vunpack.c.l.b16 %v1215
    %v1234 = vunpack.c.l.b16 %v1216
    %v1235 = vunpack.c.l.b16 %v1217
    %v1236 = vunpack.c.l.b16 %v1218
    %v1237 = vunpack.c.l.b16 %v1219
    %v1238 = vunpack.c.l.b16 %v1220
    %v1239 = vpack.c.b16 %v1232, %v1231
    %v1240 = vpack.c.b16 %v1234, %v1233
    %v1241 = vpack.c.b16 %v1236, %v1235
    %v1242 = vpack.c.b16 %v1238, %v1237
    %v1248 = vsel %vm85, %v1204, 0
    %v1251 = vsel %vm85, %v1205, 0
    %v1254 = vsel %vm85, %v1206, 0
    %v1257 = vsel %vm85, %v1207, 0
    %v1260 = vsel %vm85, %v1208, 0
    %v1263 = vsel %vm85, %v1209, 0
    %v1266 = vsel %vm85, %v1210, 0
    %v1269 = vsel %vm85, %v1211, 0
    %1271 = vmatpush.bf16.msra.mxu0 0
    %1272 = vmatpush.bf16.msra.mxu0 0
    %1273 = vmatpush.bf16.msra.mxu0 0
    %1274 = vmatpush.bf16.msra.mxu0 0
    %1275 = vmatpush.bf16.msra.mxu0 %v1242
    %1276 = vmatpush.bf16.msra.mxu0 %v1241
    %1277 = vmatpush.bf16.msra.mxu0 %v1240
    %1278 = vmatpush.bf16.msra.mxu0 %v1239
    %1279 = vmatmul.bf16.gmra.mxu0 %v1248
    %v1280 = vpop.f32.mrf.mxu0
    %v1281 = vadd.f32 %v1222, %v1280
    %v1282 = vpop.f32.mrf.mxu0
    %v1283 = vadd.f32 %v1222, %v1282
    %1284 = vmatmul.bf16.gmra.mxu0 %v1251
    %v1285 = vpop.f32.mrf.mxu0
    %v1286 = vadd.f32 %v1222, %v1285
    %v1287 = vpop.f32.mrf.mxu0
    %v1288 = vadd.f32 %v1222, %v1287
    %1289 = vmatmul.bf16.gmra.mxu0 %v1254
    %v1290 = vpop.f32.mrf.mxu0
    %v1291 = vadd.f32 %v1222, %v1290
    %v1292 = vpop.f32.mrf.mxu0
    %v1293 = vadd.f32 %v1222, %v1292
    %1294 = vmatmul.bf16.gmra.mxu0 %v1257
    %v1295 = vpop.f32.mrf.mxu0
    %v1296 = vadd.f32 %v1222, %v1295
    %v1297 = vpop.f32.mrf.mxu0
    %v1298 = vadd.f32 %v1222, %v1297
    %1299 = vmatmul.bf16.gmra.mxu0 %v1260
    %v1300 = vpop.f32.mrf.mxu0
    %v1301 = vadd.f32 %v1222, %v1300
    %v1302 = vpop.f32.mrf.mxu0
    %v1303 = vadd.f32 %v1222, %v1302
    %1304 = vmatmul.bf16.gmra.mxu0 %v1263
    %v1305 = vpop.f32.mrf.mxu0
    %v1306 = vadd.f32 %v1222, %v1305
    %v1307 = vpop.f32.mrf.mxu0
    %v1308 = vadd.f32 %v1222, %v1307
    %1309 = vmatmul.bf16.gmra.mxu0 %v1266
    %v1310 = vpop.f32.mrf.mxu0
    %v1311 = vadd.f32 %v1222, %v1310
    %v1312 = vpop.f32.mrf.mxu0
    %v1313 = vadd.f32 %v1222, %v1312
    %1314 = vmatmul.bf16.gmra.mxu0 %v1269
    %v1315 = vpop.f32.mrf.mxu0
    %v1316 = vadd.f32 %v1222, %v1315
    %v1317 = vpop.f32.mrf.mxu0
    %v1318 = vadd.f32 %v1222, %v1317
    %1319 = vdwg.mxu0
    %v1320 = vmax.f32 %v1281, 0.0
    %v1321 = vmax.f32 %v1283, 0.0
    %v1322 = vmax.f32 %v1286, 0.0
    %v1323 = vmax.f32 %v1288, 0.0
    %v1324 = vmax.f32 %v1291, 0.0
    %v1325 = vmax.f32 %v1293, 0.0
    %v1326 = vmax.f32 %v1296, 0.0
    %v1327 = vmax.f32 %v1298, 0.0
    %v1328 = vmax.f32 %v1301, 0.0
    %v1329 = vmax.f32 %v1303, 0.0
    %v1330 = vmax.f32 %v1306, 0.0
    %v1331 = vmax.f32 %v1308, 0.0
    %v1332 = vmax.f32 %v1311, 0.0
    %v1333 = vmax.f32 %v1313, 0.0
    %v1334 = vmax.f32 %v1316, 0.0
    %v1335 = vmax.f32 %v1318, 0.0
    %v1336 = vpack.c.bf16 %v1321, %v1320
    %v1337 = vpack.c.bf16 %v1323, %v1322
    %v1338 = vpack.c.bf16 %v1325, %v1324
    %v1339 = vpack.c.bf16 %v1327, %v1326
    %v1340 = vpack.c.bf16 %v1329, %v1328
    %v1341 = vpack.c.bf16 %v1331, %v1330
    %v1342 = vpack.c.bf16 %v1333, %v1332
    %v1343 = vpack.c.bf16 %v1335, %v1334
    %s1344 = scalar_lea.vmem [#allocation5], 32
    %v1345 = vld [vmem:[%s1344] sm:$0xf]
    %v1346 = vld [vmem:[%s1344 + $0x4] sm:$0xf]
    %v1347 = vld [vmem:[%s1344 + $0x8] sm:$0xf]
    %v1348 = vld [vmem:[%s1344 + $0xc] sm:$0xf]
    %v1349 = vld [vmem:[%s1344 + $0x10] sm:$0xf]
    %v1350 = vld [vmem:[%s1344 + $0x14] sm:$0xf]
    %v1351 = vld [vmem:[%s1344 + $0x18] sm:$0xf]
    %v1352 = vld [vmem:[%s1344 + $0x1c] sm:$0xf]
    %v1361 = vunpack.c.l.b16 %v1345
    %v1362 = vunpack.c.l.b16 %v1346
    %v1363 = vunpack.c.l.b16 %v1347
    %v1364 = vunpack.c.l.b16 %v1348
    %v1365 = vunpack.c.l.b16 %v1349
    %v1366 = vunpack.c.l.b16 %v1350
    %v1367 = vunpack.c.l.b16 %v1351
    %v1368 = vunpack.c.l.b16 %v1352
    %v1369 = vpack.c.b16 %v1362, %v1361
    %v1370 = vpack.c.b16 %v1364, %v1363
    %v1371 = vpack.c.b16 %v1366, %v1365
    %v1372 = vpack.c.b16 %v1368, %v1367
    %v1378 = vsel %vm85, %v1336, 0
    %v1381 = vsel %vm85, %v1337, 0
    %v1384 = vsel %vm85, %v1338, 0
    %v1387 = vsel %vm85, %v1339, 0
    %v1390 = vsel %vm85, %v1340, 0
    %v1393 = vsel %vm85, %v1341, 0
    %v1396 = vsel %vm85, %v1342, 0
    %v1399 = vsel %vm85, %v1343, 0
    %1401 = vmatpush.bf16.msra.mxu0 0
    %1402 = vmatpush.bf16.msra.mxu0 0
    %1403 = vmatpush.bf16.msra.mxu0 0
    %1404 = vmatpush.bf16.msra.mxu0 0
    %1405 = vmatpush.bf16.msra.mxu0 %v1372
    %1406 = vmatpush.bf16.msra.mxu0 %v1371
    %1407 = vmatpush.bf16.msra.mxu0 %v1370
    %1408 = vmatpush.bf16.msra.mxu0 %v1369
    %1409 = vmatmul.bf16.gmra.mxu0 %v1378
    %v1410 = vpop.f32.mrf.mxu0
    %v1411 = vadd.f32 0.0, %v1410
    %v1412 = vpop.f32.mrf.mxu0
    %v1413 = vadd.f32 0.0, %v1412
    %1414 = vmatmul.bf16.gmra.mxu0 %v1381
    %v1415 = vpop.f32.mrf.mxu0
    %v1416 = vadd.f32 0.0, %v1415
    %v1417 = vpop.f32.mrf.mxu0
    %v1418 = vadd.f32 0.0, %v1417
    %1419 = vmatmul.bf16.gmra.mxu0 %v1384
    %v1420 = vpop.f32.mrf.mxu0
    %v1421 = vadd.f32 0.0, %v1420
    %v1422 = vpop.f32.mrf.mxu0
    %v1423 = vadd.f32 0.0, %v1422
    %1424 = vmatmul.bf16.gmra.mxu0 %v1387
    %v1425 = vpop.f32.mrf.mxu0
    %v1426 = vadd.f32 0.0, %v1425
    %v1427 = vpop.f32.mrf.mxu0
    %v1428 = vadd.f32 0.0, %v1427
    %1429 = vmatmul.bf16.gmra.mxu0 %v1390
    %v1430 = vpop.f32.mrf.mxu0
    %v1431 = vadd.f32 0.0, %v1430
    %v1432 = vpop.f32.mrf.mxu0
    %v1433 = vadd.f32 0.0, %v1432
    %1434 = vmatmul.bf16.gmra.mxu0 %v1393
    %v1435 = vpop.f32.mrf.mxu0
    %v1436 = vadd.f32 0.0, %v1435
    %v1437 = vpop.f32.mrf.mxu0
    %v1438 = vadd.f32 0.0, %v1437
    %1439 = vmatmul.bf16.gmra.mxu0 %v1396
    %v1440 = vpop.f32.mrf.mxu0
    %v1441 = vadd.f32 0.0, %v1440
    %v1442 = vpop.f32.mrf.mxu0
    %v1443 = vadd.f32 0.0, %v1442
    %1444 = vmatmul.bf16.gmra.mxu0 %v1399
    %v1445 = vpop.f32.mrf.mxu0
    %v1446 = vadd.f32 0.0, %v1445
    %v1447 = vpop.f32.mrf.mxu0
    %v1448 = vadd.f32 0.0, %v1447
    %1449 = vdwg.mxu0
    %v1450 = vadd.f32 %v768, %v1411
    %v1451 = vadd.f32 %v769, %v1413
    %v1452 = vadd.f32 %v770, %v1416
    %v1453 = vadd.f32 %v771, %v1418
    %v1454 = vadd.f32 %v772, %v1421
    %v1455 = vadd.f32 %v773, %v1423
    %v1456 = vadd.f32 %v774, %v1426
    %v1457 = vadd.f32 %v775, %v1428
    %v1458 = vadd.f32 %v776, %v1431
    %v1459 = vadd.f32 %v777, %v1433
    %v1460 = vadd.f32 %v778, %v1436
    %v1461 = vadd.f32 %v779, %v1438
    %v1462 = vadd.f32 %v780, %v1441
    %v1463 = vadd.f32 %v781, %v1443
    %v1464 = vadd.f32 %v782, %v1446
    %v1465 = vadd.f32 %v783, %v1448
    %v1466 = vld [vmem:[%s6 + $0x1] sm:$0x1]
    %v1467 = vperm.slane %v1466, 0
    %v1468 = vadd.f32 %v1450, %v1467
    %v1469 = vadd.f32 %v1451, %v1467
    %v1470 = vadd.f32 %v1452, %v1467
    %v1471 = vadd.f32 %v1453, %v1467
    %v1472 = vadd.f32 %v1454, %v1467
    %v1473 = vadd.f32 %v1455, %v1467
    %v1474 = vadd.f32 %v1456, %v1467
    %v1475 = vadd.f32 %v1457, %v1467
    %v1476 = vadd.f32 %v1458, %v1467
    %v1477 = vadd.f32 %v1459, %v1467
    %v1478 = vadd.f32 %v1460, %v1467
    %v1479 = vadd.f32 %v1461, %v1467
    %v1480 = vadd.f32 %v1462, %v1467
    %v1481 = vadd.f32 %v1463, %v1467
    %v1482 = vadd.f32 %v1464, %v1467
    %v1483 = vadd.f32 %v1465, %v1467
    %v1484 = vpack.c.bf16 %v1469, %v1468
    %v1485 = vpack.c.bf16 %v1471, %v1470
    %v1486 = vpack.c.bf16 %v1473, %v1472
    %v1487 = vpack.c.bf16 %v1475, %v1474
    %v1488 = vpack.c.bf16 %v1477, %v1476
    %v1489 = vpack.c.bf16 %v1479, %v1478
    %v1490 = vpack.c.bf16 %v1481, %v1480
    %v1491 = vpack.c.bf16 %v1483, %v1482
    %v1492 = vld [vmem:[%s8] sm:$0xf]
    %v1493 = vld [vmem:[%s8 + $0x4] sm:$0xf]
    %v1494 = vld [vmem:[%s8 + $0x8] sm:$0xf]
    %v1495 = vld [vmem:[%s8 + $0xc] sm:$0xf]
    %v1496 = vld [vmem:[%s8 + $0x10] sm:$0xf]
    %v1497 = vld [vmem:[%s8 + $0x14] sm:$0xf]
    %v1498 = vld [vmem:[%s8 + $0x18] sm:$0xf]
    %v1499 = vld [vmem:[%s8 + $0x1c] sm:$0xf]
    %v1508 = vunpack.c.l.b16 %v1492
    %v1509 = vunpack.c.l.b16 %v1493
    %v1510 = vunpack.c.l.b16 %v1494
    %v1511 = vunpack.c.l.b16 %v1495
    %v1512 = vunpack.c.l.b16 %v1496
    %v1513 = vunpack.c.l.b16 %v1497
    %v1514 = vunpack.c.l.b16 %v1498
    %v1515 = vunpack.c.l.b16 %v1499
    %v1516 = vpack.c.b16 %v1509, %v1508
    %v1517 = vpack.c.b16 %v1511, %v1510
    %v1518 = vpack.c.b16 %v1513, %v1512
    %v1519 = vpack.c.b16 %v1515, %v1514
    %v1525 = vsel %vm85, %v1484, 0
    %v1528 = vsel %vm85, %v1485, 0
    %v1531 = vsel %vm85, %v1486, 0
    %v1534 = vsel %vm85, %v1487, 0
    %v1537 = vsel %vm85, %v1488, 0
    %v1540 = vsel %vm85, %v1489, 0
    %v1543 = vsel %vm85, %v1490, 0
    %v1546 = vsel %vm85, %v1491, 0
    %1548 = vmatpush.bf16.msra.mxu0 0
    %1549 = vmatpush.bf16.msra.mxu0 0
    %1550 = vmatpush.bf16.msra.mxu0 0
    %1551 = vmatpush.bf16.msra.mxu0 0
    %1552 = vmatpush.bf16.msra.mxu0 %v1519
    %1553 = vmatpush.bf16.msra.mxu0 %v1518
    %1554 = vmatpush.bf16.msra.mxu0 %v1517
    %1555 = vmatpush.bf16.msra.mxu0 %v1516
    %1556 = vmatmul.bf16.gmra.mxu0 %v1525
    %v1557 = vpop.f32.mrf.mxu0
    %v1558 = vadd.f32 0.0, %v1557
    %v1559 = vpop.f32.mrf.mxu0
    %v1560 = vadd.f32 0.0, %v1559
    %1561 = vmatmul.bf16.gmra.mxu0 %v1528
    %v1562 = vpop.f32.mrf.mxu0
    %v1563 = vadd.f32 0.0, %v1562
    %v1564 = vpop.f32.mrf.mxu0
    %v1565 = vadd.f32 0.0, %v1564
    %1566 = vmatmul.bf16.gmra.mxu0 %v1531
    %v1567 = vpop.f32.mrf.mxu0
    %v1568 = vadd.f32 0.0, %v1567
    %v1569 = vpop.f32.mrf.mxu0
    %v1570 = vadd.f32 0.0, %v1569
    %1571 = vmatmul.bf16.gmra.mxu0 %v1534
    %v1572 = vpop.f32.mrf.mxu0
    %v1573 = vadd.f32 0.0, %v1572
    %v1574 = vpop.f32.mrf.mxu0
    %v1575 = vadd.f32 0.0, %v1574
    %1576 = vmatmul.bf16.gmra.mxu0 %v1537
    %v1577 = vpop.f32.mrf.mxu0
    %v1578 = vadd.f32 0.0, %v1577
    %v1579 = vpop.f32.mrf.mxu0
    %v1580 = vadd.f32 0.0, %v1579
    %1581 = vmatmul.bf16.gmra.mxu0 %v1540
    %v1582 = vpop.f32.mrf.mxu0
    %v1583 = vadd.f32 0.0, %v1582
    %v1584 = vpop.f32.mrf.mxu0
    %v1585 = vadd.f32 0.0, %v1584
    %1586 = vmatmul.bf16.gmra.mxu0 %v1543
    %v1587 = vpop.f32.mrf.mxu0
    %v1588 = vadd.f32 0.0, %v1587
    %v1589 = vpop.f32.mrf.mxu0
    %v1590 = vadd.f32 0.0, %v1589
    %1591 = vmatmul.bf16.gmra.mxu0 %v1546
    %v1592 = vpop.f32.mrf.mxu0
    %v1593 = vadd.f32 0.0, %v1592
    %v1594 = vpop.f32.mrf.mxu0
    %v1595 = vadd.f32 0.0, %v1594
    %1596 = vdwg.mxu0
    %v1597 = vld [vmem:[%s9] sm:$0xf]
    %1598 = vxpose.xlu0.b32.start [1/16] %v1558, 128
    %1599 = vxpose.xlu0.b32.cont [2/16] %v1560, 128
    %1600 = vxpose.xlu0.b32.cont [3/16] %v1563, 128
    %1601 = vxpose.xlu0.b32.cont [4/16] %v1565, 128
    %1602 = vxpose.xlu0.b32.cont [5/16] %v1568, 128
    %1603 = vxpose.xlu0.b32.cont [6/16] %v1570, 128
    %1604 = vxpose.xlu0.b32.cont [7/16] %v1573, 128
    %1605 = vxpose.xlu0.b32.cont [8/16] %v1575, 128
    %1606 = vxpose.xlu0.b32.cont [9/16] 0.0, 128
    %1607 = vxpose.xlu0.b32.cont [10/16] 0.0, 128
    %1608 = vxpose.xlu0.b32.cont [11/16] 0.0, 128
    %1609 = vxpose.xlu0.b32.cont [12/16] 0.0, 128
    %1610 = vxpose.xlu0.b32.cont [13/16] 0.0, 128
    %1611 = vxpose.xlu0.b32.cont [14/16] 0.0, 128
    %1612 = vxpose.xlu0.b32.cont [15/16] 0.0, 128
    %1613 = vxpose.xlu0.b32.end [16/16] 0.0, 128
    %v1614 = vpop.trf.xlu0
    %v1615 = vpop.trf.xlu0
    %v1616 = vpop.trf.xlu0
    %v1617 = vpop.trf.xlu0
    %v1618 = vpop.trf.xlu0
    %v1619 = vpop.trf.xlu0
    %v1620 = vpop.trf.xlu0
    %v1621 = vpop.trf.xlu0
    %v1622 = vpop.trf.xlu0
    %v1623 = vpop.trf.xlu0
    %v1624 = vpop.trf.xlu0
    %v1625 = vpop.trf.xlu0
    %v1626 = vpop.trf.xlu0
    %v1627 = vpop.trf.xlu0
    %v1628 = vpop.trf.xlu0
    %v1629 = vpop.trf.xlu0
    %v1630 = vpack.c.bf16 %v1614, %v1614
    %v1631 = vld [vmem:[%s7] sm:$0xf]
    %v1632 = vld [vmem:[%s7 + $0x4] sm:$0xf]
    %v1633 = vld [vmem:[%s7 + $0x8] sm:$0xf]
    %v1634 = vld [vmem:[%s7 + $0xc] sm:$0xf]
    %v1635 = vld [vmem:[%s7 + $0x10] sm:$0xf]
    %v1636 = vld [vmem:[%s7 + $0x14] sm:$0xf]
    %v1637 = vld [vmem:[%s7 + $0x18] sm:$0xf]
    %v1638 = vld [vmem:[%s7 + $0x1c] sm:$0xf]
    %v1647 = vunpack.c.l.b16 %v1631
    %v1648 = vunpack.c.l.b16 %v1632
    %v1649 = vunpack.c.l.b16 %v1633
    %v1650 = vunpack.c.l.b16 %v1634
    %v1651 = vunpack.c.l.b16 %v1635
    %v1652 = vunpack.c.l.b16 %v1636
    %v1653 = vunpack.c.l.b16 %v1637
    %v1654 = vunpack.c.l.b16 %v1638
    %v1655 = vpack.c.b16 %v1648, %v1647
    %v1656 = vpack.c.b16 %v1650, %v1649
    %v1657 = vpack.c.b16 %v1652, %v1651
    %v1658 = vpack.c.b16 %v1654, %v1653
    %v1664 = vsel %vm85, %v1630, 0
    %1666 = vmatpush.bf16.msra.mxu0 0
    %1667 = vmatpush.bf16.msra.mxu0 0
    %1668 = vmatpush.bf16.msra.mxu0 0
    %1669 = vmatpush.bf16.msra.mxu0 0
    %1670 = vmatpush.bf16.msra.mxu0 %v1658
    %1671 = vmatpush.bf16.msra.mxu0 %v1657
    %1672 = vmatpush.bf16.msra.mxu0 %v1656
    %1673 = vmatpush.bf16.msra.mxu0 %v1655
    %1674 = vmatmul.bf16.gmra.mxu0 %v1664
    %v1675 = vpop.f32.mrf.mxu0
    %v1676 = vadd.f32 %v1597, %v1675
    %v1677 = vpop.f32.mrf.mxu0
    %1678 = vdwg.mxu0
    %v1679 = vmul.f32 %v1676, %v1676
    %vm1680 = vcmask 257024
    %v1681 = vsel %vm1680, %v1679, 0.0
    %1682 = vadd.xlane.f32.xlu0 %v1681
    %v1683 = vpop.xlane.xlu0 %1682
    %v1684 = vrot.slane %v1683, 4
    %v1685 = vadd.f32 %v1683, %v1684
    %v1686 = vrot.slane %v1685, 2
    %v1687 = vadd.f32 %v1685, %v1686
    %v1688 = vrot.slane %v1687, 1
    %v1689 = vadd.f32 %v1687, %v1688
    %s1690 = vtos %v1689
    %v1691 = vstv %s1690
    %v1692 = vrsqrt.pop %v1691
    %v1693 = vmul.f32 %v1692, %v1691
    %v1694 = vmul.f32 %v1693, %v1692
    %v1695 = vmul.f32 0.5, %v1694
    %v1696 = vsub.f32 1.5, %v1695
    %v1697 = vmul.f32 %v1692, %v1696
    %v1698 = vmul.f32 %v1691, %v1697
    %vm1699 = vcmp.eq.f32.partialorder %v1691, inf
    %v1700 = vsel %vm1699, %v1691, %v1698
    %vm1701 = vcmp.eq.f32.partialorder %v1691, 0.0
    %v1702 = vand.u32 %v1691, 2147483648
    %v1703 = vsel %vm1701, %v1702, %v1700
    %s1704 = vtos %v1703
    %s1705 = smax.f32 %s1704, 1e-12
    %v1706 = vstv %s1705
    %v1707 = vrcp.pop %v1706
    %v1708 = vmul.f32 %v1706, %v1707
    %v1709 = vsub.f32 1.0, %v1708
    %v1710 = vmul.f32 %v1707, %v1709
    %v1711 = vadd.f32 %v1707, %v1710
    %vm1712 = vweird.f32 %v1706
    %vm1713 = vweird.f32 %v1707
    %vm1714 = vmor %vm1712, %vm1713
    %v1715 = vsel %vm1714, %v1707, %v1711
    %v1716 = vand.u32 2147483647, %v1706
    %vm1717 = vcmp.eq.f32.partialorder %v1716, 8.507059e+37
    %v1718 = vand.u32 %v1706, 2147483648
    %v1719 = vor.u32 1.1754944e-38, %v1718
    %v1720 = vsel %vm1717, %v1719, %v1715
    %s1721 = vtos %v1720
    %v1722 = vstv %s1721
    %v1723 = vmul.f32 %v1676, %v1722
    %1724 = vst.msk [vmem:[#allocation7] sm:$0xf] %vm1680, %v1723
    %1725 = vxpose.xlu0.b32.start [1/16] %v1578, 128
    %1726 = vxpose.xlu0.b32.cont [2/16] %v1580, 128
    %1727 = vxpose.xlu0.b32.cont [3/16] %v1583, 128
    %1728 = vxpose.xlu0.b32.cont [4/16] %v1585, 128
    %1729 = vxpose.xlu0.b32.cont [5/16] %v1588, 128
    %1730 = vxpose.xlu0.b32.cont [6/16] %v1590, 128
    %1731 = vxpose.xlu0.b32.cont [7/16] %v1593, 128
    %1732 = vxpose.xlu0.b32.cont [8/16] %v1595, 128
    %1733 = vxpose.xlu0.b32.cont [9/16] 0.0, 128
    %1734 = vxpose.xlu0.b32.cont [10/16] 0.0, 128
    %1735 = vxpose.xlu0.b32.cont [11/16] 0.0, 128
    %1736 = vxpose.xlu0.b32.cont [12/16] 0.0, 128
    %1737 = vxpose.xlu0.b32.cont [13/16] 0.0, 128
    %1738 = vxpose.xlu0.b32.cont [14/16] 0.0, 128
    %1739 = vxpose.xlu0.b32.cont [15/16] 0.0, 128
    %1740 = vxpose.xlu0.b32.end [16/16] 0.0, 128
    %v1741 = vpop.trf.xlu0
    %v1742 = vpop.trf.xlu0
    %v1743 = vpop.trf.xlu0
    %v1744 = vpop.trf.xlu0
    %v1745 = vpop.trf.xlu0
    %v1746 = vpop.trf.xlu0
    %v1747 = vpop.trf.xlu0
    %v1748 = vpop.trf.xlu0
    %v1749 = vpop.trf.xlu0
    %v1750 = vpop.trf.xlu0
    %v1751 = vpop.trf.xlu0
    %v1752 = vpop.trf.xlu0
    %v1753 = vpop.trf.xlu0
    %v1754 = vpop.trf.xlu0
    %v1755 = vpop.trf.xlu0
    %v1756 = vpop.trf.xlu0
    %v1757 = vpack.c.bf16 %v1741, %v1741
    %v1758 = vld [vmem:[%s7] sm:$0xf]
    %v1759 = vld [vmem:[%s7 + $0x4] sm:$0xf]
    %v1760 = vld [vmem:[%s7 + $0x8] sm:$0xf]
    %v1761 = vld [vmem:[%s7 + $0xc] sm:$0xf]
    %v1762 = vld [vmem:[%s7 + $0x10] sm:$0xf]
    %v1763 = vld [vmem:[%s7 + $0x14] sm:$0xf]
    %v1764 = vld [vmem:[%s7 + $0x18] sm:$0xf]
    %v1765 = vld [vmem:[%s7 + $0x1c] sm:$0xf]
    %v1774 = vunpack.c.l.b16 %v1758
    %v1775 = vunpack.c.l.b16 %v1759
    %v1776 = vunpack.c.l.b16 %v1760
    %v1777 = vunpack.c.l.b16 %v1761
    %v1778 = vunpack.c.l.b16 %v1762
    %v1779 = vunpack.c.l.b16 %v1763
    %v1780 = vunpack.c.l.b16 %v1764
    %v1781 = vunpack.c.l.b16 %v1765
    %v1782 = vpack.c.b16 %v1775, %v1774
    %v1783 = vpack.c.b16 %v1777, %v1776
    %v1784 = vpack.c.b16 %v1779, %v1778
    %v1785 = vpack.c.b16 %v1781, %v1780
    %v1791 = vsel %vm85, %v1757, 0
    %1793 = vmatpush.bf16.msra.mxu0 0
    %1794 = vmatpush.bf16.msra.mxu0 0
    %1795 = vmatpush.bf16.msra.mxu0 0
    %1796 = vmatpush.bf16.msra.mxu0 0
    %1797 = vmatpush.bf16.msra.mxu0 %v1785
    %1798 = vmatpush.bf16.msra.mxu0 %v1784
    %1799 = vmatpush.bf16.msra.mxu0 %v1783
    %1800 = vmatpush.bf16.msra.mxu0 %v1782
    %1801 = vmatmul.bf16.gmra.mxu0 %v1791
    %v1802 = vpop.f32.mrf.mxu0
    %v1803 = vadd.f32 %v1597, %v1802
    %v1804 = vpop.f32.mrf.mxu0
    %1805 = vdwg.mxu0
    %v1806 = vmul.f32 %v1803, %v1803
    %v1807 = vsel %vm1680, %v1806, 0.0
    %1808 = vadd.xlane.f32.xlu0 %v1807
    %v1809 = vpop.xlane.xlu0 %1808
    %v1810 = vrot.slane %v1809, 4
    %v1811 = vadd.f32 %v1809, %v1810
    %v1812 = vrot.slane %v1811, 2
    %v1813 = vadd.f32 %v1811, %v1812
    %v1814 = vrot.slane %v1813, 1
    %v1815 = vadd.f32 %v1813, %v1814
    %s1816 = vtos %v1815
    %v1817 = vstv %s1816
    %v1818 = vrsqrt.pop %v1817
    %v1819 = vmul.f32 %v1818, %v1817
    %v1820 = vmul.f32 %v1819, %v1818
    %v1821 = vmul.f32 0.5, %v1820
    %v1822 = vsub.f32 1.5, %v1821
    %v1823 = vmul.f32 %v1818, %v1822
    %v1824 = vmul.f32 %v1817, %v1823
    %vm1825 = vcmp.eq.f32.partialorder %v1817, inf
    %v1826 = vsel %vm1825, %v1817, %v1824
    %vm1827 = vcmp.eq.f32.partialorder %v1817, 0.0
    %v1828 = vand.u32 %v1817, 2147483648
    %v1829 = vsel %vm1827, %v1828, %v1826
    %s1830 = vtos %v1829
    %s1831 = smax.f32 %s1830, 1e-12
    %v1832 = vstv %s1831
    %v1833 = vrcp.pop %v1832
    %v1834 = vmul.f32 %v1832, %v1833
    %v1835 = vsub.f32 1.0, %v1834
    %v1836 = vmul.f32 %v1833, %v1835
    %v1837 = vadd.f32 %v1833, %v1836
    %vm1838 = vweird.f32 %v1832
    %vm1839 = vweird.f32 %v1833
    %vm1840 = vmor %vm1838, %vm1839
    %v1841 = vsel %vm1840, %v1833, %v1837
    %v1842 = vand.u32 2147483647, %v1832
    %vm1843 = vcmp.eq.f32.partialorder %v1842, 8.507059e+37
    %v1844 = vand.u32 %v1832, 2147483648
    %v1845 = vor.u32 1.1754944e-38, %v1844
    %v1846 = vsel %vm1843, %v1845, %v1841
    %s1847 = vtos %v1846
    %v1848 = vstv %s1847
    %v1849 = vmul.f32 %v1803, %v1848
    %s1850 = scalar_lea.vmem [#allocation7], 4
    %1851 = vst.msk [vmem:[%s1850] sm:$0xf] %vm1680, %v1849
    // Predicated region
    $region50: #{tpu_custom_call.1} parent=1 // pred_check
      _
    $region51: #{tpu_custom_call.1} parent=1 // pred_check_branch
      %1853 = sbr.rel (0) target = $region53
    $region52: #{tpu_custom_call.1} parent=1 // pred_region
      %1855 = vsyncadd [#allocation4], 0
      %s1856 = sshll.u32 [#allocation7], 4
      %s1857 = int_to_ptr.vmem [resolvable:$true] %s1856
      %s1858 = sshll.u32 %s10, 4
      %s1859 = int_to_ptr.hbm [resolvable:$true] %s1858
      %1864 = dma.vmem_to_hbm [thread:$0]  %s1857, 128, %s1859, [#allocation4], 64, 64, 4
    $region53: #{tpu_custom_call.1} parent=1 // pred_fallthru
      _
    // Predicated region
    $region54: #{tpu_custom_call.1} parent=1 // pred_check
      _
    $region55: #{tpu_custom_call.1} parent=1 // pred_check_branch
      %1866 = sbr.rel (0) target = $region57
    $region56: #{tpu_custom_call.1} parent=1 // pred_region
      %1868 = dma.done [#allocation4], 128
    $region57: #{tpu_custom_call.1} parent=1 // pred_fallthru
      _
    %1869 = vsyncpa [#allocation3], 1
    %1870 = vsyncpa [#allocation6], 1
    %1871 = vsyncpa [#allocation4], 1

</llo_original>
